<compile_context>
chip_gen: v5e
topology: v5e:2x2
jax: 0.10.0
libtpu: 0.0.40
codegen_flags: <defaults>
</compile_context>

<pallas_src>
import functools

import jax
import jax.numpy as jnp
from jax.experimental import pallas as pl
from jax.experimental.pallas import tpu as pltpu


def _mhsa_kernel(x_ref, wq_ref, bq_ref, wk_ref, bk_ref, wv_ref, bv_ref,
                 gamma_ref, out_ref, attn_ref, k_vmem, v_vmem,
                 *, num_heads, k, tq, mxu_dtype):
    qi = pl.program_id(1)

    _, N, C = x_ref.shape
    Ck = C // k
    dk = Ck // num_heads        # per-head query/key dim
    dv = C // num_heads         # per-head value dim

    # --- K / V projections: compute once per batch element, cache in VMEM ---
    @pl.when(qi == 0)
    def _():
        x_full = x_ref[0].astype(mxu_dtype)                          # (N, C)
        k_vmem[...] = (jnp.dot(x_full, wk_ref[...].astype(mxu_dtype),
                               preferred_element_type=jnp.float32)
                       + bk_ref[...])
        v_vmem[...] = (jnp.dot(x_full, wv_ref[...].astype(mxu_dtype),
                               preferred_element_type=jnp.float32)
                       + bv_ref[...])

    # --- Q projection for this tile of TQ query rows ---
    q_start = pl.multiple_of(qi * tq, 8)
    x_q = x_ref[0, pl.ds(q_start, tq), :]                            # (TQ, C)
    q = (jnp.dot(x_q.astype(mxu_dtype), wq_ref[...].astype(mxu_dtype),
                 preferred_element_type=jnp.float32)
         + bq_ref[...])                                              # (TQ, Ck)

    kk = k_vmem[...]                                                 # (N, Ck)
    v = v_vmem[...]                                                  # (N, C)
    g = gamma_ref[0]                                                 # SMEM scalar

    # Static loop over heads (small fixed count -> static lane slices).
    # NOTE: the per-head contraction depth dk = C/(k*h) is dictated by the
    # module and is far below the MXU depth (low MXU utilization); heads stay
    # as separate small matmuls, but all stores are coalesced below.
    a_parts = []
    o_parts = []
    for h in range(num_heads):
        qh = q[:, h * dk:(h + 1) * dk]                               # (TQ, dk)
        kh = kk[:, h * dk:(h + 1) * dk]                              # (N, dk)
        vh = v[:, h * dv:(h + 1) * dv]                               # (N, dv)

        # scores[i, j] = <qh[i], kh[j]>   -> (TQ, N)   (no 1/sqrt(dk) scaling,
        # matching the FSGAN module)
        s = jax.lax.dot_general(
            qh.astype(mxu_dtype), kh.astype(mxu_dtype),
            (((1,), (1,)), ((), ())),
            preferred_element_type=jnp.float32)

        # numerically-stable softmax; approx reciprocal runs on the EUP slot.
        s = s - jnp.max(s, axis=-1, keepdims=True)
        e = jnp.exp(s)
        a = e * pl.reciprocal(jnp.sum(e, axis=-1, keepdims=True), approx=True)

        a_parts.append(a)
        o_parts.append(jnp.dot(a.astype(mxu_dtype), vh.astype(mxu_dtype),
                               preferred_element_type=jnp.float32))  # (TQ, dv)

    # Lane-dense, coalesced stores: one full-width store per output.
    attn_ref[0] = jnp.concatenate(a_parts, axis=-1).astype(attn_ref.dtype)
    o_full = jnp.concatenate(o_parts, axis=-1)                       # (TQ, C)
    out_ref[0] = (g * o_full + x_q).astype(out_ref.dtype)


def multi_head_self_attention(x_nchw, params, *, num_heads=4, k=2, tq=None,
                              mxu_dtype=jnp.float32):
    """x_nchw: (B, C, W, H) float32.

    Returns (out (B, C, W, H), attention (B, num_heads, N, N)), N = W*H.
    """
    B, C, W, H = x_nchw.shape
    N = W * H
    Ck = C // k
    assert Ck % num_heads == 0 and C % num_heads == 0

    if tq is None:  # pick a query-tile size: multiple grid steps, 8-aligned.
        tq = next((t for t in (128, 64, 32, 16, 8) if N % t == 0), N)
    assert N % tq == 0 and (tq % 8 == 0 or tq == N)
    n_qt = N // tq

    # NCHW -> (B, N, C)
    x_nc = jnp.transpose(x_nchw.reshape(B, C, N), (0, 2, 1))

    wq, bq, wk, bk, wv, bv, gamma = params
    bq2 = bq.reshape(1, Ck)
    bk2 = bk.reshape(1, Ck)
    bv2 = bv.reshape(1, C)
    gamma1 = gamma.reshape(1)          # scalar -> SMEM

    kernel = functools.partial(_mhsa_kernel, num_heads=num_heads, k=k, tq=tq,
                               mxu_dtype=mxu_dtype)

    out_nc, attn_slab = pl.pallas_call(
        kernel,
        out_shape=(
            jax.ShapeDtypeStruct((B, N, C), jnp.float32),
            # lane-dense attention slab: last dim = num_heads*N (>= 128)
            jax.ShapeDtypeStruct((B, N, num_heads * N), jnp.float32),
        ),
        grid_spec=pltpu.PrefetchScalarGridSpec(
            num_scalar_prefetch=0,
            grid=(B, n_qt),
            in_specs=[
                # x stays resident across all query tiles of one batch element
                # (same block index -> no re-DMA between q-tiles).
                pl.BlockSpec((1, N, C), lambda b, q: (b, 0, 0)),      # x
                pl.BlockSpec((C, Ck), lambda b, q: (0, 0)),           # Wq
                pl.BlockSpec((1, Ck), lambda b, q: (0, 0)),           # bq
                pl.BlockSpec((C, Ck), lambda b, q: (0, 0)),           # Wk
                pl.BlockSpec((1, Ck), lambda b, q: (0, 0)),           # bk
                pl.BlockSpec((C, C), lambda b, q: (0, 0)),            # Wv
                pl.BlockSpec((1, C), lambda b, q: (0, 0)),            # bv
                pl.BlockSpec(memory_space=pltpu.MemorySpace.SMEM),    # gamma
            ],
            out_specs=[
                pl.BlockSpec((1, tq, C), lambda b, q: (b, q, 0)),
                pl.BlockSpec((1, tq, num_heads * N), lambda b, q: (b, q, 0)),
            ],
            scratch_shapes=[
                pltpu.VMEM((N, Ck), jnp.float32),   # K cache (per batch elem)
                pltpu.VMEM((N, C), jnp.float32),    # V cache (per batch elem)
            ],
        ),
        compiler_params=pltpu.CompilerParams(
            # batch axis independent -> megacore-shardable; query-tile axis
            # carries the K/V scratch dependency -> arbitrary (sequential).
            dimension_semantics=("parallel", "arbitrary"),
            vmem_limit_bytes=32 * 1024 * 1024,
        ),
    )(x_nc, wq, bq2, wk, bk2, wv, bv2, gamma1)

    # (B, N, C) -> NCHW
    out_nchw = jnp.transpose(out_nc, (0, 2, 1)).reshape(B, C, W, H)
    # (B, N, h*N) -> (B, h, N, N)
    attn = jnp.transpose(attn_slab.reshape(B, N, num_heads, N), (0, 2, 1, 3))
    return out_nchw, attn


def _reference(x_nchw, params, *, num_heads=4, k=2):
    """Pure-JAX reference mirroring the PyTorch forward exactly."""
    wq, bq, wk, bk, wv, bv, gamma = params
    B, C, W, H = x_nchw.shape
    N = W * H
    h = num_heads
    x_flat = x_nchw.reshape(B, C, N)                                 # (B, C, N)

    def conv1x1(w, b):   # w: (C_in, C_out)
        return jnp.einsum('bcn,co->bon', x_flat, w) + b[None, :, None]

    q = conv1x1(wq, bq).reshape(B, h, C // k // h, N).transpose(0, 1, 3, 2)
    kproj = conv1x1(wk, bk).reshape(B, h, C // k // h, N)
    qk = jnp.einsum('bhnd,bhdm->bhnm', q, kproj)
    attn = jax.nn.softmax(qk, axis=-1)
    v = conv1x1(wv, bv).reshape(B, h, C // h, N)
    out = jnp.einsum('bhdn,bhmn->bhdm', v, attn)
    out = out.reshape(B, C, W, H)
    out = gamma[0] * out + x_nchw
    return out, attn


if __name__ == "__main__":
    B, C, W, H = 2, 32, 16, 16
    num_heads, k = 4, 2
    Ck = C // k

    key = jax.random.PRNGKey(0)
    kx, kwq, kbq, kwk, kbk, kwv, kbv = jax.random.split(key, 7)

    x = jax.random.normal(kx, (B, C, W, H), dtype=jnp.float32)

    # 1x1 conv weights stored as (C_in, C_out) (== torch weight[:, :, 0, 0].T).
    wq = jax.random.normal(kwq, (C, Ck), dtype=jnp.float32) * 0.1
    bq = jax.random.normal(kbq, (Ck,), dtype=jnp.float32) * 0.1
    wk = jax.random.normal(kwk, (C, Ck), dtype=jnp.float32) * 0.1
    bk = jax.random.normal(kbk, (Ck,), dtype=jnp.float32) * 0.1
    wv = jax.random.normal(kwv, (C, C), dtype=jnp.float32) * 0.1
    bv = jax.random.normal(kbv, (C,), dtype=jnp.float32) * 0.1
    # gamma initializes to 0 in the module; use a nonzero value so the
    # attention path contributes to the checked output.
    gamma = jnp.array([0.5], dtype=jnp.float32)

    params = (wq, bq, wk, bk, wv, bv, gamma)

    # tq=64 -> grid (B=2, N//tq=4) = 8 grid steps.
    out, attn = multi_head_self_attention(x, params, num_heads=num_heads, k=k,
                                          tq=64)
    out = jax.block_until_ready(out)
    attn = jax.block_until_ready(attn)

    out_ref, attn_ref = _reference(x, params, num_heads=num_heads, k=k)

    assert out.shape == (B, C, W, H)
    assert attn.shape == (B, num_heads, W * H, W * H)
    # Tolerance accounts for the approximate (EUP) reciprocal in the softmax.
    assert jnp.allclose(out, out_ref, rtol=5e-3, atol=5e-3), (
        float(jnp.max(jnp.abs(out - out_ref))))
    assert jnp.allclose(attn, attn_ref, rtol=5e-3, atol=5e-3), (
        float(jnp.max(jnp.abs(attn - attn_ref))))

    print("KERNEL_OK")
</pallas_src>

<mosaic_0001>
module attributes {stable_mosaic.version = 11 : i64} {
  func.func @_mhsa_kernel(%arg0: i32, %arg1: i32, %arg2: memref<1x256x32xf32, #tpu.memory_space<vmem>>, %arg3: memref<32x16xf32, #tpu.memory_space<vmem>>, %arg4: memref<1x16xf32, #tpu.memory_space<vmem>>, %arg5: memref<32x16xf32, #tpu.memory_space<vmem>>, %arg6: memref<1x16xf32, #tpu.memory_space<vmem>>, %arg7: memref<32x32xf32, #tpu.memory_space<vmem>>, %arg8: memref<1x32xf32, #tpu.memory_space<vmem>>, %arg9: memref<1xf32, #tpu.memory_space<smem>>, %arg10: memref<1x64x32xf32, #tpu.memory_space<vmem>>, %arg11: memref<1x64x1024xf32, #tpu.memory_space<vmem>>, %arg12: memref<256x16xf32, #tpu.memory_space<vmem>>, %arg13: memref<256x32xf32, #tpu.memory_space<vmem>>) attributes {dimension_semantics = [#tpu.dimension_semantics<parallel>, #tpu.dimension_semantics<arbitrary>], iteration_bounds = array<i64: 2, 4>, scalar_prefetch = 0 : i64, scratch_operands = 2 : i64, tpu.core_type = #tpu.core_type<tc>, window_params = [{transform_indices = @transform_0, window_bounds = array<i64: 1, 256, 32>}, {pipeline_mode = #tpu.pipeline_mode<synchronous>, transform_indices = @transform_1, window_bounds = array<i64: 32, 16>}, {pipeline_mode = #tpu.pipeline_mode<synchronous>, transform_indices = @transform_2, window_bounds = array<i64: 1, 16>}, {pipeline_mode = #tpu.pipeline_mode<synchronous>, transform_indices = @transform_3, window_bounds = array<i64: 32, 16>}, {pipeline_mode = #tpu.pipeline_mode<synchronous>, transform_indices = @transform_4, window_bounds = array<i64: 1, 16>}, {pipeline_mode = #tpu.pipeline_mode<synchronous>, transform_indices = @transform_5, window_bounds = array<i64: 32, 32>}, {pipeline_mode = #tpu.pipeline_mode<synchronous>, transform_indices = @transform_6, window_bounds = array<i64: 1, 32>}, {transform_indices = @transform_7, window_bounds = array<i64: 1>}, {transform_indices = @transform_8, window_bounds = array<i64: 1, 64, 32>}, {transform_indices = @transform_9, window_bounds = array<i64: 1, 64, 1024>}]} {
    %c0_i32 = arith.constant 0 : i32
    %0 = arith.cmpi eq, %arg1, %c0_i32 : i32
    %1 = arith.extui %0 : i1 to i32
    %c0_i32_0 = arith.constant 0 : i32
    %2 = arith.cmpi ne, %1, %c0_i32_0 : i32
    scf.if %2 {
      %c0_33 = arith.constant 0 : index
      %c0_34 = arith.constant 0 : index
      %c0_35 = arith.constant 0 : index
      %87 = vector.load %arg2[%c0_33, %c0_34, %c0_35] : memref<1x256x32xf32, #tpu.memory_space<vmem>>, vector<1x256x32xf32>
      %88 = vector.shape_cast %87 : vector<1x256x32xf32> to vector<256x32xf32>
      %c0_36 = arith.constant 0 : index
      %c0_37 = arith.constant 0 : index
      %89 = vector.load %arg5[%c0_36, %c0_37] : memref<32x16xf32, #tpu.memory_space<vmem>>, vector<32x16xf32>
      %cst_38 = arith.constant dense<0.000000e+00> : vector<256x16xf32>
      %90 = tpu.matmul %88, %89, %cst_38 {dimension_numbers = #tpu.dot_dimension_numbers<[1], [0], [0], [1], [0, 0, 1, 1], [], []>} : vector<256x32xf32>, vector<32x16xf32>, vector<256x16xf32> -> vector<256x16xf32>
      %c0_39 = arith.constant 0 : index
      %c0_40 = arith.constant 0 : index
      %91 = vector.load %arg6[%c0_39, %c0_40] : memref<1x16xf32, #tpu.memory_space<vmem>>, vector<1x16xf32>
      %92 = vector.broadcast %91 : vector<1x16xf32> to vector<256x16xf32>
      %93 = arith.addf %90, %92 : vector<256x16xf32>
      %c0_41 = arith.constant 0 : index
      %c0_42 = arith.constant 0 : index
      %94 = vector.load %arg12[%c0_41, %c0_42] : memref<256x16xf32, #tpu.memory_space<vmem>>, vector<256x16xf32>
      tpu.vector_store %arg12[%c0_41, %c0_42], %93 {strides = array<i32>} : memref<256x16xf32, #tpu.memory_space<vmem>>, vector<256x16xf32>,
      %c0_43 = arith.constant 0 : index
      %c0_44 = arith.constant 0 : index
      %95 = vector.load %arg7[%c0_43, %c0_44] : memref<32x32xf32, #tpu.memory_space<vmem>>, vector<32x32xf32>
      %cst_45 = arith.constant dense<0.000000e+00> : vector<256x32xf32>
      %96 = tpu.matmul %88, %95, %cst_45 {dimension_numbers = #tpu.dot_dimension_numbers<[1], [0], [0], [1], [0, 0, 1, 1], [], []>} : vector<256x32xf32>, vector<32x32xf32>, vector<256x32xf32> -> vector<256x32xf32>
      %c0_46 = arith.constant 0 : index
      %c0_47 = arith.constant 0 : index
      %97 = vector.load %arg8[%c0_46, %c0_47] : memref<1x32xf32, #tpu.memory_space<vmem>>, vector<1x32xf32>
      %98 = vector.broadcast %97 : vector<1x32xf32> to vector<256x32xf32>
      %99 = arith.addf %96, %98 : vector<256x32xf32>
      %c0_48 = arith.constant 0 : index
      %c0_49 = arith.constant 0 : index
      %100 = vector.load %arg13[%c0_48, %c0_49] : memref<256x32xf32, #tpu.memory_space<vmem>>, vector<256x32xf32>
      tpu.vector_store %arg13[%c0_48, %c0_49], %99 {strides = array<i32>} : memref<256x32xf32, #tpu.memory_space<vmem>>, vector<256x32xf32>,
    } else {
    }
    %c64_i32 = arith.constant 64 : i32
    %3 = arith.muli %arg1, %c64_i32 : i32
    %4 = tpu.assume_multiple %3, 8 : i32
    %c0 = arith.constant 0 : index
    %5 = arith.index_cast %4 : i32 to index
    %c0_1 = arith.constant 0 : index
    %6 = vector.load %arg2[%c0, %5, %c0_1] : memref<1x256x32xf32, #tpu.memory_space<vmem>>, vector<1x64x32xf32>
    %7 = vector.shape_cast %6 : vector<1x64x32xf32> to vector<64x32xf32>
    %c0_2 = arith.constant 0 : index
    %c0_3 = arith.constant 0 : index
    %8 = vector.load %arg3[%c0_2, %c0_3] : memref<32x16xf32, #tpu.memory_space<vmem>>, vector<32x16xf32>
    %cst = arith.constant dense<0.000000e+00> : vector<64x16xf32>
    %9 = tpu.matmul %7, %8, %cst {dimension_numbers = #tpu.dot_dimension_numbers<[1], [0], [0], [1], [0, 0, 1, 1], [], []>} : vector<64x32xf32>, vector<32x16xf32>, vector<64x16xf32> -> vector<64x16xf32>
    %c0_4 = arith.constant 0 : index
    %c0_5 = arith.constant 0 : index
    %10 = vector.load %arg4[%c0_4, %c0_5] : memref<1x16xf32, #tpu.memory_space<vmem>>, vector<1x16xf32>
    %11 = vector.broadcast %10 : vector<1x16xf32> to vector<64x16xf32>
    %12 = arith.addf %9, %11 : vector<64x16xf32>
    %c0_6 = arith.constant 0 : index
    %c0_7 = arith.constant 0 : index
    %13 = vector.load %arg12[%c0_6, %c0_7] : memref<256x16xf32, #tpu.memory_space<vmem>>, vector<256x16xf32>
    %c0_8 = arith.constant 0 : index
    %c0_9 = arith.constant 0 : index
    %14 = vector.load %arg13[%c0_8, %c0_9] : memref<256x32xf32, #tpu.memory_space<vmem>>, vector<256x32xf32>
    %c0_10 = arith.constant 0 : index
    %15 = memref.load %arg9[%c0_10] : memref<1xf32, #tpu.memory_space<smem>>
    %16 = vector.extract_strided_slice %12 {offsets = [0, 0], sizes = [64, 4], strides = [1, 1]} : vector<64x16xf32> to vector<64x4xf32>
    %17 = vector.extract_strided_slice %13 {offsets = [0, 0], sizes = [256, 4], strides = [1, 1]} : vector<256x16xf32> to vector<256x4xf32>
    %18 = vector.extract_strided_slice %14 {offsets = [0, 0], sizes = [256, 8], strides = [1, 1]} : vector<256x32xf32> to vector<256x8xf32>
    %cst_11 = arith.constant dense<0.000000e+00> : vector<64x256xf32>
    %19 = tpu.matmul %16, %17, %cst_11 {dimension_numbers = #tpu.dot_dimension_numbers<[1], [1], [0], [0], [0, 0, 1, 0], [], []>} : vector<64x4xf32>, vector<256x4xf32>, vector<64x256xf32> -> vector<64x256xf32>
    %cst_12 = arith.constant dense<0xFF800000> : vector<64xf32>
    %20 = vector.multi_reduction <maximumf>, %19, %cst_12 [1] : vector<64x256xf32> to vector<64xf32>
    %21 = vector.shape_cast %20 : vector<64xf32> to vector<64x1xf32>
    %22 = vector.broadcast %21 : vector<64x1xf32> to vector<64x256xf32>
    %23 = arith.subf %19, %22 : vector<64x256xf32>
    %24 = math.exp %23 : vector<64x256xf32>
    %cst_13 = arith.constant dense<0.000000e+00> : vector<64xf32>
    %25 = vector.multi_reduction <add>, %24, %cst_13 [1] : vector<64x256xf32> to vector<64xf32>
    %26 = vector.shape_cast %25 : vector<64xf32> to vector<64x1xf32>
    %27 = tpu.reciprocal %26 {approx = true} : vector<64x1xf32> -> vector<64x1xf32>
    %28 = vector.broadcast %27 : vector<64x1xf32> to vector<64x256xf32>
    %29 = arith.mulf %24, %28 : vector<64x256xf32>
    %cst_14 = arith.constant dense<0.000000e+00> : vector<64x8xf32>
    %30 = tpu.matmul %29, %18, %cst_14 {dimension_numbers = #tpu.dot_dimension_numbers<[1], [0], [0], [1], [0, 0, 1, 1], [], []>} : vector<64x256xf32>, vector<256x8xf32>, vector<64x8xf32> -> vector<64x8xf32>
    %31 = vector.extract_strided_slice %12 {offsets = [0, 4], sizes = [64, 4], strides = [1, 1]} : vector<64x16xf32> to vector<64x4xf32>
    %32 = vector.extract_strided_slice %13 {offsets = [0, 4], sizes = [256, 4], strides = [1, 1]} : vector<256x16xf32> to vector<256x4xf32>
    %33 = vector.extract_strided_slice %14 {offsets = [0, 8], sizes = [256, 8], strides = [1, 1]} : vector<256x32xf32> to vector<256x8xf32>
    %cst_15 = arith.constant dense<0.000000e+00> : vector<64x256xf32>
    %34 = tpu.matmul %31, %32, %cst_15 {dimension_numbers = #tpu.dot_dimension_numbers<[1], [1], [0], [0], [0, 0, 1, 0], [], []>} : vector<64x4xf32>, vector<256x4xf32>, vector<64x256xf32> -> vector<64x256xf32>
    %cst_16 = arith.constant dense<0xFF800000> : vector<64xf32>
    %35 = vector.multi_reduction <maximumf>, %34, %cst_16 [1] : vector<64x256xf32> to vector<64xf32>
    %36 = vector.shape_cast %35 : vector<64xf32> to vector<64x1xf32>
    %37 = vector.broadcast %36 : vector<64x1xf32> to vector<64x256xf32>
    %38 = arith.subf %34, %37 : vector<64x256xf32>
    %39 = math.exp %38 : vector<64x256xf32>
    %cst_17 = arith.constant dense<0.000000e+00> : vector<64xf32>
    %40 = vector.multi_reduction <add>, %39, %cst_17 [1] : vector<64x256xf32> to vector<64xf32>
    %41 = vector.shape_cast %40 : vector<64xf32> to vector<64x1xf32>
    %42 = tpu.reciprocal %41 {approx = true} : vector<64x1xf32> -> vector<64x1xf32>
    %43 = vector.broadcast %42 : vector<64x1xf32> to vector<64x256xf32>
    %44 = arith.mulf %39, %43 : vector<64x256xf32>
    %cst_18 = arith.constant dense<0.000000e+00> : vector<64x8xf32>
    %45 = tpu.matmul %44, %33, %cst_18 {dimension_numbers = #tpu.dot_dimension_numbers<[1], [0], [0], [1], [0, 0, 1, 1], [], []>} : vector<64x256xf32>, vector<256x8xf32>, vector<64x8xf32> -> vector<64x8xf32>
    %46 = vector.extract_strided_slice %12 {offsets = [0, 8], sizes = [64, 4], strides = [1, 1]} : vector<64x16xf32> to vector<64x4xf32>
    %47 = vector.extract_strided_slice %13 {offsets = [0, 8], sizes = [256, 4], strides = [1, 1]} : vector<256x16xf32> to vector<256x4xf32>
    %48 = vector.extract_strided_slice %14 {offsets = [0, 16], sizes = [256, 8], strides = [1, 1]} : vector<256x32xf32> to vector<256x8xf32>
    %cst_19 = arith.constant dense<0.000000e+00> : vector<64x256xf32>
    %49 = tpu.matmul %46, %47, %cst_19 {dimension_numbers = #tpu.dot_dimension_numbers<[1], [1], [0], [0], [0, 0, 1, 0], [], []>} : vector<64x4xf32>, vector<256x4xf32>, vector<64x256xf32> -> vector<64x256xf32>
    %cst_20 = arith.constant dense<0xFF800000> : vector<64xf32>
    %50 = vector.multi_reduction <maximumf>, %49, %cst_20 [1] : vector<64x256xf32> to vector<64xf32>
    %51 = vector.shape_cast %50 : vector<64xf32> to vector<64x1xf32>
    %52 = vector.broadcast %51 : vector<64x1xf32> to vector<64x256xf32>
    %53 = arith.subf %49, %52 : vector<64x256xf32>
    %54 = math.exp %53 : vector<64x256xf32>
    %cst_21 = arith.constant dense<0.000000e+00> : vector<64xf32>
    %55 = vector.multi_reduction <add>, %54, %cst_21 [1] : vector<64x256xf32> to vector<64xf32>
    %56 = vector.shape_cast %55 : vector<64xf32> to vector<64x1xf32>
    %57 = tpu.reciprocal %56 {approx = true} : vector<64x1xf32> -> vector<64x1xf32>
    %58 = vector.broadcast %57 : vector<64x1xf32> to vector<64x256xf32>
    %59 = arith.mulf %54, %58 : vector<64x256xf32>
    %cst_22 = arith.constant dense<0.000000e+00> : vector<64x8xf32>
    %60 = tpu.matmul %59, %48, %cst_22 {dimension_numbers = #tpu.dot_dimension_numbers<[1], [0], [0], [1], [0, 0, 1, 1], [], []>} : vector<64x256xf32>, vector<256x8xf32>, vector<64x8xf32> -> vector<64x8xf32>
    %61 = vector.extract_strided_slice %12 {offsets = [0, 12], sizes = [64, 4], strides = [1, 1]} : vector<64x16xf32> to vector<64x4xf32>
    %62 = vector.extract_strided_slice %13 {offsets = [0, 12], sizes = [256, 4], strides = [1, 1]} : vector<256x16xf32> to vector<256x4xf32>
    %63 = vector.extract_strided_slice %14 {offsets = [0, 24], sizes = [256, 8], strides = [1, 1]} : vector<256x32xf32> to vector<256x8xf32>
    %cst_23 = arith.constant dense<0.000000e+00> : vector<64x256xf32>
    %64 = tpu.matmul %61, %62, %cst_23 {dimension_numbers = #tpu.dot_dimension_numbers<[1], [1], [0], [0], [0, 0, 1, 0], [], []>} : vector<64x4xf32>, vector<256x4xf32>, vector<64x256xf32> -> vector<64x256xf32>
    %cst_24 = arith.constant dense<0xFF800000> : vector<64xf32>
    %65 = vector.multi_reduction <maximumf>, %64, %cst_24 [1] : vector<64x256xf32> to vector<64xf32>
    %66 = vector.shape_cast %65 : vector<64xf32> to vector<64x1xf32>
    %67 = vector.broadcast %66 : vector<64x1xf32> to vector<64x256xf32>
    %68 = arith.subf %64, %67 : vector<64x256xf32>
    %69 = math.exp %68 : vector<64x256xf32>
    %cst_25 = arith.constant dense<0.000000e+00> : vector<64xf32>
    %70 = vector.multi_reduction <add>, %69, %cst_25 [1] : vector<64x256xf32> to vector<64xf32>
    %71 = vector.shape_cast %70 : vector<64xf32> to vector<64x1xf32>
    %72 = tpu.reciprocal %71 {approx = true} : vector<64x1xf32> -> vector<64x1xf32>
    %73 = vector.broadcast %72 : vector<64x1xf32> to vector<64x256xf32>
    %74 = arith.mulf %69, %73 : vector<64x256xf32>
    %cst_26 = arith.constant dense<0.000000e+00> : vector<64x8xf32>
    %75 = tpu.matmul %74, %63, %cst_26 {dimension_numbers = #tpu.dot_dimension_numbers<[1], [0], [0], [1], [0, 0, 1, 1], [], []>} : vector<64x256xf32>, vector<256x8xf32>, vector<64x8xf32> -> vector<64x8xf32>
    %76 = tpu.concatenate %29, %44, %59, %74 in 1 : vector<64x256xf32>, vector<64x256xf32>, vector<64x256xf32>, vector<64x256xf32> -> vector<64x1024xf32>
    %c0_27 = arith.constant 0 : index
    %c0_28 = arith.constant 0 : index
    %c0_29 = arith.constant 0 : index
    %77 = vector.load %arg11[%c0_27, %c0_28, %c0_29] : memref<1x64x1024xf32, #tpu.memory_space<vmem>>, vector<1x64x1024xf32>
    %78 = vector.shape_cast %77 : vector<1x64x1024xf32> to vector<64x1024xf32>
    %79 = vector.shape_cast %76 : vector<64x1024xf32> to vector<1x64x1024xf32>
    tpu.vector_store %arg11[%c0_27, %c0_28, %c0_29], %79 {strides = array<i32>} : memref<1x64x1024xf32, #tpu.memory_space<vmem>>, vector<1x64x1024xf32>,
    %80 = tpu.concatenate %30, %45, %60, %75 in 1 : vector<64x8xf32>, vector<64x8xf32>, vector<64x8xf32>, vector<64x8xf32> -> vector<64x32xf32>
    %81 = vector.broadcast %15 : f32 to vector<64x32xf32>
    %82 = arith.mulf %81, %80 : vector<64x32xf32>
    %83 = arith.addf %82, %7 : vector<64x32xf32>
    %c0_30 = arith.constant 0 : index
    %c0_31 = arith.constant 0 : index
    %c0_32 = arith.constant 0 : index
    %84 = vector.load %arg10[%c0_30, %c0_31, %c0_32] : memref<1x64x32xf32, #tpu.memory_space<vmem>>, vector<1x64x32xf32>
    %85 = vector.shape_cast %84 : vector<1x64x32xf32> to vector<64x32xf32>
    %86 = vector.shape_cast %83 : vector<64x32xf32> to vector<1x64x32xf32>
    tpu.vector_store %arg10[%c0_30, %c0_31, %c0_32], %86 {strides = array<i32>} : memref<1x64x32xf32, #tpu.memory_space<vmem>>, vector<1x64x32xf32>,
    return
  }
  func.func @transform_0(%arg0: i32, %arg1: i32) -> (i32, i32, i32) {
    %c0_i32 = arith.constant 0 : i32
    %c0_i32_0 = arith.constant 0 : i32
    %c0_i32_1 = arith.constant 0 : i32
    return %arg0, %c0_i32, %c0_i32_0 : i32, i32, i32
  }
  func.func @transform_1(%arg0: i32, %arg1: i32) -> (i32, i32) {
    %c0_i32 = arith.constant 0 : i32
    %c0_i32_0 = arith.constant 0 : i32
    %c0_i32_1 = arith.constant 0 : i32
    return %c0_i32, %c0_i32_0 : i32, i32
  }
  func.func @transform_2(%arg0: i32, %arg1: i32) -> (i32, i32) {
    %c0_i32 = arith.constant 0 : i32
    %c0_i32_0 = arith.constant 0 : i32
    %c0_i32_1 = arith.constant 0 : i32
    return %c0_i32, %c0_i32_0 : i32, i32
  }
  func.func @transform_3(%arg0: i32, %arg1: i32) -> (i32, i32) {
    %c0_i32 = arith.constant 0 : i32
    %c0_i32_0 = arith.constant 0 : i32
    %c0_i32_1 = arith.constant 0 : i32
    return %c0_i32, %c0_i32_0 : i32, i32
  }
  func.func @transform_4(%arg0: i32, %arg1: i32) -> (i32, i32) {
    %c0_i32 = arith.constant 0 : i32
    %c0_i32_0 = arith.constant 0 : i32
    %c0_i32_1 = arith.constant 0 : i32
    return %c0_i32, %c0_i32_0 : i32, i32
  }
  func.func @transform_5(%arg0: i32, %arg1: i32) -> (i32, i32) {
    %c0_i32 = arith.constant 0 : i32
    %c0_i32_0 = arith.constant 0 : i32
    %c0_i32_1 = arith.constant 0 : i32
    return %c0_i32, %c0_i32_0 : i32, i32
  }
  func.func @transform_6(%arg0: i32, %arg1: i32) -> (i32, i32) {
    %c0_i32 = arith.constant 0 : i32
    %c0_i32_0 = arith.constant 0 : i32
    %c0_i32_1 = arith.constant 0 : i32
    return %c0_i32, %c0_i32_0 : i32, i32
  }
  func.func @transform_7(%arg0: i32, %arg1: i32) -> i32 {
    %c0_i32 = arith.constant 0 : i32
    %c0_i32_0 = arith.constant 0 : i32
    return %c0_i32 : i32
  }
  func.func @transform_8(%arg0: i32, %arg1: i32) -> (i32, i32, i32) {
    %c0_i32 = arith.constant 0 : i32
    %c0_i32_0 = arith.constant 0 : i32
    return %arg0, %arg1, %c0_i32 : i32, i32, i32
  }
  func.func @transform_9(%arg0: i32, %arg1: i32) -> (i32, i32, i32) {
    %c0_i32 = arith.constant 0 : i32
    %c0_i32_0 = arith.constant 0 : i32
    return %arg0, %arg1, %c0_i32 : i32, i32, i32
  }
}

</mosaic_0001>

<llo_original>
// kernel: tpu_custom_call.1
$region0: #{tpu_custom_call.1}
  #allocation0 [shape = 'u32[]', space=smem, size = 0x4, offset = 0x4, fixed_abs, tag = 'smem constant byte address 0x4 - core index']
  #allocation1 [shape = 'u32[72,128]{1,0:T(1,128)}', space=vmem, size = 0x9000, scoped, tag = 'internal scratch']
  #allocation2 [shape = 'f32[256,16]{1,0:T(8,128)}', space=vmem, size = 0x20000, scoped, tag = 'scratch operand']
  #allocation3 [shape = 'f32[256,32]{1,0:T(8,128)}', space=vmem, size = 0x20000, scoped, tag = 'scratch operand']
  #allocation4 [shape = 'f32[1]{0:T(128)S(6)}', space=smem, size = 0x200, scoped, tag = 'scoped memory for tpu_custom_call.1']
  %s0 = inlined_call_operand.vmem [shape: f32[2,256,32], index: 0, kind: input, shape index: {}]
  %s1 = inlined_call_operand.vmem [shape: f32[32,16], index: 1, kind: input, shape index: {}]
  %s2 = inlined_call_operand.hbm [shape: f32[1,16], index: 2, kind: input, shape index: {}]
  %s3 = inlined_call_operand.vmem [shape: f32[32,16], index: 3, kind: input, shape index: {}]
  %s4 = inlined_call_operand.hbm [shape: f32[1,16], index: 4, kind: input, shape index: {}]
  %s5 = inlined_call_operand.hbm [shape: f32[32,32], index: 5, kind: input, shape index: {}]
  %s6 = inlined_call_operand.hbm [shape: f32[1,32], index: 6, kind: input, shape index: {}]
  %s7 = inlined_call_operand.<no memory space> [shape: f32[1], index: 7, kind: input, shape index: {}]
  %s8 = inlined_call_operand.vmem [shape: f32[2,256,32], index: 8, kind: output, shape index: {0}]
  %s9 = inlined_call_operand.hbm [shape: f32[2,256,1024], index: 9, kind: output, shape index: {1}]
  %10 = xla_tuple %s8, %s9
  %s11 = sld [smem:[#allocation0]]
  $region93: #{tpu_custom_call.1} parent=0
    _
  %s13 = ssub.s32 1, %s11
  %s14 = scalar_select 0, %s13, %s11
  %15 = sst [smem:[#allocation4]] %s7
  $region1: #{tpu_custom_call.1} parent=0
    #allocation5 [shape = 'u8[512]{0}', space=vmem, size = 0x400, scoped, tag = 'input window, operand 2, single buffered']
    #allocation6 [shape = 's32[2]{0}', space=sflag, size = 0x8, scoped, tag = 'scoped memory for tpu_custom_call.1']
    #allocation7 [shape = 's32[2]{0}', space=sflag, size = 0x8, scoped, tag = 'scoped memory for tpu_custom_call.1']
    #allocation8 [shape = 'u8[512]{0}', space=vmem, size = 0x400, scoped, tag = 'input window, operand 4, single buffered']
    #allocation9 [shape = 's32[1]{0}', space=sflag, size = 0x4, scoped, tag = 'scoped memory for tpu_custom_call.1']
    #allocation10 [shape = 'u8[16384]{0}', space=vmem, size = 0x4000, scoped, tag = 'input window, operand 5, single buffered']
    #allocation11 [shape = 'u8[512]{0}', space=vmem, size = 0x400, scoped, tag = 'input window, operand 6, single buffered']
    #allocation12 [shape = 's32[1]{0}', space=sflag, size = 0x4, scoped, tag = 'scoped memory for tpu_custom_call.1']
    #allocation13 [shape = 'u8[524288]{0}', space=vmem, size = 0x80000, scoped, tag = 'output window, operand 1']
    %16 = vsyncpa [#allocation6], 0
    %17 = vsyncpa [#allocation9], 0
    %18 = vsyncpa [#allocation12], 0
    %19 = vsyncpa [#allocation7], 0
    %s20 = scalar_lea.sflag [#allocation7], 1
    %21 = vsyncpa %s20, 0
    loop: start=0, step=1, limit=10
    $region2: #{tpu_custom_call.1} parent=1 // loop_pre_header
      _
    $region3: #{tpu_custom_call.1} parent=1 // loop_header
      %s23 = sphi 0, %s27
      %p24 = scmp.ge.s32.totalorder %s23, 10
      %s30 = sphi 0, %s42
      %s31 = sphi 0, %s38
      %s32 = sphi 0, %s30
      %s33 = sphi 0, %s31
      %s34 = sphi 0, %s32
      %s35 = sphi 0, %s33
      %s45 = sphi 0, %s47
      %s48 = sphi 0, %s45
      %s49 = sphi 0, %s48
      %s65 = sphi 0, %s49
      %s69 = sphi 0, %s69
      %s71 = sphi 0, %s69
      %s72 = sphi 0, %s71
      %s86 = sphi 0, %s72
      %s90 = sphi 0, %s90
      %s92 = sphi 0, %s90
      %s93 = sphi 0, %s92
      %s107 = sphi 0, %s93
      %s111 = sphi 0, %s111
      %s113 = sphi 0, %s111
      %s114 = sphi 0, %s113
      %s128 = sphi 0, %s114
      %s132 = sphi 0, %s132
      %s134 = sphi 0, %s132
      %s135 = sphi 0, %s134
      %s149 = sphi 0, %s135
      %s153 = sphi 0, %s153
      %s155 = sphi 0, %s153
      %s156 = sphi 0, %s155
      %s170 = sphi 0, %s156
      %s174 = sphi 0, %s174
      %s176 = sphi 0, %s174
      %s177 = sphi 0, %s176
      %s191 = sphi 0, %s177
      %s195 = sphi 0, %s195
      %s197 = sphi 0, %s195
      %s198 = sphi 0, %s197
      %s212 = sphi 0, %s198
      %s220 = sphi 0, %s222
      %s223 = sphi 0, %s220
      %s224 = sphi 0, %s223
      %s240 = sphi 0, %s224
      %s248 = sphi 0, %s250
      %s251 = sphi 0, %s248
      %s252 = sphi 0, %s251
      %s268 = sphi 0, %s252
    $region4: #{tpu_custom_call.1} parent=1 // loop_header_branch
      %26 = sbr.rel (%p24) target = $region8
    $region5: #{tpu_custom_call.1} parent=1 // loop_body
      %s28 = ssub.s32 %s23, 1
      %s29 = ssub.s32 %s23, 2
      %s36 = sadd.s32 1, %s31
      %p37 = scmp.ge.s32.totalorder %s36, 4
      %s38 = scalar_select %p37, 0, %s36
      %s39 = sadd.s32 1, %s30
      %s40 = scalar_select %p37, %s39, %s30
      %p41 = scmp.ge.s32.totalorder %s40, 2
      %s42 = scalar_select %p41, 0, %s40
      %s43 = ssub.s32 %s30, %s42
      %p44 = scmp.eq.s32.totalorder %s43, 0
      %s46 = sadd.s32 %s45, 1
      %s47 = scalar_select %p44, %s45, %s46
      %p50 = pneg %p44
      %p51 = scmp.eq.s32.totalorder %s23, 7
      %p52 = por %p50, %p51
      %p53 = scmp.ne.s32.totalorder %s45, %s48
      %p54 = scmp.eq.s32.totalorder %s23, 0
      %p55 = por %p53, %p54
      %p56 = scmp.ne.s32.totalorder %s45, %s48
      %p57 = scmp.eq.s32.totalorder %s28, 7
      %p58 = por %p56, %p57
      %p59 = scmp.ne.s32.totalorder %s48, %s49
      %p60 = scmp.eq.s32.totalorder %s28, 0
      %p61 = por %p59, %p60
      %p62 = scmp.ne.s32.totalorder %s48, %s49
      %p63 = scmp.eq.s32.totalorder %s29, 7
      %p64 = por %p62, %p63
      %p66 = scmp.ne.s32.totalorder %s49, %s65
      %p67 = scmp.eq.s32.totalorder %s29, 0
      %p68 = por %p66, %p67
      %s70 = sadd.s32 %s69, 1
      %p73 = scmp.eq.s32.totalorder %s23, 7
      %p74 = scmp.ne.s32.totalorder %s69, %s71
      %p75 = scmp.eq.s32.totalorder %s23, 0
      %p76 = por %p74, %p75
      %p77 = scmp.ne.s32.totalorder %s69, %s71
      %p78 = scmp.eq.s32.totalorder %s28, 7
      %p79 = por %p77, %p78
      %p80 = scmp.ne.s32.totalorder %s71, %s72
      %p81 = scmp.eq.s32.totalorder %s28, 0
      %p82 = por %p80, %p81
      %p83 = scmp.ne.s32.totalorder %s71, %s72
      %p84 = scmp.eq.s32.totalorder %s29, 7
      %p85 = por %p83, %p84
      %p87 = scmp.ne.s32.totalorder %s72, %s86
      %p88 = scmp.eq.s32.totalorder %s29, 0
      %p89 = por %p87, %p88
      %s91 = sadd.s32 %s90, 1
      %p94 = scmp.eq.s32.totalorder %s23, 7
      %p95 = scmp.ne.s32.totalorder %s90, %s92
      %p96 = scmp.eq.s32.totalorder %s23, 0
      %p97 = por %p95, %p96
      %p98 = scmp.ne.s32.totalorder %s90, %s92
      %p99 = scmp.eq.s32.totalorder %s28, 7
      %p100 = por %p98, %p99
      %p101 = scmp.ne.s32.totalorder %s92, %s93
      %p102 = scmp.eq.s32.totalorder %s28, 0
      %p103 = por %p101, %p102
      %p104 = scmp.ne.s32.totalorder %s92, %s93
      %p105 = scmp.eq.s32.totalorder %s29, 7
      %p106 = por %p104, %p105
      %p108 = scmp.ne.s32.totalorder %s93, %s107
      %p109 = scmp.eq.s32.totalorder %s29, 0
      %p110 = por %p108, %p109
      %s112 = sadd.s32 %s111, 1
      %p115 = scmp.eq.s32.totalorder %s23, 7
      %p116 = scmp.ne.s32.totalorder %s111, %s113
      %p117 = scmp.eq.s32.totalorder %s23, 0
      %p118 = por %p116, %p117
      %p119 = scmp.ne.s32.totalorder %s111, %s113
      %p120 = scmp.eq.s32.totalorder %s28, 7
      %p121 = por %p119, %p120
      %p122 = scmp.ne.s32.totalorder %s113, %s114
      %p123 = scmp.eq.s32.totalorder %s28, 0
      %p124 = por %p122, %p123
      %p125 = scmp.ne.s32.totalorder %s113, %s114
      %p126 = scmp.eq.s32.totalorder %s29, 7
      %p127 = por %p125, %p126
      %p129 = scmp.ne.s32.totalorder %s114, %s128
      %p130 = scmp.eq.s32.totalorder %s29, 0
      %p131 = por %p129, %p130
      %s133 = sadd.s32 %s132, 1
      %p136 = scmp.eq.s32.totalorder %s23, 7
      %p137 = scmp.ne.s32.totalorder %s132, %s134
      %p138 = scmp.eq.s32.totalorder %s23, 0
      %p139 = por %p137, %p138
      %p140 = scmp.ne.s32.totalorder %s132, %s134
      %p141 = scmp.eq.s32.totalorder %s28, 7
      %p142 = por %p140, %p141
      %p143 = scmp.ne.s32.totalorder %s134, %s135
      %p144 = scmp.eq.s32.totalorder %s28, 0
      %p145 = por %p143, %p144
      %p146 = scmp.ne.s32.totalorder %s134, %s135
      %p147 = scmp.eq.s32.totalorder %s29, 7
      %p148 = por %p146, %p147
      %p150 = scmp.ne.s32.totalorder %s135, %s149
      %p151 = scmp.eq.s32.totalorder %s29, 0
      %p152 = por %p150, %p151
      %s154 = sadd.s32 %s153, 1
      %p157 = scmp.eq.s32.totalorder %s23, 7
      %p158 = scmp.ne.s32.totalorder %s153, %s155
      %p159 = scmp.eq.s32.totalorder %s23, 0
      %p160 = por %p158, %p159
      %p161 = scmp.ne.s32.totalorder %s153, %s155
      %p162 = scmp.eq.s32.totalorder %s28, 7
      %p163 = por %p161, %p162
      %p164 = scmp.ne.s32.totalorder %s155, %s156
      %p165 = scmp.eq.s32.totalorder %s28, 0
      %p166 = por %p164, %p165
      %p167 = scmp.ne.s32.totalorder %s155, %s156
      %p168 = scmp.eq.s32.totalorder %s29, 7
      %p169 = por %p167, %p168
      %p171 = scmp.ne.s32.totalorder %s156, %s170
      %p172 = scmp.eq.s32.totalorder %s29, 0
      %p173 = por %p171, %p172
      %s175 = sadd.s32 %s174, 1
      %p178 = scmp.eq.s32.totalorder %s23, 7
      %p179 = scmp.ne.s32.totalorder %s174, %s176
      %p180 = scmp.eq.s32.totalorder %s23, 0
      %p181 = por %p179, %p180
      %p182 = scmp.ne.s32.totalorder %s174, %s176
      %p183 = scmp.eq.s32.totalorder %s28, 7
      %p184 = por %p182, %p183
      %p185 = scmp.ne.s32.totalorder %s176, %s177
      %p186 = scmp.eq.s32.totalorder %s28, 0
      %p187 = por %p185, %p186
      %p188 = scmp.ne.s32.totalorder %s176, %s177
      %p189 = scmp.eq.s32.totalorder %s29, 7
      %p190 = por %p188, %p189
      %p192 = scmp.ne.s32.totalorder %s177, %s191
      %p193 = scmp.eq.s32.totalorder %s29, 0
      %p194 = por %p192, %p193
      %s196 = sadd.s32 %s195, 1
      %p199 = scmp.eq.s32.totalorder %s23, 7
      %p200 = scmp.ne.s32.totalorder %s195, %s197
      %p201 = scmp.eq.s32.totalorder %s23, 0
      %p202 = por %p200, %p201
      %p203 = scmp.ne.s32.totalorder %s195, %s197
      %p204 = scmp.eq.s32.totalorder %s28, 7
      %p205 = por %p203, %p204
      %p206 = scmp.ne.s32.totalorder %s197, %s198
      %p207 = scmp.eq.s32.totalorder %s28, 0
      %p208 = por %p206, %p207
      %p209 = scmp.ne.s32.totalorder %s197, %s198
      %p210 = scmp.eq.s32.totalorder %s29, 7
      %p211 = por %p209, %p210
      %p213 = scmp.ne.s32.totalorder %s198, %s212
      %p214 = scmp.eq.s32.totalorder %s29, 0
      %p215 = por %p213, %p214
      %s216 = ssub.s32 %s30, %s42
      %s217 = ssub.s32 %s31, %s38
      %s218 = sor.u32 %s216, %s217
      %p219 = scmp.eq.s32.totalorder %s218, 0
      %s221 = sadd.s32 %s220, 1
      %s222 = scalar_select %p219, %s220, %s221
      %p225 = pneg %p219
      %p226 = scmp.eq.s32.totalorder %s23, 7
      %p227 = por %p225, %p226
      %p228 = scmp.ne.s32.totalorder %s220, %s223
      %p229 = scmp.eq.s32.totalorder %s23, 0
      %p230 = por %p228, %p229
      %p231 = scmp.ne.s32.totalorder %s220, %s223
      %p232 = scmp.eq.s32.totalorder %s28, 7
      %p233 = por %p231, %p232
      %p234 = scmp.ne.s32.totalorder %s223, %s224
      %p235 = scmp.eq.s32.totalorder %s28, 0
      %p236 = por %p234, %p235
      %p237 = scmp.ne.s32.totalorder %s223, %s224
      %p238 = scmp.eq.s32.totalorder %s29, 7
      %p239 = por %p237, %p238
      %p241 = scmp.ne.s32.totalorder %s224, %s240
      %p242 = scmp.eq.s32.totalorder %s29, 0
      %p243 = por %p241, %p242
      %s244 = ssub.s32 %s30, %s42
      %s245 = ssub.s32 %s31, %s38
      %s246 = sor.u32 %s244, %s245
      %p247 = scmp.eq.s32.totalorder %s246, 0
      %s249 = sadd.s32 %s248, 1
      %s250 = scalar_select %p247, %s248, %s249
      %p253 = pneg %p247
      %p254 = scmp.eq.s32.totalorder %s23, 7
      %p255 = por %p253, %p254
      %p256 = scmp.ne.s32.totalorder %s248, %s251
      %p257 = scmp.eq.s32.totalorder %s23, 0
      %p258 = por %p256, %p257
      %p259 = scmp.ne.s32.totalorder %s248, %s251
      %p260 = scmp.eq.s32.totalorder %s28, 7
      %p261 = por %p259, %p260
      %p262 = scmp.ne.s32.totalorder %s251, %s252
      %p263 = scmp.eq.s32.totalorder %s28, 0
      %p264 = por %p262, %p263
      %p265 = scmp.ne.s32.totalorder %s251, %s252
      %p266 = scmp.eq.s32.totalorder %s29, 7
      %p267 = por %p265, %p266
      %p269 = scmp.ne.s32.totalorder %s252, %s268
      %p270 = scmp.eq.s32.totalorder %s29, 0
      %p271 = por %p269, %p270
      %p272 = scmp.le.s32.totalorder 1, %s23
      %p273 = scmp.lt.s32.totalorder %s23, 9
      %p274 = pnand %p272, %p273
      %p275 = pneg %p274
      // Predicated region
      $region9: #{tpu_custom_call.1} parent=5 // pred_check
        _
      $region10: #{tpu_custom_call.1} parent=5 // pred_check_branch
        %277 = sbr.rel (%p274) target = $region12
      $region11: #{tpu_custom_call.1} parent=5 // pred_region
        %s278 = ssub.s32 %s23, 1
        // Predicated region
        $region13: #{tpu_custom_call.1} parent=11 // pred_check
          %p279 = pneg %p82
        $region14: #{tpu_custom_call.1} parent=11 // pred_check_branch
          %281 = sbr.rel (%p279) target = $region16
        $region15: #{tpu_custom_call.1} parent=11 // pred_region
          _
        $region16: #{tpu_custom_call.1} parent=11 // pred_fallthru
          _
        // Predicated region
        $region17: #{tpu_custom_call.1} parent=11 // pred_check
          %p282 = pneg %p103
        $region18: #{tpu_custom_call.1} parent=11 // pred_check_branch
          %284 = sbr.rel (%p282) target = $region20
        $region19: #{tpu_custom_call.1} parent=11 // pred_region
          %286 = vsyncadd [#allocation6], 0
          %s288 = sshll.u32 %s2, 4
          %s289 = int_to_ptr.hbm [resolvable:$true] %s288
          %s290 = sshll.u32 [#allocation5], 4
          %s291 = int_to_ptr.vmem [resolvable:$true] %s290
          %293 = dma.hbm_to_vmem [thread:$0]  %s289, 16, %s291, [#allocation6]
        $region20: #{tpu_custom_call.1} parent=11 // pred_fallthru
          _
        // Predicated region
        $region21: #{tpu_custom_call.1} parent=11 // pred_check
          %p294 = pneg %p124
        $region22: #{tpu_custom_call.1} parent=11 // pred_check_branch
          %296 = sbr.rel (%p294) target = $region24
        $region23: #{tpu_custom_call.1} parent=11 // pred_region
          _
        $region24: #{tpu_custom_call.1} parent=11 // pred_fallthru
          _
        // Predicated region
        $region25: #{tpu_custom_call.1} parent=11 // pred_check
          %p297 = pneg %p145
        $region26: #{tpu_custom_call.1} parent=11 // pred_check_branch
          %299 = sbr.rel (%p297) target = $region28
        $region27: #{tpu_custom_call.1} parent=11 // pred_region
          %301 = vsyncadd [#allocation9], 0
          %s303 = sshll.u32 %s4, 4
          %s304 = int_to_ptr.hbm [resolvable:$true] %s303
          %s305 = sshll.u32 [#allocation8], 4
          %s306 = int_to_ptr.vmem [resolvable:$true] %s305
          %308 = dma.hbm_to_vmem [thread:$0]  %s304, 16, %s306, [#allocation9]
        $region28: #{tpu_custom_call.1} parent=11 // pred_fallthru
          _
        // Predicated region
        $region29: #{tpu_custom_call.1} parent=11 // pred_check
          %p309 = pneg %p166
        $region30: #{tpu_custom_call.1} parent=11 // pred_check_branch
          %311 = sbr.rel (%p309) target = $region32
        $region31: #{tpu_custom_call.1} parent=11 // pred_region
          %313 = vsyncadd [#allocation9], 0
          %s314 = sshll.u32 %s5, 4
          %s315 = int_to_ptr.hbm [resolvable:$true] %s314
          %s316 = sshll.u32 [#allocation10], 4
          %s317 = int_to_ptr.vmem [resolvable:$true] %s316
          %322 = dma.hbm_to_vmem [thread:$0]  %s315, 512, %s317, [#allocation9], 128, 128, 8
        $region32: #{tpu_custom_call.1} parent=11 // pred_fallthru
          _
        // Predicated region
        $region33: #{tpu_custom_call.1} parent=11 // pred_check
          %p323 = pneg %p187
        $region34: #{tpu_custom_call.1} parent=11 // pred_check_branch
          %325 = sbr.rel (%p323) target = $region36
        $region35: #{tpu_custom_call.1} parent=11 // pred_region
          %327 = vsyncadd [#allocation12], 0
          %s329 = sshll.u32 %s6, 4
          %s330 = int_to_ptr.hbm [resolvable:$true] %s329
          %s331 = sshll.u32 [#allocation11], 4
          %s332 = int_to_ptr.vmem [resolvable:$true] %s331
          %334 = dma.hbm_to_vmem [thread:$0]  %s330, 16, %s332, [#allocation12]
        $region36: #{tpu_custom_call.1} parent=11 // pred_fallthru
          _
        // Predicated region
        $region37: #{tpu_custom_call.1} parent=11 // pred_check
          %p335 = pneg %p208
        $region38: #{tpu_custom_call.1} parent=11 // pred_check_branch
          %337 = sbr.rel (%p335) target = $region40
        $region39: #{tpu_custom_call.1} parent=11 // pred_region
          _
        $region40: #{tpu_custom_call.1} parent=11 // pred_fallthru
          _
      $region12: #{tpu_custom_call.1} parent=5 // pred_fallthru
        _
      %p338 = scmp.lt.s32.totalorder %s23, 8
      // Predicated region
      $region41: #{tpu_custom_call.1} parent=5 // pred_check
        %p339 = pneg %p338
      $region42: #{tpu_custom_call.1} parent=5 // pred_check_branch
        %341 = sbr.rel (%p339) target = $region44
      $region43: #{tpu_custom_call.1} parent=5 // pred_region
        // Predicated region
        $region45: #{tpu_custom_call.1} parent=43 // pred_check
          %p342 = pneg %p55
        $region46: #{tpu_custom_call.1} parent=43 // pred_check_branch
          %344 = sbr.rel (%p342) target = $region48
        $region47: #{tpu_custom_call.1} parent=43 // pred_region
          %p345 = scmp.lt.s32.totalorder %s30, 1
          %s346 = scalar_select %p345, %s30, 1
          %s347 = smul.addr %s346, 32
          %s348 = smul.addr %s347, 8
          %s349 = scalar_lea.vmem %s0, %s348
        $region48: #{tpu_custom_call.1} parent=43 // pred_fallthru
          _
      $region44: #{tpu_custom_call.1} parent=5 // pred_fallthru
        _
      %p350 = scmp.le.s32.totalorder 1, %s23
      %p351 = scmp.lt.s32.totalorder %s23, 9
      %p352 = pnand %p350, %p351
      %p353 = pneg %p352
      // Predicated region
      $region49: #{tpu_custom_call.1} parent=5 // pred_check
        _
      $region50: #{tpu_custom_call.1} parent=5 // pred_check_branch
        %355 = sbr.rel (%p352) target = $region52
      $region51: #{tpu_custom_call.1} parent=5 // pred_region
        %s356 = ssub.s32 %s23, 1
        // Predicated region
        $region53: #{tpu_custom_call.1} parent=51 // pred_check
          %p357 = pneg %p103
        $region54: #{tpu_custom_call.1} parent=51 // pred_check_branch
          %359 = sbr.rel (%p357) target = $region56
        $region55: #{tpu_custom_call.1} parent=51 // pred_region
          %361 = dma.done [#allocation6], 16
        $region56: #{tpu_custom_call.1} parent=51 // pred_fallthru
          _
        // Predicated region
        $region57: #{tpu_custom_call.1} parent=51 // pred_check
          %p362 = pneg %p145
        $region58: #{tpu_custom_call.1} parent=51 // pred_check_branch
          %364 = sbr.rel (%p362) target = $region60
        $region59: #{tpu_custom_call.1} parent=51 // pred_region
          %366 = dma.done [#allocation9], 16
        $region60: #{tpu_custom_call.1} parent=51 // pred_fallthru
          _
        // Predicated region
        $region61: #{tpu_custom_call.1} parent=51 // pred_check
          %p367 = pneg %p166
        $region62: #{tpu_custom_call.1} parent=51 // pred_check_branch
          %369 = sbr.rel (%p367) target = $region64
        $region63: #{tpu_custom_call.1} parent=51 // pred_region
          %371 = dma.done [#allocation9], 512
        $region64: #{tpu_custom_call.1} parent=51 // pred_fallthru
          _
        // Predicated region
        $region65: #{tpu_custom_call.1} parent=51 // pred_check
          %p372 = pneg %p187
        $region66: #{tpu_custom_call.1} parent=51 // pred_check_branch
          %374 = sbr.rel (%p372) target = $region68
        $region67: #{tpu_custom_call.1} parent=51 // pred_region
          %376 = dma.done [#allocation12], 16
        $region68: #{tpu_custom_call.1} parent=51 // pred_fallthru
          _
        %p377 = scmp.lt.s32.totalorder %s32, 1
        %s378 = scalar_select %p377, %s32, 1
        %s379 = smul.addr %s378, 32
        %s380 = smul.addr %s379, 8
        %s381 = scalar_lea.vmem %s0, %s380
        %p382 = pneg %p61
        %p383 = pneg %p58
        %p384 = pneg %p82
        %p385 = pneg %p79
        %p386 = pneg %p103
        %p387 = pneg %p100
        %p388 = pneg %p124
        %p389 = pneg %p121
        %p390 = pneg %p145
        %p391 = pneg %p142
        %p392 = pneg %p166
        %p393 = pneg %p163
        %p394 = pneg %p187
        %p395 = pneg %p184
        %p396 = pneg %p208
        %p397 = pneg %p205
        %p398 = pneg %p236
        %p399 = pneg %p233
        %s400 = smul.u32 8, %s33
        %p401 = scmp.lt.s32.totalorder %s32, 1
        %s402 = scalar_select %p401, %s32, 1
        %p403 = scmp.lt.s32.totalorder %s400, 31
        %s404 = scalar_select %p403, %s400, 31
        %s405 = smul.addr %s402, 32
        %s406 = sadd.s32 %s404, %s405
        %s407 = smul.addr %s406, 8
        %s408 = scalar_lea.vmem %s8, %s407
        %p409 = pneg %p264
        %p410 = pneg %p261
        %s411 = sand.u32 %s251, 1
        %s412 = scalar_lea.sflag [#allocation7], %s411
        %s413 = sand.u32 %s251, 1
        %s414 = smul.addr %s413, 512
        %s415 = scalar_lea.vmem [#allocation13], %s414
        %p416 = scmp.lt.s32.totalorder %s32, 1
        %s417 = scalar_select %p416, %s32, 1
        %s418 = smul.addr %s417, 32
        %s419 = smul.addr %s418, 8
        %s420 = scalar_lea.vmem %s0, %s419
        %s421 = smul.u32 8, %s33
        %p422 = scmp.lt.s32.totalorder %s32, 1
        %s423 = scalar_select %p422, %s32, 1
        %p424 = scmp.lt.s32.totalorder %s421, 31
        %s425 = scalar_select %p424, %s421, 31
        %s426 = smul.addr %s423, 32
        %s427 = sadd.s32 %s425, %s426
        %s428 = smul.addr %s427, 8
        %s429 = scalar_lea.vmem %s8, %s428
        %s430 = smul.u32 8, %s33
        %s431 = smul.u32 8, %s33
        %p432 = scmp.eq.s32.totalorder %s33, 0
        // Predicated region
        $region69: #{tpu_custom_call.1} parent=51 // pred_check
          %p433 = pneg %p432
        $region70: #{tpu_custom_call.1} parent=51 // pred_check_branch
          %435 = sbr.rel (%p433) target = $region72
        $region71: #{tpu_custom_call.1} parent=51 // pred_region
          %v436 = vld [vmem:[%s420] sm:$0xff]
          %v437 = vld [vmem:[%s420 + $0x8] sm:$0xff]
          %v438 = vld [vmem:[%s420 + $0x10] sm:$0xff]
          %v439 = vld [vmem:[%s420 + $0x18] sm:$0xff]
          %v440 = vld [vmem:[%s420 + $0x20] sm:$0xff]
          %v441 = vld [vmem:[%s420 + $0x28] sm:$0xff]
          %v442 = vld [vmem:[%s420 + $0x30] sm:$0xff]
          %v443 = vld [vmem:[%s420 + $0x38] sm:$0xff]
          %v444 = vld [vmem:[%s420 + $0x40] sm:$0xff]
          %v445 = vld [vmem:[%s420 + $0x48] sm:$0xff]
          %v446 = vld [vmem:[%s420 + $0x50] sm:$0xff]
          %v447 = vld [vmem:[%s420 + $0x58] sm:$0xff]
          %v448 = vld [vmem:[%s420 + $0x60] sm:$0xff]
          %v449 = vld [vmem:[%s420 + $0x68] sm:$0xff]
          %v450 = vld [vmem:[%s420 + $0x70] sm:$0xff]
          %v451 = vld [vmem:[%s420 + $0x78] sm:$0xff]
          %v452 = vld [vmem:[%s420 + $0x80] sm:$0xff]
          %v453 = vld [vmem:[%s420 + $0x88] sm:$0xff]
          %v454 = vld [vmem:[%s420 + $0x90] sm:$0xff]
          %v455 = vld [vmem:[%s420 + $0x98] sm:$0xff]
          %v456 = vld [vmem:[%s420 + $0xa0] sm:$0xff]
          %v457 = vld [vmem:[%s420 + $0xa8] sm:$0xff]
          %v458 = vld [vmem:[%s420 + $0xb0] sm:$0xff]
          %v459 = vld [vmem:[%s420 + $0xb8] sm:$0xff]
          %v460 = vld [vmem:[%s420 + $0xc0] sm:$0xff]
          %v461 = vld [vmem:[%s420 + $0xc8] sm:$0xff]
          %v462 = vld [vmem:[%s420 + $0xd0] sm:$0xff]
          %v463 = vld [vmem:[%s420 + $0xd8] sm:$0xff]
          %v464 = vld [vmem:[%s420 + $0xe0] sm:$0xff]
          %v465 = vld [vmem:[%s420 + $0xe8] sm:$0xff]
          %v466 = vld [vmem:[%s420 + $0xf0] sm:$0xff]
          %v467 = vld [vmem:[%s420 + $0xf8] sm:$0xff]
          %v468 = vld [vmem:[%s3] sm:$0xff]
          %v469 = vld [vmem:[%s3 + $0x8] sm:$0xff]
          %v470 = vld [vmem:[%s3 + $0x10] sm:$0xff]
          %v471 = vld [vmem:[%s3 + $0x18] sm:$0xff]
          %v472 = vld [vmem:[#allocation8] sm:$0x1]
          %v474 = vperm.slane %v472, 0
          %vm476 = vcmask 261120
          %v478 = vsel %vm476, %v436, 0
          %v481 = vsel %vm476, %v437, 0
          %v484 = vsel %vm476, %v438, 0
          %v487 = vsel %vm476, %v439, 0
          %v490 = vsel %vm476, %v440, 0
          %v493 = vsel %vm476, %v441, 0
          %v496 = vsel %vm476, %v442, 0
          %v499 = vsel %vm476, %v443, 0
          %v502 = vsel %vm476, %v444, 0
          %v505 = vsel %vm476, %v445, 0
          %v508 = vsel %vm476, %v446, 0
          %v511 = vsel %vm476, %v447, 0
          %v514 = vsel %vm476, %v448, 0
          %v517 = vsel %vm476, %v449, 0
          %v520 = vsel %vm476, %v450, 0
          %v523 = vsel %vm476, %v451, 0
          %v526 = vsel %vm476, %v452, 0
          %v529 = vsel %vm476, %v453, 0
          %v532 = vsel %vm476, %v454, 0
          %v535 = vsel %vm476, %v455, 0
          %v538 = vsel %vm476, %v456, 0
          %v541 = vsel %vm476, %v457, 0
          %v544 = vsel %vm476, %v458, 0
          %v547 = vsel %vm476, %v459, 0
          %v550 = vsel %vm476, %v460, 0
          %v553 = vsel %vm476, %v461, 0
          %v556 = vsel %vm476, %v462, 0
          %v559 = vsel %vm476, %v463, 0
          %v562 = vsel %vm476, %v464, 0
          %v565 = vsel %vm476, %v465, 0
          %v568 = vsel %vm476, %v466, 0
          %v571 = vsel %vm476, %v467, 0
          %573 = vmatpush.msra.mxu0 0.0
          %574 = vmatpush.msra.mxu0 0.0
          %575 = vmatpush.msra.mxu0 0.0
          %576 = vmatpush.msra.mxu0 0.0
          %577 = vmatpush.msra.mxu0 0.0
          %578 = vmatpush.msra.mxu0 0.0
          %579 = vmatpush.msra.mxu0 0.0
          %580 = vmatpush.msra.mxu0 0.0
          %581 = vmatpush.msra.mxu0 0.0
          %582 = vmatpush.msra.mxu0 0.0
          %583 = vmatpush.msra.mxu0 0.0
          %584 = vmatpush.msra.mxu0 0.0
          %585 = vmatpush.msra.mxu0 %v471
          %586 = vmatpush.msra.mxu0 %v470
          %587 = vmatpush.msra.mxu0 %v469
          %588 = vmatpush.msra.mxu0 %v468
          %589 = vmatmul.f32.gmra.mxu0 %v478
          %v590 = vpop.f32.mrf.mxu0
          %v591 = vadd.f32 %v474, %v590
          %592 = vmatmul.f32.gmra.mxu0 %v481
          %v593 = vpop.f32.mrf.mxu0
          %v594 = vadd.f32 %v474, %v593
          %595 = vmatmul.f32.gmra.mxu0 %v484
          %v596 = vpop.f32.mrf.mxu0
          %v597 = vadd.f32 %v474, %v596
          %598 = vmatmul.f32.gmra.mxu0 %v487
          %v599 = vpop.f32.mrf.mxu0
          %v600 = vadd.f32 %v474, %v599
          %601 = vmatmul.f32.gmra.mxu0 %v490
          %v602 = vpop.f32.mrf.mxu0
          %v603 = vadd.f32 %v474, %v602
          %604 = vmatmul.f32.gmra.mxu0 %v493
          %v605 = vpop.f32.mrf.mxu0
          %v606 = vadd.f32 %v474, %v605
          %607 = vmatmul.f32.gmra.mxu0 %v496
          %v608 = vpop.f32.mrf.mxu0
          %v609 = vadd.f32 %v474, %v608
          %610 = vmatmul.f32.gmra.mxu0 %v499
          %v611 = vpop.f32.mrf.mxu0
          %v612 = vadd.f32 %v474, %v611
          %613 = vmatmul.f32.gmra.mxu0 %v502
          %v614 = vpop.f32.mrf.mxu0
          %v615 = vadd.f32 %v474, %v614
          %616 = vmatmul.f32.gmra.mxu0 %v505
          %v617 = vpop.f32.mrf.mxu0
          %v618 = vadd.f32 %v474, %v617
          %619 = vmatmul.f32.gmra.mxu0 %v508
          %v620 = vpop.f32.mrf.mxu0
          %v621 = vadd.f32 %v474, %v620
          %622 = vmatmul.f32.gmra.mxu0 %v511
          %v623 = vpop.f32.mrf.mxu0
          %v624 = vadd.f32 %v474, %v623
          %625 = vmatmul.f32.gmra.mxu0 %v514
          %v626 = vpop.f32.mrf.mxu0
          %v627 = vadd.f32 %v474, %v626
          %628 = vmatmul.f32.gmra.mxu0 %v517
          %v629 = vpop.f32.mrf.mxu0
          %v630 = vadd.f32 %v474, %v629
          %631 = vmatmul.f32.gmra.mxu0 %v520
          %v632 = vpop.f32.mrf.mxu0
          %v633 = vadd.f32 %v474, %v632
          %634 = vmatmul.f32.gmra.mxu0 %v523
          %v635 = vpop.f32.mrf.mxu0
          %v636 = vadd.f32 %v474, %v635
          %637 = vmatmul.f32.gmra.mxu0 %v526
          %v638 = vpop.f32.mrf.mxu0
          %v639 = vadd.f32 %v474, %v638
          %640 = vmatmul.f32.gmra.mxu0 %v529
          %v641 = vpop.f32.mrf.mxu0
          %v642 = vadd.f32 %v474, %v641
          %643 = vmatmul.f32.gmra.mxu0 %v532
          %v644 = vpop.f32.mrf.mxu0
          %v645 = vadd.f32 %v474, %v644
          %646 = vmatmul.f32.gmra.mxu0 %v535
          %v647 = vpop.f32.mrf.mxu0
          %v648 = vadd.f32 %v474, %v647
          %649 = vmatmul.f32.gmra.mxu0 %v538
          %v650 = vpop.f32.mrf.mxu0
          %v651 = vadd.f32 %v474, %v650
          %652 = vmatmul.f32.gmra.mxu0 %v541
          %v653 = vpop.f32.mrf.mxu0
          %v654 = vadd.f32 %v474, %v653
          %655 = vmatmul.f32.gmra.mxu0 %v544
          %v656 = vpop.f32.mrf.mxu0
          %v657 = vadd.f32 %v474, %v656
          %658 = vmatmul.f32.gmra.mxu0 %v547
          %v659 = vpop.f32.mrf.mxu0
          %v660 = vadd.f32 %v474, %v659
          %661 = vmatmul.f32.gmra.mxu0 %v550
          %v662 = vpop.f32.mrf.mxu0
          %v663 = vadd.f32 %v474, %v662
          %664 = vmatmul.f32.gmra.mxu0 %v553
          %v665 = vpop.f32.mrf.mxu0
          %v666 = vadd.f32 %v474, %v665
          %667 = vmatmul.f32.gmra.mxu0 %v556
          %v668 = vpop.f32.mrf.mxu0
          %v669 = vadd.f32 %v474, %v668
          %670 = vmatmul.f32.gmra.mxu0 %v559
          %v671 = vpop.f32.mrf.mxu0
          %v672 = vadd.f32 %v474, %v671
          %673 = vmatmul.f32.gmra.mxu0 %v562
          %v674 = vpop.f32.mrf.mxu0
          %v675 = vadd.f32 %v474, %v674
          %676 = vmatmul.f32.gmra.mxu0 %v565
          %v677 = vpop.f32.mrf.mxu0
          %v678 = vadd.f32 %v474, %v677
          %679 = vmatmul.f32.gmra.mxu0 %v568
          %v680 = vpop.f32.mrf.mxu0
          %v681 = vadd.f32 %v474, %v680
          %682 = vmatmul.f32.gmra.mxu0 %v571
          %v683 = vpop.f32.mrf.mxu0
          %v684 = vadd.f32 %v474, %v683
          %685 = vdwg.mxu0
          %vm686 = vcmask 130048
          %687 = vst.msk [vmem:[#allocation2] sm:$0xff] %vm686, %v591
          %688 = vst.msk [vmem:[#allocation2 + $0x8] sm:$0xff] %vm686, %v594
          %689 = vst.msk [vmem:[#allocation2 + $0x10] sm:$0xff] %vm686, %v597
          %690 = vst.msk [vmem:[#allocation2 + $0x18] sm:$0xff] %vm686, %v600
          %691 = vst.msk [vmem:[#allocation2 + $0x20] sm:$0xff] %vm686, %v603
          %692 = vst.msk [vmem:[#allocation2 + $0x28] sm:$0xff] %vm686, %v606
          %693 = vst.msk [vmem:[#allocation2 + $0x30] sm:$0xff] %vm686, %v609
          %694 = vst.msk [vmem:[#allocation2 + $0x38] sm:$0xff] %vm686, %v612
          %695 = vst.msk [vmem:[#allocation2 + $0x40] sm:$0xff] %vm686, %v615
          %696 = vst.msk [vmem:[#allocation2 + $0x48] sm:$0xff] %vm686, %v618
          %697 = vst.msk [vmem:[#allocation2 + $0x50] sm:$0xff] %vm686, %v621
          %698 = vst.msk [vmem:[#allocation2 + $0x58] sm:$0xff] %vm686, %v624
          %699 = vst.msk [vmem:[#allocation2 + $0x60] sm:$0xff] %vm686, %v627
          %700 = vst.msk [vmem:[#allocation2 + $0x68] sm:$0xff] %vm686, %v630
          %701 = vst.msk [vmem:[#allocation2 + $0x70] sm:$0xff] %vm686, %v633
          %702 = vst.msk [vmem:[#allocation2 + $0x78] sm:$0xff] %vm686, %v636
          %703 = vst.msk [vmem:[#allocation2 + $0x80] sm:$0xff] %vm686, %v639
          %704 = vst.msk [vmem:[#allocation2 + $0x88] sm:$0xff] %vm686, %v642
          %705 = vst.msk [vmem:[#allocation2 + $0x90] sm:$0xff] %vm686, %v645
          %706 = vst.msk [vmem:[#allocation2 + $0x98] sm:$0xff] %vm686, %v648
          %707 = vst.msk [vmem:[#allocation2 + $0xa0] sm:$0xff] %vm686, %v651
          %708 = vst.msk [vmem:[#allocation2 + $0xa8] sm:$0xff] %vm686, %v654
          %709 = vst.msk [vmem:[#allocation2 + $0xb0] sm:$0xff] %vm686, %v657
          %710 = vst.msk [vmem:[#allocation2 + $0xb8] sm:$0xff] %vm686, %v660
          %711 = vst.msk [vmem:[#allocation2 + $0xc0] sm:$0xff] %vm686, %v663
          %712 = vst.msk [vmem:[#allocation2 + $0xc8] sm:$0xff] %vm686, %v666
          %713 = vst.msk [vmem:[#allocation2 + $0xd0] sm:$0xff] %vm686, %v669
          %714 = vst.msk [vmem:[#allocation2 + $0xd8] sm:$0xff] %vm686, %v672
          %715 = vst.msk [vmem:[#allocation2 + $0xe0] sm:$0xff] %vm686, %v675
          %716 = vst.msk [vmem:[#allocation2 + $0xe8] sm:$0xff] %vm686, %v678
          %717 = vst.msk [vmem:[#allocation2 + $0xf0] sm:$0xff] %vm686, %v681
          %718 = vst.msk [vmem:[#allocation2 + $0xf8] sm:$0xff] %vm686, %v684
          %v719 = vld [vmem:[#allocation10] sm:$0xff]
          %v720 = vld [vmem:[#allocation10 + $0x8] sm:$0xff]
          %v721 = vld [vmem:[#allocation10 + $0x10] sm:$0xff]
          %v722 = vld [vmem:[#allocation10 + $0x18] sm:$0xff]
          %v723 = vld [vmem:[#allocation11] sm:$0x1]
          %v725 = vperm.slane %v723, 0
          %727 = vmatpush.msra.mxu0 0.0
          %728 = vmatpush.msra.mxu0 0.0
          %729 = vmatpush.msra.mxu0 0.0
          %730 = vmatpush.msra.mxu0 0.0
          %731 = vmatpush.msra.mxu0 0.0
          %732 = vmatpush.msra.mxu0 0.0
          %733 = vmatpush.msra.mxu0 0.0
          %734 = vmatpush.msra.mxu0 0.0
          %735 = vmatpush.msra.mxu0 0.0
          %736 = vmatpush.msra.mxu0 0.0
          %737 = vmatpush.msra.mxu0 0.0
          %738 = vmatpush.msra.mxu0 0.0
          %739 = vmatpush.msra.mxu0 %v722
          %740 = vmatpush.msra.mxu0 %v721
          %741 = vmatpush.msra.mxu0 %v720
          %742 = vmatpush.msra.mxu0 %v719
          %743 = vmatmul.f32.gmra.mxu0 %v478
          %v744 = vpop.f32.mrf.mxu0
          %v745 = vadd.f32 %v725, %v744
          %746 = vmatmul.f32.gmra.mxu0 %v481
          %v747 = vpop.f32.mrf.mxu0
          %v748 = vadd.f32 %v725, %v747
          %749 = vmatmul.f32.gmra.mxu0 %v484
          %v750 = vpop.f32.mrf.mxu0
          %v751 = vadd.f32 %v725, %v750
          %752 = vmatmul.f32.gmra.mxu0 %v487
          %v753 = vpop.f32.mrf.mxu0
          %v754 = vadd.f32 %v725, %v753
          %755 = vmatmul.f32.gmra.mxu0 %v490
          %v756 = vpop.f32.mrf.mxu0
          %v757 = vadd.f32 %v725, %v756
          %758 = vmatmul.f32.gmra.mxu0 %v493
          %v759 = vpop.f32.mrf.mxu0
          %v760 = vadd.f32 %v725, %v759
          %761 = vmatmul.f32.gmra.mxu0 %v496
          %v762 = vpop.f32.mrf.mxu0
          %v763 = vadd.f32 %v725, %v762
          %764 = vmatmul.f32.gmra.mxu0 %v499
          %v765 = vpop.f32.mrf.mxu0
          %v766 = vadd.f32 %v725, %v765
          %767 = vmatmul.f32.gmra.mxu0 %v502
          %v768 = vpop.f32.mrf.mxu0
          %v769 = vadd.f32 %v725, %v768
          %770 = vmatmul.f32.gmra.mxu0 %v505
          %v771 = vpop.f32.mrf.mxu0
          %v772 = vadd.f32 %v725, %v771
          %773 = vmatmul.f32.gmra.mxu0 %v508
          %v774 = vpop.f32.mrf.mxu0
          %v775 = vadd.f32 %v725, %v774
          %776 = vmatmul.f32.gmra.mxu0 %v511
          %v777 = vpop.f32.mrf.mxu0
          %v778 = vadd.f32 %v725, %v777
          %779 = vmatmul.f32.gmra.mxu0 %v514
          %v780 = vpop.f32.mrf.mxu0
          %v781 = vadd.f32 %v725, %v780
          %782 = vmatmul.f32.gmra.mxu0 %v517
          %v783 = vpop.f32.mrf.mxu0
          %v784 = vadd.f32 %v725, %v783
          %785 = vmatmul.f32.gmra.mxu0 %v520
          %v786 = vpop.f32.mrf.mxu0
          %v787 = vadd.f32 %v725, %v786
          %788 = vmatmul.f32.gmra.mxu0 %v523
          %v789 = vpop.f32.mrf.mxu0
          %v790 = vadd.f32 %v725, %v789
          %791 = vmatmul.f32.gmra.mxu0 %v526
          %v792 = vpop.f32.mrf.mxu0
          %v793 = vadd.f32 %v725, %v792
          %794 = vmatmul.f32.gmra.mxu0 %v529
          %v795 = vpop.f32.mrf.mxu0
          %v796 = vadd.f32 %v725, %v795
          %797 = vmatmul.f32.gmra.mxu0 %v532
          %v798 = vpop.f32.mrf.mxu0
          %v799 = vadd.f32 %v725, %v798
          %800 = vmatmul.f32.gmra.mxu0 %v535
          %v801 = vpop.f32.mrf.mxu0
          %v802 = vadd.f32 %v725, %v801
          %803 = vmatmul.f32.gmra.mxu0 %v538
          %v804 = vpop.f32.mrf.mxu0
          %v805 = vadd.f32 %v725, %v804
          %806 = vmatmul.f32.gmra.mxu0 %v541
          %v807 = vpop.f32.mrf.mxu0
          %v808 = vadd.f32 %v725, %v807
          %809 = vmatmul.f32.gmra.mxu0 %v544
          %v810 = vpop.f32.mrf.mxu0
          %v811 = vadd.f32 %v725, %v810
          %812 = vmatmul.f32.gmra.mxu0 %v547
          %v813 = vpop.f32.mrf.mxu0
          %v814 = vadd.f32 %v725, %v813
          %815 = vmatmul.f32.gmra.mxu0 %v550
          %v816 = vpop.f32.mrf.mxu0
          %v817 = vadd.f32 %v725, %v816
          %818 = vmatmul.f32.gmra.mxu0 %v553
          %v819 = vpop.f32.mrf.mxu0
          %v820 = vadd.f32 %v725, %v819
          %821 = vmatmul.f32.gmra.mxu0 %v556
          %v822 = vpop.f32.mrf.mxu0
          %v823 = vadd.f32 %v725, %v822
          %824 = vmatmul.f32.gmra.mxu0 %v559
          %v825 = vpop.f32.mrf.mxu0
          %v826 = vadd.f32 %v725, %v825
          %827 = vmatmul.f32.gmra.mxu0 %v562
          %v828 = vpop.f32.mrf.mxu0
          %v829 = vadd.f32 %v725, %v828
          %830 = vmatmul.f32.gmra.mxu0 %v565
          %v831 = vpop.f32.mrf.mxu0
          %v832 = vadd.f32 %v725, %v831
          %833 = vmatmul.f32.gmra.mxu0 %v568
          %v834 = vpop.f32.mrf.mxu0
          %v835 = vadd.f32 %v725, %v834
          %836 = vmatmul.f32.gmra.mxu0 %v571
          %v837 = vpop.f32.mrf.mxu0
          %v838 = vadd.f32 %v725, %v837
          %839 = vdwg.mxu0
          %840 = vst.msk [vmem:[#allocation3] sm:$0xff] %vm476, %v745
          %841 = vst.msk [vmem:[#allocation3 + $0x8] sm:$0xff] %vm476, %v748
          %842 = vst.msk [vmem:[#allocation3 + $0x10] sm:$0xff] %vm476, %v751
          %843 = vst.msk [vmem:[#allocation3 + $0x18] sm:$0xff] %vm476, %v754
          %844 = vst.msk [vmem:[#allocation3 + $0x20] sm:$0xff] %vm476, %v757
          %845 = vst.msk [vmem:[#allocation3 + $0x28] sm:$0xff] %vm476, %v760
          %846 = vst.msk [vmem:[#allocation3 + $0x30] sm:$0xff] %vm476, %v763
          %847 = vst.msk [vmem:[#allocation3 + $0x38] sm:$0xff] %vm476, %v766
          %848 = vst.msk [vmem:[#allocation3 + $0x40] sm:$0xff] %vm476, %v769
          %849 = vst.msk [vmem:[#allocation3 + $0x48] sm:$0xff] %vm476, %v772
          %850 = vst.msk [vmem:[#allocation3 + $0x50] sm:$0xff] %vm476, %v775
          %851 = vst.msk [vmem:[#allocation3 + $0x58] sm:$0xff] %vm476, %v778
          %852 = vst.msk [vmem:[#allocation3 + $0x60] sm:$0xff] %vm476, %v781
          %853 = vst.msk [vmem:[#allocation3 + $0x68] sm:$0xff] %vm476, %v784
          %854 = vst.msk [vmem:[#allocation3 + $0x70] sm:$0xff] %vm476, %v787
          %855 = vst.msk [vmem:[#allocation3 + $0x78] sm:$0xff] %vm476, %v790
          %856 = vst.msk [vmem:[#allocation3 + $0x80] sm:$0xff] %vm476, %v793
          %857 = vst.msk [vmem:[#allocation3 + $0x88] sm:$0xff] %vm476, %v796
          %858 = vst.msk [vmem:[#allocation3 + $0x90] sm:$0xff] %vm476, %v799
          %859 = vst.msk [vmem:[#allocation3 + $0x98] sm:$0xff] %vm476, %v802
          %860 = vst.msk [vmem:[#allocation3 + $0xa0] sm:$0xff] %vm476, %v805
          %861 = vst.msk [vmem:[#allocation3 + $0xa8] sm:$0xff] %vm476, %v808
          %862 = vst.msk [vmem:[#allocation3 + $0xb0] sm:$0xff] %vm476, %v811
          %863 = vst.msk [vmem:[#allocation3 + $0xb8] sm:$0xff] %vm476, %v814
          %864 = vst.msk [vmem:[#allocation3 + $0xc0] sm:$0xff] %vm476, %v817
          %865 = vst.msk [vmem:[#allocation3 + $0xc8] sm:$0xff] %vm476, %v820
          %866 = vst.msk [vmem:[#allocation3 + $0xd0] sm:$0xff] %vm476, %v823
          %867 = vst.msk [vmem:[#allocation3 + $0xd8] sm:$0xff] %vm476, %v826
          %868 = vst.msk [vmem:[#allocation3 + $0xe0] sm:$0xff] %vm476, %v829
          %869 = vst.msk [vmem:[#allocation3 + $0xe8] sm:$0xff] %vm476, %v832
          %870 = vst.msk [vmem:[#allocation3 + $0xf0] sm:$0xff] %vm476, %v835
          %871 = vst.msk [vmem:[#allocation3 + $0xf8] sm:$0xff] %vm476, %v838
        $region72: #{tpu_custom_call.1} parent=51 // pred_fallthru
          _
        %s872 = smul.u32 %s33, 64
        %s873 = scalar_lea.vmem %s420, %s872
        %v874 = vld [vmem:[%s873] sm:$0xff]
        %v875 = vld [vmem:[%s873 + $0x8] sm:$0xff]
        %v876 = vld [vmem:[%s873 + $0x10] sm:$0xff]
        %v877 = vld [vmem:[%s873 + $0x18] sm:$0xff]
        %v878 = vld [vmem:[%s873 + $0x20] sm:$0xff]
        %v879 = vld [vmem:[%s873 + $0x28] sm:$0xff]
        %v880 = vld [vmem:[%s873 + $0x30] sm:$0xff]
        %v881 = vld [vmem:[%s873 + $0x38] sm:$0xff]
        %v882 = vld [vmem:[%s1] sm:$0xff]
        %v883 = vld [vmem:[%s1 + $0x8] sm:$0xff]
        %v884 = vld [vmem:[%s1 + $0x10] sm:$0xff]
        %v885 = vld [vmem:[%s1 + $0x18] sm:$0xff]
        %v886 = vld [vmem:[#allocation5] sm:$0x1]
        %v888 = vperm.slane %v886, 0
        %vm890 = vcmask 261120
        %v892 = vsel %vm890, %v874, 0
        %v895 = vsel %vm890, %v875, 0
        %v898 = vsel %vm890, %v876, 0
        %v901 = vsel %vm890, %v877, 0
        %v904 = vsel %vm890, %v878, 0
        %v907 = vsel %vm890, %v879, 0
        %v910 = vsel %vm890, %v880, 0
        %v913 = vsel %vm890, %v881, 0
        %915 = vmatpush.msra.mxu0 0.0
        %916 = vmatpush.msra.mxu0 0.0
        %917 = vmatpush.msra.mxu0 0.0
        %918 = vmatpush.msra.mxu0 0.0
        %919 = vmatpush.msra.mxu0 0.0
        %920 = vmatpush.msra.mxu0 0.0
        %921 = vmatpush.msra.mxu0 0.0
        %922 = vmatpush.msra.mxu0 0.0
        %923 = vmatpush.msra.mxu0 0.0
        %924 = vmatpush.msra.mxu0 0.0
        %925 = vmatpush.msra.mxu0 0.0
        %926 = vmatpush.msra.mxu0 0.0
        %927 = vmatpush.msra.mxu0 %v885
        %928 = vmatpush.msra.mxu0 %v884
        %929 = vmatpush.msra.mxu0 %v883
        %930 = vmatpush.msra.mxu0 %v882
        %931 = vmatmul.f32.gmra.mxu0 %v892
        %v932 = vpop.f32.mrf.mxu0
        %v933 = vadd.f32 %v888, %v932
        %934 = vmatmul.f32.gmra.mxu0 %v895
        %v935 = vpop.f32.mrf.mxu0
        %v936 = vadd.f32 %v888, %v935
        %937 = vmatmul.f32.gmra.mxu0 %v898
        %v938 = vpop.f32.mrf.mxu0
        %v939 = vadd.f32 %v888, %v938
        %940 = vmatmul.f32.gmra.mxu0 %v901
        %v941 = vpop.f32.mrf.mxu0
        %v942 = vadd.f32 %v888, %v941
        %943 = vmatmul.f32.gmra.mxu0 %v904
        %v944 = vpop.f32.mrf.mxu0
        %v945 = vadd.f32 %v888, %v944
        %946 = vmatmul.f32.gmra.mxu0 %v907
        %v947 = vpop.f32.mrf.mxu0
        %v948 = vadd.f32 %v888, %v947
        %949 = vmatmul.f32.gmra.mxu0 %v910
        %v950 = vpop.f32.mrf.mxu0
        %v951 = vadd.f32 %v888, %v950
        %952 = vmatmul.f32.gmra.mxu0 %v913
        %v953 = vpop.f32.mrf.mxu0
        %v954 = vadd.f32 %v888, %v953
        %955 = vdwg.mxu0
        %v956 = vld [vmem:[#allocation2] sm:$0xff]
        %v957 = vld [vmem:[#allocation2 + $0x8] sm:$0xff]
        %v958 = vld [vmem:[#allocation2 + $0x10] sm:$0xff]
        %v959 = vld [vmem:[#allocation2 + $0x18] sm:$0xff]
        %v960 = vld [vmem:[#allocation2 + $0x20] sm:$0xff]
        %v961 = vld [vmem:[#allocation2 + $0x28] sm:$0xff]
        %v962 = vld [vmem:[#allocation2 + $0x30] sm:$0xff]
        %v963 = vld [vmem:[#allocation2 + $0x38] sm:$0xff]
        %v964 = vld [vmem:[#allocation2 + $0x40] sm:$0xff]
        %v965 = vld [vmem:[#allocation2 + $0x48] sm:$0xff]
        %v966 = vld [vmem:[#allocation2 + $0x50] sm:$0xff]
        %v967 = vld [vmem:[#allocation2 + $0x58] sm:$0xff]
        %v968 = vld [vmem:[#allocation2 + $0x60] sm:$0xff]
        %v969 = vld [vmem:[#allocation2 + $0x68] sm:$0xff]
        %v970 = vld [vmem:[#allocation2 + $0x70] sm:$0xff]
        %v971 = vld [vmem:[#allocation2 + $0x78] sm:$0xff]
        %v972 = vld [vmem:[#allocation2 + $0x80] sm:$0xff]
        %v973 = vld [vmem:[#allocation2 + $0x88] sm:$0xff]
        %v974 = vld [vmem:[#allocation2 + $0x90] sm:$0xff]
        %v975 = vld [vmem:[#allocation2 + $0x98] sm:$0xff]
        %v976 = vld [vmem:[#allocation2 + $0xa0] sm:$0xff]
        %v977 = vld [vmem:[#allocation2 + $0xa8] sm:$0xff]
        %v978 = vld [vmem:[#allocation2 + $0xb0] sm:$0xff]
        %v979 = vld [vmem:[#allocation2 + $0xb8] sm:$0xff]
        %v980 = vld [vmem:[#allocation2 + $0xc0] sm:$0xff]
        %v981 = vld [vmem:[#allocation2 + $0xc8] sm:$0xff]
        %v982 = vld [vmem:[#allocation2 + $0xd0] sm:$0xff]
        %v983 = vld [vmem:[#allocation2 + $0xd8] sm:$0xff]
        %v984 = vld [vmem:[#allocation2 + $0xe0] sm:$0xff]
        %v985 = vld [vmem:[#allocation2 + $0xe8] sm:$0xff]
        %v986 = vld [vmem:[#allocation2 + $0xf0] sm:$0xff]
        %v987 = vld [vmem:[#allocation2 + $0xf8] sm:$0xff]
        %v988 = vld [vmem:[#allocation3] sm:$0xff]
        %v989 = vld [vmem:[#allocation3 + $0x8] sm:$0xff]
        %v990 = vld [vmem:[#allocation3 + $0x10] sm:$0xff]
        %v991 = vld [vmem:[#allocation3 + $0x18] sm:$0xff]
        %v992 = vld [vmem:[#allocation3 + $0x20] sm:$0xff]
        %v993 = vld [vmem:[#allocation3 + $0x28] sm:$0xff]
        %v994 = vld [vmem:[#allocation3 + $0x30] sm:$0xff]
        %v995 = vld [vmem:[#allocation3 + $0x38] sm:$0xff]
        %v996 = vld [vmem:[#allocation3 + $0x40] sm:$0xff]
        %v997 = vld [vmem:[#allocation3 + $0x48] sm:$0xff]
        %v998 = vld [vmem:[#allocation3 + $0x50] sm:$0xff]
        %v999 = vld [vmem:[#allocation3 + $0x58] sm:$0xff]
        %v1000 = vld [vmem:[#allocation3 + $0x60] sm:$0xff]
        %v1001 = vld [vmem:[#allocation3 + $0x68] sm:$0xff]
        %v1002 = vld [vmem:[#allocation3 + $0x70] sm:$0xff]
        %v1003 = vld [vmem:[#allocation3 + $0x78] sm:$0xff]
        %v1004 = vld [vmem:[#allocation3 + $0x80] sm:$0xff]
        %v1005 = vld [vmem:[#allocation3 + $0x88] sm:$0xff]
        %v1006 = vld [vmem:[#allocation3 + $0x90] sm:$0xff]
        %v1007 = vld [vmem:[#allocation3 + $0x98] sm:$0xff]
        %v1008 = vld [vmem:[#allocation3 + $0xa0] sm:$0xff]
        %v1009 = vld [vmem:[#allocation3 + $0xa8] sm:$0xff]
        %v1010 = vld [vmem:[#allocation3 + $0xb0] sm:$0xff]
        %v1011 = vld [vmem:[#allocation3 + $0xb8] sm:$0xff]
        %v1012 = vld [vmem:[#allocation3 + $0xc0] sm:$0xff]
        %v1013 = vld [vmem:[#allocation3 + $0xc8] sm:$0xff]
        %v1014 = vld [vmem:[#allocation3 + $0xd0] sm:$0xff]
        %v1015 = vld [vmem:[#allocation3 + $0xd8] sm:$0xff]
        %v1016 = vld [vmem:[#allocation3 + $0xe0] sm:$0xff]
        %v1017 = vld [vmem:[#allocation3 + $0xe8] sm:$0xff]
        %v1018 = vld [vmem:[#allocation3 + $0xf0] sm:$0xff]
        %v1019 = vld [vmem:[#allocation3 + $0xf8] sm:$0xff]
        %s1020 = sld [smem:[#allocation4]]
        %vm1021 = vcmask 31744
        %v1023 = vsel %vm1021, %v933, 0
        %v1026 = vsel %vm1021, %v936, 0
        %v1029 = vsel %vm1021, %v939, 0
        %v1032 = vsel %vm1021, %v942, 0
        %v1035 = vsel %vm1021, %v945, 0
        %v1038 = vsel %vm1021, %v948, 0
        %v1041 = vsel %vm1021, %v951, 0
        %v1044 = vsel %vm1021, %v954, 0
        %v1047 = vsel %vm1021, %v956, 0
        %v1050 = vsel %vm1021, %v957, 0
        %v1053 = vsel %vm1021, %v958, 0
        %v1056 = vsel %vm1021, %v959, 0
        %v1059 = vsel %vm1021, %v960, 0
        %v1062 = vsel %vm1021, %v961, 0
        %v1065 = vsel %vm1021, %v962, 0
        %v1068 = vsel %vm1021, %v963, 0
        %v1071 = vsel %vm1021, %v964, 0
        %v1074 = vsel %vm1021, %v965, 0
        %v1077 = vsel %vm1021, %v966, 0
        %v1080 = vsel %vm1021, %v967, 0
        %v1083 = vsel %vm1021, %v968, 0
        %v1086 = vsel %vm1021, %v969, 0
        %v1089 = vsel %vm1021, %v970, 0
        %v1092 = vsel %vm1021, %v971, 0
        %v1095 = vsel %vm1021, %v972, 0
        %v1098 = vsel %vm1021, %v973, 0
        %v1101 = vsel %vm1021, %v974, 0
        %v1104 = vsel %vm1021, %v975, 0
        %v1107 = vsel %vm1021, %v976, 0
        %v1110 = vsel %vm1021, %v977, 0
        %v1113 = vsel %vm1021, %v978, 0
        %v1116 = vsel %vm1021, %v979, 0
        %v1119 = vsel %vm1021, %v980, 0
        %v1122 = vsel %vm1021, %v981, 0
        %v1125 = vsel %vm1021, %v982, 0
        %v1128 = vsel %vm1021, %v983, 0
        %v1131 = vsel %vm1021, %v984, 0
        %v1134 = vsel %vm1021, %v985, 0
        %v1137 = vsel %vm1021, %v986, 0
        %v1140 = vsel %vm1021, %v987, 0
        %1142 = vmatpush.xpose.msra.mxu0 %v1092
        %1143 = vmatpush.xpose.msra.mxu0 %v1089
        %1144 = vmatpush.xpose.msra.mxu0 %v1086
        %1145 = vmatpush.xpose.msra.mxu0 %v1083
        %1146 = vmatpush.xpose.msra.mxu0 %v1080
        %1147 = vmatpush.xpose.msra.mxu0 %v1077
        %1148 = vmatpush.xpose.msra.mxu0 %v1074
        %1149 = vmatpush.xpose.msra.mxu0 %v1071
        %1150 = vmatpush.xpose.msra.mxu0 %v1068
        %1151 = vmatpush.xpose.msra.mxu0 %v1065
        %1152 = vmatpush.xpose.msra.mxu0 %v1062
        %1153 = vmatpush.xpose.msra.mxu0 %v1059
        %1154 = vmatpush.xpose.msra.mxu0 %v1056
        %1155 = vmatpush.xpose.msra.mxu0 %v1053
        %1156 = vmatpush.xpose.msra.mxu0 %v1050
        %1157 = vmatpush.xpose.msra.mxu0 %v1047
        %1158 = vmatmul.f32.gmra.mxu0 %v1023
        %v1159 = vpop.f32.mrf.mxu0
        %v1160 = vadd.f32 0.0, %v1159
        %1161 = vmatmul.f32.gmra.mxu0 %v1026
        %v1162 = vpop.f32.mrf.mxu0
        %v1163 = vadd.f32 0.0, %v1162
        %1164 = vmatmul.f32.gmra.mxu0 %v1029
        %v1165 = vpop.f32.mrf.mxu0
        %v1166 = vadd.f32 0.0, %v1165
        %1167 = vmatmul.f32.gmra.mxu0 %v1032
        %v1168 = vpop.f32.mrf.mxu0
        %v1169 = vadd.f32 0.0, %v1168
        %1170 = vmatmul.f32.gmra.mxu0 %v1035
        %v1171 = vpop.f32.mrf.mxu0
        %v1172 = vadd.f32 0.0, %v1171
        %1173 = vmatmul.f32.gmra.mxu0 %v1038
        %v1174 = vpop.f32.mrf.mxu0
        %v1175 = vadd.f32 0.0, %v1174
        %1176 = vmatmul.f32.gmra.mxu0 %v1041
        %v1177 = vpop.f32.mrf.mxu0
        %v1178 = vadd.f32 0.0, %v1177
        %1179 = vmatmul.f32.gmra.mxu0 %v1044
        %v1180 = vpop.f32.mrf.mxu0
        %v1181 = vadd.f32 0.0, %v1180
        %1182 = vdwg.mxu0
        %1183 = vmatpush.xpose.msra.mxu0 %v1140
        %1184 = vmatpush.xpose.msra.mxu0 %v1137
        %1185 = vmatpush.xpose.msra.mxu0 %v1134
        %1186 = vmatpush.xpose.msra.mxu0 %v1131
        %1187 = vmatpush.xpose.msra.mxu0 %v1128
        %1188 = vmatpush.xpose.msra.mxu0 %v1125
        %1189 = vmatpush.xpose.msra.mxu0 %v1122
        %1190 = vmatpush.xpose.msra.mxu0 %v1119
        %1191 = vmatpush.xpose.msra.mxu0 %v1116
        %1192 = vmatpush.xpose.msra.mxu0 %v1113
        %1193 = vmatpush.xpose.msra.mxu0 %v1110
        %1194 = vmatpush.xpose.msra.mxu0 %v1107
        %1195 = vmatpush.xpose.msra.mxu0 %v1104
        %1196 = vmatpush.xpose.msra.mxu0 %v1101
        %1197 = vmatpush.xpose.msra.mxu0 %v1098
        %1198 = vmatpush.xpose.msra.mxu0 %v1095
        %1199 = vmatmul.f32.gmra.mxu0 %v1023
        %v1200 = vpop.f32.mrf.mxu0
        %v1201 = vadd.f32 0.0, %v1200
        %1202 = vmatmul.f32.gmra.mxu0 %v1026
        %v1203 = vpop.f32.mrf.mxu0
        %v1204 = vadd.f32 0.0, %v1203
        %1205 = vmatmul.f32.gmra.mxu0 %v1029
        %v1206 = vpop.f32.mrf.mxu0
        %v1207 = vadd.f32 0.0, %v1206
        %1208 = vmatmul.f32.gmra.mxu0 %v1032
        %v1209 = vpop.f32.mrf.mxu0
        %v1210 = vadd.f32 0.0, %v1209
        %1211 = vmatmul.f32.gmra.mxu0 %v1035
        %v1212 = vpop.f32.mrf.mxu0
        %v1213 = vadd.f32 0.0, %v1212
        %1214 = vmatmul.f32.gmra.mxu0 %v1038
        %v1215 = vpop.f32.mrf.mxu0
        %v1216 = vadd.f32 0.0, %v1215
        %1217 = vmatmul.f32.gmra.mxu0 %v1041
        %v1218 = vpop.f32.mrf.mxu0
        %v1219 = vadd.f32 0.0, %v1218
        %1220 = vmatmul.f32.gmra.mxu0 %v1044
        %v1221 = vpop.f32.mrf.mxu0
        %v1222 = vadd.f32 0.0, %v1221
        %1223 = vdwg.mxu0
        %v1224 = vmax.f32 %v1160, %v1201
        %1225 = vmax.xlane.f32.xlu0 %v1224
        %v1226 = vpop.xlane.xlu0 %1225
        %v1227 = vmax.f32 %v1163, %v1204
        %1228 = vmax.xlane.f32.xlu0 %v1227
        %v1229 = vpop.xlane.xlu0 %1228
        %v1230 = vmax.f32 %v1166, %v1207
        %1231 = vmax.xlane.f32.xlu0 %v1230
        %v1232 = vpop.xlane.xlu0 %1231
        %v1233 = vmax.f32 %v1169, %v1210
        %1234 = vmax.xlane.f32.xlu0 %v1233
        %v1235 = vpop.xlane.xlu0 %1234
        %v1236 = vmax.f32 %v1172, %v1213
        %1237 = vmax.xlane.f32.xlu0 %v1236
        %v1238 = vpop.xlane.xlu0 %1237
        %v1239 = vmax.f32 %v1175, %v1216
        %1240 = vmax.xlane.f32.xlu0 %v1239
        %v1241 = vpop.xlane.xlu0 %1240
        %v1242 = vmax.f32 %v1178, %v1219
        %1243 = vmax.xlane.f32.xlu0 %v1242
        %v1244 = vpop.xlane.xlu0 %1243
        %v1245 = vmax.f32 %v1181, %v1222
        %1246 = vmax.xlane.f32.xlu0 %v1245
        %v1247 = vpop.xlane.xlu0 %1246
        %v1248 = vsub.f32 %v1160, %v1226
        %v1249 = vsub.f32 %v1201, %v1226
        %v1250 = vsub.f32 %v1163, %v1229
        %v1251 = vsub.f32 %v1204, %v1229
        %v1252 = vsub.f32 %v1166, %v1232
        %v1253 = vsub.f32 %v1207, %v1232
        %v1254 = vsub.f32 %v1169, %v1235
        %v1255 = vsub.f32 %v1210, %v1235
        %v1256 = vsub.f32 %v1172, %v1238
        %v1257 = vsub.f32 %v1213, %v1238
        %v1258 = vsub.f32 %v1175, %v1241
        %v1259 = vsub.f32 %v1216, %v1241
        %v1260 = vsub.f32 %v1178, %v1244
        %v1261 = vsub.f32 %v1219, %v1244
        %v1262 = vsub.f32 %v1181, %v1247
        %v1263 = vsub.f32 %v1222, %v1247
        %v1264 = vmul.f32 %v1248, 1.442695
        %v1265 = vpow.pop %v1264
        %v1266 = vmul.f32 %v1249, 1.442695
        %v1267 = vpow.pop %v1266
        %v1268 = vmul.f32 %v1250, 1.442695
        %v1269 = vpow.pop %v1268
        %v1270 = vmul.f32 %v1251, 1.442695
        %v1271 = vpow.pop %v1270
        %v1272 = vmul.f32 %v1252, 1.442695
        %v1273 = vpow.pop %v1272
        %v1274 = vmul.f32 %v1253, 1.442695
        %v1275 = vpow.pop %v1274
        %v1276 = vmul.f32 %v1254, 1.442695
        %v1277 = vpow.pop %v1276
        %v1278 = vmul.f32 %v1255, 1.442695
        %v1279 = vpow.pop %v1278
        %v1280 = vmul.f32 %v1256, 1.442695
        %v1281 = vpow.pop %v1280
        %v1282 = vmul.f32 %v1257, 1.442695
        %v1283 = vpow.pop %v1282
        %v1284 = vmul.f32 %v1258, 1.442695
        %v1285 = vpow.pop %v1284
        %v1286 = vmul.f32 %v1259, 1.442695
        %v1287 = vpow.pop %v1286
        %v1288 = vmul.f32 %v1260, 1.442695
        %v1289 = vpow.pop %v1288
        %v1290 = vmul.f32 %v1261, 1.442695
        %v1291 = vpow.pop %v1290
        %v1292 = vmul.f32 %v1262, 1.442695
        %v1293 = vpow.pop %v1292
        %v1294 = vmul.f32 %v1263, 1.442695
        %v1295 = vpow.pop %v1294
        %v1296 = vadd.f32 %v1265, %v1267
        %1297 = vadd.xlane.f32.xlu0 %v1296
        %v1298 = vpop.xlane.xlu0 %1297
        %v1299 = vadd.f32 %v1269, %v1271
        %1300 = vadd.xlane.f32.xlu0 %v1299
        %v1301 = vpop.xlane.xlu0 %1300
        %v1302 = vadd.f32 %v1273, %v1275
        %1303 = vadd.xlane.f32.xlu0 %v1302
        %v1304 = vpop.xlane.xlu0 %1303
        %v1305 = vadd.f32 %v1277, %v1279
        %1306 = vadd.xlane.f32.xlu0 %v1305
        %v1307 = vpop.xlane.xlu0 %1306
        %v1308 = vadd.f32 %v1281, %v1283
        %1309 = vadd.xlane.f32.xlu0 %v1308
        %v1310 = vpop.xlane.xlu0 %1309
        %v1311 = vadd.f32 %v1285, %v1287
        %1312 = vadd.xlane.f32.xlu0 %v1311
        %v1313 = vpop.xlane.xlu0 %1312
        %v1314 = vadd.f32 %v1289, %v1291
        %1315 = vadd.xlane.f32.xlu0 %v1314
        %v1316 = vpop.xlane.xlu0 %1315
        %v1317 = vadd.f32 %v1293, %v1295
        %1318 = vadd.xlane.f32.xlu0 %v1317
        %v1319 = vpop.xlane.xlu0 %1318
        %v1320 = vrcp.pop %v1298
        %v1321 = vrcp.pop %v1301
        %v1322 = vrcp.pop %v1304
        %v1323 = vrcp.pop %v1307
        %v1324 = vrcp.pop %v1310
        %v1325 = vrcp.pop %v1313
        %v1326 = vrcp.pop %v1316
        %v1327 = vrcp.pop %v1319
        %v1328 = vmul.f32 %v1265, %v1320
        %v1329 = vmul.f32 %v1267, %v1320
        %v1330 = vmul.f32 %v1269, %v1321
        %v1331 = vmul.f32 %v1271, %v1321
        %v1332 = vmul.f32 %v1273, %v1322
        %v1333 = vmul.f32 %v1275, %v1322
        %v1334 = vmul.f32 %v1277, %v1323
        %v1335 = vmul.f32 %v1279, %v1323
        %v1336 = vmul.f32 %v1281, %v1324
        %v1337 = vmul.f32 %v1283, %v1324
        %v1338 = vmul.f32 %v1285, %v1325
        %v1339 = vmul.f32 %v1287, %v1325
        %v1340 = vmul.f32 %v1289, %v1326
        %v1341 = vmul.f32 %v1291, %v1326
        %v1342 = vmul.f32 %v1293, %v1327
        %v1343 = vmul.f32 %v1295, %v1327
        %1344 = vmatpush.msra.mxu0 %v1003
        %1345 = vmatpush.msra.mxu0 %v1002
        %1346 = vmatpush.msra.mxu0 %v1001
        %1347 = vmatpush.msra.mxu0 %v1000
        %1348 = vmatpush.msra.mxu0 %v999
        %1349 = vmatpush.msra.mxu0 %v998
        %1350 = vmatpush.msra.mxu0 %v997
        %1351 = vmatpush.msra.mxu0 %v996
        %1352 = vmatpush.msra.mxu0 %v995
        %1353 = vmatpush.msra.mxu0 %v994
        %1354 = vmatpush.msra.mxu0 %v993
        %1355 = vmatpush.msra.mxu0 %v992
        %1356 = vmatpush.msra.mxu0 %v991
        %1357 = vmatpush.msra.mxu0 %v990
        %1358 = vmatpush.msra.mxu0 %v989
        %1359 = vmatpush.msra.mxu0 %v988
        %1360 = vmatmul.f32.gmra.mxu0 %v1328
        %v1361 = vpop.f32.mrf.mxu0
        %v1362 = vadd.f32 0.0, %v1361
        %1363 = vmatmul.f32.gmra.mxu0 %v1330
        %v1364 = vpop.f32.mrf.mxu0
        %v1365 = vadd.f32 0.0, %v1364
        %1366 = vmatmul.f32.gmra.mxu0 %v1332
        %v1367 = vpop.f32.mrf.mxu0
        %v1368 = vadd.f32 0.0, %v1367
        %1369 = vmatmul.f32.gmra.mxu0 %v1334
        %v1370 = vpop.f32.mrf.mxu0
        %v1371 = vadd.f32 0.0, %v1370
        %1372 = vmatmul.f32.gmra.mxu0 %v1336
        %v1373 = vpop.f32.mrf.mxu0
        %v1374 = vadd.f32 0.0, %v1373
        %1375 = vmatmul.f32.gmra.mxu0 %v1338
        %v1376 = vpop.f32.mrf.mxu0
        %v1377 = vadd.f32 0.0, %v1376
        %1378 = vmatmul.f32.gmra.mxu0 %v1340
        %v1379 = vpop.f32.mrf.mxu0
        %v1380 = vadd.f32 0.0, %v1379
        %1381 = vmatmul.f32.gmra.mxu0 %v1342
        %v1382 = vpop.f32.mrf.mxu0
        %v1383 = vadd.f32 0.0, %v1382
        %1384 = vdwg.mxu0
        %1385 = vmatpush.msra.mxu0 %v1019
        %1386 = vmatpush.msra.mxu0 %v1018
        %1387 = vmatpush.msra.mxu0 %v1017
        %1388 = vmatpush.msra.mxu0 %v1016
        %1389 = vmatpush.msra.mxu0 %v1015
        %1390 = vmatpush.msra.mxu0 %v1014
        %1391 = vmatpush.msra.mxu0 %v1013
        %1392 = vmatpush.msra.mxu0 %v1012
        %1393 = vmatpush.msra.mxu0 %v1011
        %1394 = vmatpush.msra.mxu0 %v1010
        %1395 = vmatpush.msra.mxu0 %v1009
        %1396 = vmatpush.msra.mxu0 %v1008
        %1397 = vmatpush.msra.mxu0 %v1007
        %1398 = vmatpush.msra.mxu0 %v1006
        %1399 = vmatpush.msra.mxu0 %v1005
        %1400 = vmatpush.msra.mxu0 %v1004
        %1401 = vmatmul.f32.gmra.mxu0 %v1329
        %v1402 = vpop.f32.mrf.mxu0
        %v1403 = vadd.f32 %v1362, %v1402
        %1404 = vmatmul.f32.gmra.mxu0 %v1331
        %v1405 = vpop.f32.mrf.mxu0
        %v1406 = vadd.f32 %v1365, %v1405
        %1407 = vmatmul.f32.gmra.mxu0 %v1333
        %v1408 = vpop.f32.mrf.mxu0
        %v1409 = vadd.f32 %v1368, %v1408
        %1410 = vmatmul.f32.gmra.mxu0 %v1335
        %v1411 = vpop.f32.mrf.mxu0
        %v1412 = vadd.f32 %v1371, %v1411
        %1413 = vmatmul.f32.gmra.mxu0 %v1337
        %v1414 = vpop.f32.mrf.mxu0
        %v1415 = vadd.f32 %v1374, %v1414
        %1416 = vmatmul.f32.gmra.mxu0 %v1339
        %v1417 = vpop.f32.mrf.mxu0
        %v1418 = vadd.f32 %v1377, %v1417
        %1419 = vmatmul.f32.gmra.mxu0 %v1341
        %v1420 = vpop.f32.mrf.mxu0
        %v1421 = vadd.f32 %v1380, %v1420
        %1422 = vmatmul.f32.gmra.mxu0 %v1343
        %v1423 = vpop.f32.mrf.mxu0
        %v1424 = vadd.f32 %v1383, %v1423
        %1425 = vdwg.mxu0
        %1426 = vrot.lane.b32.xlu0 %v933, 124
        %v1427 = vpop.permute.xlu0 %1426
        %1428 = vrot.lane.b32.xlu0 %v936, 124
        %v1429 = vpop.permute.xlu0 %1428
        %1430 = vrot.lane.b32.xlu0 %v939, 124
        %v1431 = vpop.permute.xlu0 %1430
        %1432 = vrot.lane.b32.xlu0 %v942, 124
        %v1433 = vpop.permute.xlu0 %1432
        %1434 = vrot.lane.b32.xlu0 %v945, 124
        %v1435 = vpop.permute.xlu0 %1434
        %1436 = vrot.lane.b32.xlu0 %v948, 124
        %v1437 = vpop.permute.xlu0 %1436
        %1438 = vrot.lane.b32.xlu0 %v951, 124
        %v1439 = vpop.permute.xlu0 %1438
        %1440 = vrot.lane.b32.xlu0 %v954, 124
        %v1441 = vpop.permute.xlu0 %1440
        %1442 = vrot.lane.b32.xlu0 %v956, 124
        %v1443 = vpop.permute.xlu0 %1442
        %1444 = vrot.lane.b32.xlu0 %v957, 124
        %v1445 = vpop.permute.xlu0 %1444
        %1446 = vrot.lane.b32.xlu0 %v958, 124
        %v1447 = vpop.permute.xlu0 %1446
        %1448 = vrot.lane.b32.xlu0 %v959, 124
        %v1449 = vpop.permute.xlu0 %1448
        %1450 = vrot.lane.b32.xlu0 %v960, 124
        %v1451 = vpop.permute.xlu0 %1450
        %1452 = vrot.lane.b32.xlu0 %v961, 124
        %v1453 = vpop.permute.xlu0 %1452
        %1454 = vrot.lane.b32.xlu0 %v962, 124
        %v1455 = vpop.permute.xlu0 %1454
        %1456 = vrot.lane.b32.xlu0 %v963, 124
        %v1457 = vpop.permute.xlu0 %1456
        %1458 = vrot.lane.b32.xlu0 %v964, 124
        %v1459 = vpop.permute.xlu0 %1458
        %1460 = vrot.lane.b32.xlu0 %v965, 124
        %v1461 = vpop.permute.xlu0 %1460
        %1462 = vrot.lane.b32.xlu0 %v966, 124
        %v1463 = vpop.permute.xlu0 %1462
        %1464 = vrot.lane.b32.xlu0 %v967, 124
        %v1465 = vpop.permute.xlu0 %1464
        %1466 = vrot.lane.b32.xlu0 %v968, 124
        %v1467 = vpop.permute.xlu0 %1466
        %1468 = vrot.lane.b32.xlu0 %v969, 124
        %v1469 = vpop.permute.xlu0 %1468
        %1470 = vrot.lane.b32.xlu0 %v970, 124
        %v1471 = vpop.permute.xlu0 %1470
        %1472 = vrot.lane.b32.xlu0 %v971, 124
        %v1473 = vpop.permute.xlu0 %1472
        %1474 = vrot.lane.b32.xlu0 %v972, 124
        %v1475 = vpop.permute.xlu0 %1474
        %1476 = vrot.lane.b32.xlu0 %v973, 124
        %v1477 = vpop.permute.xlu0 %1476
        %1478 = vrot.lane.b32.xlu0 %v974, 124
        %v1479 = vpop.permute.xlu0 %1478
        %1480 = vrot.lane.b32.xlu0 %v975, 124
        %v1481 = vpop.permute.xlu0 %1480
        %1482 = vrot.lane.b32.xlu0 %v976, 124
        %v1483 = vpop.permute.xlu0 %1482
        %1484 = vrot.lane.b32.xlu0 %v977, 124
        %v1485 = vpop.permute.xlu0 %1484
        %1486 = vrot.lane.b32.xlu0 %v978, 124
        %v1487 = vpop.permute.xlu0 %1486
        %1488 = vrot.lane.b32.xlu0 %v979, 124
        %v1489 = vpop.permute.xlu0 %1488
        %1490 = vrot.lane.b32.xlu0 %v980, 124
        %v1491 = vpop.permute.xlu0 %1490
        %1492 = vrot.lane.b32.xlu0 %v981, 124
        %v1493 = vpop.permute.xlu0 %1492
        %1494 = vrot.lane.b32.xlu0 %v982, 124
        %v1495 = vpop.permute.xlu0 %1494
        %1496 = vrot.lane.b32.xlu0 %v983, 124
        %v1497 = vpop.permute.xlu0 %1496
        %1498 = vrot.lane.b32.xlu0 %v984, 124
        %v1499 = vpop.permute.xlu0 %1498
        %1500 = vrot.lane.b32.xlu0 %v985, 124
        %v1501 = vpop.permute.xlu0 %1500
        %1502 = vrot.lane.b32.xlu0 %v986, 124
        %v1503 = vpop.permute.xlu0 %1502
        %1504 = vrot.lane.b32.xlu0 %v987, 124
        %v1505 = vpop.permute.xlu0 %1504
        %v1506 = vsel %vm1021, %v1427, 0
        %v1508 = vsel %vm1021, %v1429, 0
        %v1510 = vsel %vm1021, %v1431, 0
        %v1512 = vsel %vm1021, %v1433, 0
        %v1514 = vsel %vm1021, %v1435, 0
        %v1516 = vsel %vm1021, %v1437, 0
        %v1518 = vsel %vm1021, %v1439, 0
        %v1520 = vsel %vm1021, %v1441, 0
        %v1522 = vsel %vm1021, %v1443, 0
        %v1524 = vsel %vm1021, %v1445, 0
        %v1526 = vsel %vm1021, %v1447, 0
        %v1528 = vsel %vm1021, %v1449, 0
        %v1530 = vsel %vm1021, %v1451, 0
        %v1532 = vsel %vm1021, %v1453, 0
        %v1534 = vsel %vm1021, %v1455, 0
        %v1536 = vsel %vm1021, %v1457, 0
        %v1538 = vsel %vm1021, %v1459, 0
        %v1540 = vsel %vm1021, %v1461, 0
        %v1542 = vsel %vm1021, %v1463, 0
        %v1544 = vsel %vm1021, %v1465, 0
        %v1546 = vsel %vm1021, %v1467, 0
        %v1548 = vsel %vm1021, %v1469, 0
        %v1550 = vsel %vm1021, %v1471, 0
        %v1552 = vsel %vm1021, %v1473, 0
        %v1554 = vsel %vm1021, %v1475, 0
        %v1556 = vsel %vm1021, %v1477, 0
        %v1558 = vsel %vm1021, %v1479, 0
        %v1560 = vsel %vm1021, %v1481, 0
        %v1562 = vsel %vm1021, %v1483, 0
        %v1564 = vsel %vm1021, %v1485, 0
        %v1566 = vsel %vm1021, %v1487, 0
        %v1568 = vsel %vm1021, %v1489, 0
        %v1570 = vsel %vm1021, %v1491, 0
        %v1572 = vsel %vm1021, %v1493, 0
        %v1574 = vsel %vm1021, %v1495, 0
        %v1576 = vsel %vm1021, %v1497, 0
        %v1578 = vsel %vm1021, %v1499, 0
        %v1580 = vsel %vm1021, %v1501, 0
        %v1582 = vsel %vm1021, %v1503, 0
        %v1584 = vsel %vm1021, %v1505, 0
        %1586 = vmatpush.xpose.msra.mxu0 %v1552
        %1587 = vmatpush.xpose.msra.mxu0 %v1550
        %1588 = vmatpush.xpose.msra.mxu0 %v1548
        %1589 = vmatpush.xpose.msra.mxu0 %v1546
        %1590 = vmatpush.xpose.msra.mxu0 %v1544
        %1591 = vmatpush.xpose.msra.mxu0 %v1542
        %1592 = vmatpush.xpose.msra.mxu0 %v1540
        %1593 = vmatpush.xpose.msra.mxu0 %v1538
        %1594 = vmatpush.xpose.msra.mxu0 %v1536
        %1595 = vmatpush.xpose.msra.mxu0 %v1534
        %1596 = vmatpush.xpose.msra.mxu0 %v1532
        %1597 = vmatpush.xpose.msra.mxu0 %v1530
        %1598 = vmatpush.xpose.msra.mxu0 %v1528
        %1599 = vmatpush.xpose.msra.mxu0 %v1526
        %1600 = vmatpush.xpose.msra.mxu0 %v1524
        %1601 = vmatpush.xpose.msra.mxu0 %v1522
        %1602 = vmatmul.f32.gmra.mxu0 %v1506
        %v1603 = vpop.f32.mrf.mxu0
        %v1604 = vadd.f32 0.0, %v1603
        %1605 = vmatmul.f32.gmra.mxu0 %v1508
        %v1606 = vpop.f32.mrf.mxu0
        %v1607 = vadd.f32 0.0, %v1606
        %1608 = vmatmul.f32.gmra.mxu0 %v1510
        %v1609 = vpop.f32.mrf.mxu0
        %v1610 = vadd.f32 0.0, %v1609
        %1611 = vmatmul.f32.gmra.mxu0 %v1512
        %v1612 = vpop.f32.mrf.mxu0
        %v1613 = vadd.f32 0.0, %v1612
        %1614 = vmatmul.f32.gmra.mxu0 %v1514
        %v1615 = vpop.f32.mrf.mxu0
        %v1616 = vadd.f32 0.0, %v1615
        %1617 = vmatmul.f32.gmra.mxu0 %v1516
        %v1618 = vpop.f32.mrf.mxu0
        %v1619 = vadd.f32 0.0, %v1618
        %1620 = vmatmul.f32.gmra.mxu0 %v1518
        %v1621 = vpop.f32.mrf.mxu0
        %v1622 = vadd.f32 0.0, %v1621
        %1623 = vmatmul.f32.gmra.mxu0 %v1520
        %v1624 = vpop.f32.mrf.mxu0
        %v1625 = vadd.f32 0.0, %v1624
        %1626 = vdwg.mxu0
        %1627 = vmatpush.xpose.msra.mxu0 %v1584
        %1628 = vmatpush.xpose.msra.mxu0 %v1582
        %1629 = vmatpush.xpose.msra.mxu0 %v1580
        %1630 = vmatpush.xpose.msra.mxu0 %v1578
        %1631 = vmatpush.xpose.msra.mxu0 %v1576
        %1632 = vmatpush.xpose.msra.mxu0 %v1574
        %1633 = vmatpush.xpose.msra.mxu0 %v1572
        %1634 = vmatpush.xpose.msra.mxu0 %v1570
        %1635 = vmatpush.xpose.msra.mxu0 %v1568
        %1636 = vmatpush.xpose.msra.mxu0 %v1566
        %1637 = vmatpush.xpose.msra.mxu0 %v1564
        %1638 = vmatpush.xpose.msra.mxu0 %v1562
        %1639 = vmatpush.xpose.msra.mxu0 %v1560
        %1640 = vmatpush.xpose.msra.mxu0 %v1558
        %1641 = vmatpush.xpose.msra.mxu0 %v1556
        %1642 = vmatpush.xpose.msra.mxu0 %v1554
        %1643 = vmatmul.f32.gmra.mxu0 %v1506
        %v1644 = vpop.f32.mrf.mxu0
        %v1645 = vadd.f32 0.0, %v1644
        %1646 = vmatmul.f32.gmra.mxu0 %v1508
        %v1647 = vpop.f32.mrf.mxu0
        %v1648 = vadd.f32 0.0, %v1647
        %1649 = vmatmul.f32.gmra.mxu0 %v1510
        %v1650 = vpop.f32.mrf.mxu0
        %v1651 = vadd.f32 0.0, %v1650
        %1652 = vmatmul.f32.gmra.mxu0 %v1512
        %v1653 = vpop.f32.mrf.mxu0
        %v1654 = vadd.f32 0.0, %v1653
        %1655 = vmatmul.f32.gmra.mxu0 %v1514
        %v1656 = vpop.f32.mrf.mxu0
        %v1657 = vadd.f32 0.0, %v1656
        %1658 = vmatmul.f32.gmra.mxu0 %v1516
        %v1659 = vpop.f32.mrf.mxu0
        %v1660 = vadd.f32 0.0, %v1659
        %1661 = vmatmul.f32.gmra.mxu0 %v1518
        %v1662 = vpop.f32.mrf.mxu0
        %v1663 = vadd.f32 0.0, %v1662
        %1664 = vmatmul.f32.gmra.mxu0 %v1520
        %v1665 = vpop.f32.mrf.mxu0
        %v1666 = vadd.f32 0.0, %v1665
        %1667 = vdwg.mxu0
        %v1668 = vmax.f32 %v1604, %v1645
        %1669 = vmax.xlane.f32.xlu0 %v1668
        %v1670 = vpop.xlane.xlu0 %1669
        %v1671 = vmax.f32 %v1607, %v1648
        %1672 = vmax.xlane.f32.xlu0 %v1671
        %v1673 = vpop.xlane.xlu0 %1672
        %v1674 = vmax.f32 %v1610, %v1651
        %1675 = vmax.xlane.f32.xlu0 %v1674
        %v1676 = vpop.xlane.xlu0 %1675
        %v1677 = vmax.f32 %v1613, %v1654
        %1678 = vmax.xlane.f32.xlu0 %v1677
        %v1679 = vpop.xlane.xlu0 %1678
        %v1680 = vmax.f32 %v1616, %v1657
        %1681 = vmax.xlane.f32.xlu0 %v1680
        %v1682 = vpop.xlane.xlu0 %1681
        %v1683 = vmax.f32 %v1619, %v1660
        %1684 = vmax.xlane.f32.xlu0 %v1683
        %v1685 = vpop.xlane.xlu0 %1684
        %v1686 = vmax.f32 %v1622, %v1663
        %1687 = vmax.xlane.f32.xlu0 %v1686
        %v1688 = vpop.xlane.xlu0 %1687
        %v1689 = vmax.f32 %v1625, %v1666
        %1690 = vmax.xlane.f32.xlu0 %v1689
        %v1691 = vpop.xlane.xlu0 %1690
        %v1692 = vsub.f32 %v1604, %v1670
        %v1693 = vsub.f32 %v1645, %v1670
        %v1694 = vsub.f32 %v1607, %v1673
        %v1695 = vsub.f32 %v1648, %v1673
        %v1696 = vsub.f32 %v1610, %v1676
        %v1697 = vsub.f32 %v1651, %v1676
        %v1698 = vsub.f32 %v1613, %v1679
        %v1699 = vsub.f32 %v1654, %v1679
        %v1700 = vsub.f32 %v1616, %v1682
        %v1701 = vsub.f32 %v1657, %v1682
        %v1702 = vsub.f32 %v1619, %v1685
        %v1703 = vsub.f32 %v1660, %v1685
        %v1704 = vsub.f32 %v1622, %v1688
        %v1705 = vsub.f32 %v1663, %v1688
        %v1706 = vsub.f32 %v1625, %v1691
        %v1707 = vsub.f32 %v1666, %v1691
        %v1708 = vmul.f32 %v1692, 1.442695
        %v1709 = vpow.pop %v1708
        %v1710 = vmul.f32 %v1693, 1.442695
        %v1711 = vpow.pop %v1710
        %v1712 = vmul.f32 %v1694, 1.442695
        %v1713 = vpow.pop %v1712
        %v1714 = vmul.f32 %v1695, 1.442695
        %v1715 = vpow.pop %v1714
        %v1716 = vmul.f32 %v1696, 1.442695
        %v1717 = vpow.pop %v1716
        %v1718 = vmul.f32 %v1697, 1.442695
        %v1719 = vpow.pop %v1718
        %v1720 = vmul.f32 %v1698, 1.442695
        %v1721 = vpow.pop %v1720
        %v1722 = vmul.f32 %v1699, 1.442695
        %v1723 = vpow.pop %v1722
        %v1724 = vmul.f32 %v1700, 1.442695
        %v1725 = vpow.pop %v1724
        %v1726 = vmul.f32 %v1701, 1.442695
        %v1727 = vpow.pop %v1726
        %v1728 = vmul.f32 %v1702, 1.442695
        %v1729 = vpow.pop %v1728
        %v1730 = vmul.f32 %v1703, 1.442695
        %v1731 = vpow.pop %v1730
        %v1732 = vmul.f32 %v1704, 1.442695
        %v1733 = vpow.pop %v1732
        %v1734 = vmul.f32 %v1705, 1.442695
        %v1735 = vpow.pop %v1734
        %v1736 = vmul.f32 %v1706, 1.442695
        %v1737 = vpow.pop %v1736
        %v1738 = vmul.f32 %v1707, 1.442695
        %v1739 = vpow.pop %v1738
        %v1740 = vadd.f32 %v1709, %v1711
        %1741 = vadd.xlane.f32.xlu0 %v1740
        %v1742 = vpop.xlane.xlu0 %1741
        %v1743 = vadd.f32 %v1713, %v1715
        %1744 = vadd.xlane.f32.xlu0 %v1743
        %v1745 = vpop.xlane.xlu0 %1744
        %v1746 = vadd.f32 %v1717, %v1719
        %1747 = vadd.xlane.f32.xlu0 %v1746
        %v1748 = vpop.xlane.xlu0 %1747
        %v1749 = vadd.f32 %v1721, %v1723
        %1750 = vadd.xlane.f32.xlu0 %v1749
        %v1751 = vpop.xlane.xlu0 %1750
        %v1752 = vadd.f32 %v1725, %v1727
        %1753 = vadd.xlane.f32.xlu0 %v1752
        %v1754 = vpop.xlane.xlu0 %1753
        %v1755 = vadd.f32 %v1729, %v1731
        %1756 = vadd.xlane.f32.xlu0 %v1755
        %v1757 = vpop.xlane.xlu0 %1756
        %v1758 = vadd.f32 %v1733, %v1735
        %1759 = vadd.xlane.f32.xlu0 %v1758
        %v1760 = vpop.xlane.xlu0 %1759
        %v1761 = vadd.f32 %v1737, %v1739
        %1762 = vadd.xlane.f32.xlu0 %v1761
        %v1763 = vpop.xlane.xlu0 %1762
        %v1764 = vrcp.pop %v1742
        %v1765 = vrcp.pop %v1745
        %v1766 = vrcp.pop %v1748
        %v1767 = vrcp.pop %v1751
        %v1768 = vrcp.pop %v1754
        %v1769 = vrcp.pop %v1757
        %v1770 = vrcp.pop %v1760
        %v1771 = vrcp.pop %v1763
        %v1772 = vmul.f32 %v1709, %v1764
        %v1773 = vmul.f32 %v1711, %v1764
        %v1774 = vmul.f32 %v1713, %v1765
        %v1775 = vmul.f32 %v1715, %v1765
        %v1776 = vmul.f32 %v1717, %v1766
        %v1777 = vmul.f32 %v1719, %v1766
        %v1778 = vmul.f32 %v1721, %v1767
        %v1779 = vmul.f32 %v1723, %v1767
        %v1780 = vmul.f32 %v1725, %v1768
        %v1781 = vmul.f32 %v1727, %v1768
        %v1782 = vmul.f32 %v1729, %v1769
        %v1783 = vmul.f32 %v1731, %v1769
        %v1784 = vmul.f32 %v1733, %v1770
        %v1785 = vmul.f32 %v1735, %v1770
        %v1786 = vmul.f32 %v1737, %v1771
        %v1787 = vmul.f32 %v1739, %v1771
        %1820 = vrot.lane.b32.xlu0 %v988, 120
        %v1821 = vpop.permute.xlu0 %1820
        %1822 = vrot.lane.b32.xlu0 %v989, 120
        %v1823 = vpop.permute.xlu0 %1822
        %1824 = vrot.lane.b32.xlu0 %v990, 120
        %v1825 = vpop.permute.xlu0 %1824
        %1826 = vrot.lane.b32.xlu0 %v991, 120
        %v1827 = vpop.permute.xlu0 %1826
        %1828 = vrot.lane.b32.xlu0 %v992, 120
        %v1829 = vpop.permute.xlu0 %1828
        %1830 = vrot.lane.b32.xlu0 %v993, 120
        %v1831 = vpop.permute.xlu0 %1830
        %1832 = vrot.lane.b32.xlu0 %v994, 120
        %v1833 = vpop.permute.xlu0 %1832
        %1834 = vrot.lane.b32.xlu0 %v995, 120
        %v1835 = vpop.permute.xlu0 %1834
        %1836 = vrot.lane.b32.xlu0 %v996, 120
        %v1837 = vpop.permute.xlu0 %1836
        %1838 = vrot.lane.b32.xlu0 %v997, 120
        %v1839 = vpop.permute.xlu0 %1838
        %1840 = vrot.lane.b32.xlu0 %v998, 120
        %v1841 = vpop.permute.xlu0 %1840
        %1842 = vrot.lane.b32.xlu0 %v999, 120
        %v1843 = vpop.permute.xlu0 %1842
        %1844 = vrot.lane.b32.xlu0 %v1000, 120
        %v1845 = vpop.permute.xlu0 %1844
        %1846 = vrot.lane.b32.xlu0 %v1001, 120
        %v1847 = vpop.permute.xlu0 %1846
        %1848 = vrot.lane.b32.xlu0 %v1002, 120
        %v1849 = vpop.permute.xlu0 %1848
        %1850 = vrot.lane.b32.xlu0 %v1003, 120
        %v1851 = vpop.permute.xlu0 %1850
        %1852 = vrot.lane.b32.xlu0 %v1004, 120
        %v1853 = vpop.permute.xlu0 %1852
        %1854 = vrot.lane.b32.xlu0 %v1005, 120
        %v1855 = vpop.permute.xlu0 %1854
        %1856 = vrot.lane.b32.xlu0 %v1006, 120
        %v1857 = vpop.permute.xlu0 %1856
        %1858 = vrot.lane.b32.xlu0 %v1007, 120
        %v1859 = vpop.permute.xlu0 %1858
        %1860 = vrot.lane.b32.xlu0 %v1008, 120
        %v1861 = vpop.permute.xlu0 %1860
        %1862 = vrot.lane.b32.xlu0 %v1009, 120
        %v1863 = vpop.permute.xlu0 %1862
        %1864 = vrot.lane.b32.xlu0 %v1010, 120
        %v1865 = vpop.permute.xlu0 %1864
        %1866 = vrot.lane.b32.xlu0 %v1011, 120
        %v1867 = vpop.permute.xlu0 %1866
        %1868 = vrot.lane.b32.xlu0 %v1012, 120
        %v1869 = vpop.permute.xlu0 %1868
        %1870 = vrot.lane.b32.xlu0 %v1013, 120
        %v1871 = vpop.permute.xlu0 %1870
        %1872 = vrot.lane.b32.xlu0 %v1014, 120
        %v1873 = vpop.permute.xlu0 %1872
        %1874 = vrot.lane.b32.xlu0 %v1015, 120
        %v1875 = vpop.permute.xlu0 %1874
        %1876 = vrot.lane.b32.xlu0 %v1016, 120
        %v1877 = vpop.permute.xlu0 %1876
        %1878 = vrot.lane.b32.xlu0 %v1017, 120
        %v1879 = vpop.permute.xlu0 %1878
        %1880 = vrot.lane.b32.xlu0 %v1018, 120
        %v1881 = vpop.permute.xlu0 %1880
        %1882 = vrot.lane.b32.xlu0 %v1019, 120
        %v1883 = vpop.permute.xlu0 %1882
        %1916 = vmatpush.msra.mxu0 %v1851
        %1917 = vmatpush.msra.mxu0 %v1849
        %1918 = vmatpush.msra.mxu0 %v1847
        %1919 = vmatpush.msra.mxu0 %v1845
        %1920 = vmatpush.msra.mxu0 %v1843
        %1921 = vmatpush.msra.mxu0 %v1841
        %1922 = vmatpush.msra.mxu0 %v1839
        %1923 = vmatpush.msra.mxu0 %v1837
        %1924 = vmatpush.msra.mxu0 %v1835
        %1925 = vmatpush.msra.mxu0 %v1833
        %1926 = vmatpush.msra.mxu0 %v1831
        %1927 = vmatpush.msra.mxu0 %v1829
        %1928 = vmatpush.msra.mxu0 %v1827
        %1929 = vmatpush.msra.mxu0 %v1825
        %1930 = vmatpush.msra.mxu0 %v1823
        %1931 = vmatpush.msra.mxu0 %v1821
        %1932 = vmatmul.f32.gmra.mxu0 %v1772
        %v1933 = vpop.f32.mrf.mxu0
        %v1934 = vadd.f32 0.0, %v1933
        %1935 = vmatmul.f32.gmra.mxu0 %v1774
        %v1936 = vpop.f32.mrf.mxu0
        %v1937 = vadd.f32 0.0, %v1936
        %1938 = vmatmul.f32.gmra.mxu0 %v1776
        %v1939 = vpop.f32.mrf.mxu0
        %v1940 = vadd.f32 0.0, %v1939
        %1941 = vmatmul.f32.gmra.mxu0 %v1778
        %v1942 = vpop.f32.mrf.mxu0
        %v1943 = vadd.f32 0.0, %v1942
        %1944 = vmatmul.f32.gmra.mxu0 %v1780
        %v1945 = vpop.f32.mrf.mxu0
        %v1946 = vadd.f32 0.0, %v1945
        %1947 = vmatmul.f32.gmra.mxu0 %v1782
        %v1948 = vpop.f32.mrf.mxu0
        %v1949 = vadd.f32 0.0, %v1948
        %1950 = vmatmul.f32.gmra.mxu0 %v1784
        %v1951 = vpop.f32.mrf.mxu0
        %v1952 = vadd.f32 0.0, %v1951
        %1953 = vmatmul.f32.gmra.mxu0 %v1786
        %v1954 = vpop.f32.mrf.mxu0
        %v1955 = vadd.f32 0.0, %v1954
        %1956 = vdwg.mxu0
        %1957 = vmatpush.msra.mxu0 %v1883
        %1958 = vmatpush.msra.mxu0 %v1881
        %1959 = vmatpush.msra.mxu0 %v1879
        %1960 = vmatpush.msra.mxu0 %v1877
        %1961 = vmatpush.msra.mxu0 %v1875
        %1962 = vmatpush.msra.mxu0 %v1873
        %1963 = vmatpush.msra.mxu0 %v1871
        %1964 = vmatpush.msra.mxu0 %v1869
        %1965 = vmatpush.msra.mxu0 %v1867
        %1966 = vmatpush.msra.mxu0 %v1865
        %1967 = vmatpush.msra.mxu0 %v1863
        %1968 = vmatpush.msra.mxu0 %v1861
        %1969 = vmatpush.msra.mxu0 %v1859
        %1970 = vmatpush.msra.mxu0 %v1857
        %1971 = vmatpush.msra.mxu0 %v1855
        %1972 = vmatpush.msra.mxu0 %v1853
        %1973 = vmatmul.f32.gmra.mxu0 %v1773
        %v1974 = vpop.f32.mrf.mxu0
        %v1975 = vadd.f32 %v1934, %v1974
        %1976 = vmatmul.f32.gmra.mxu0 %v1775
        %v1977 = vpop.f32.mrf.mxu0
        %v1978 = vadd.f32 %v1937, %v1977
        %1979 = vmatmul.f32.gmra.mxu0 %v1777
        %v1980 = vpop.f32.mrf.mxu0
        %v1981 = vadd.f32 %v1940, %v1980
        %1982 = vmatmul.f32.gmra.mxu0 %v1779
        %v1983 = vpop.f32.mrf.mxu0
        %v1984 = vadd.f32 %v1943, %v1983
        %1985 = vmatmul.f32.gmra.mxu0 %v1781
        %v1986 = vpop.f32.mrf.mxu0
        %v1987 = vadd.f32 %v1946, %v1986
        %1988 = vmatmul.f32.gmra.mxu0 %v1783
        %v1989 = vpop.f32.mrf.mxu0
        %v1990 = vadd.f32 %v1949, %v1989
        %1991 = vmatmul.f32.gmra.mxu0 %v1785
        %v1992 = vpop.f32.mrf.mxu0
        %v1993 = vadd.f32 %v1952, %v1992
        %1994 = vmatmul.f32.gmra.mxu0 %v1787
        %v1995 = vpop.f32.mrf.mxu0
        %v1996 = vadd.f32 %v1955, %v1995
        %1997 = vdwg.mxu0
        %1998 = vrot.lane.b32.xlu0 %v933, 120
        %v1999 = vpop.permute.xlu0 %1998
        %2000 = vrot.lane.b32.xlu0 %v936, 120
        %v2001 = vpop.permute.xlu0 %2000
        %2002 = vrot.lane.b32.xlu0 %v939, 120
        %v2003 = vpop.permute.xlu0 %2002
        %2004 = vrot.lane.b32.xlu0 %v942, 120
        %v2005 = vpop.permute.xlu0 %2004
        %2006 = vrot.lane.b32.xlu0 %v945, 120
        %v2007 = vpop.permute.xlu0 %2006
        %2008 = vrot.lane.b32.xlu0 %v948, 120
        %v2009 = vpop.permute.xlu0 %2008
        %2010 = vrot.lane.b32.xlu0 %v951, 120
        %v2011 = vpop.permute.xlu0 %2010
        %2012 = vrot.lane.b32.xlu0 %v954, 120
        %v2013 = vpop.permute.xlu0 %2012
        %2014 = vrot.lane.b32.xlu0 %v956, 120
        %v2015 = vpop.permute.xlu0 %2014
        %2016 = vrot.lane.b32.xlu0 %v957, 120
        %v2017 = vpop.permute.xlu0 %2016
        %2018 = vrot.lane.b32.xlu0 %v958, 120
        %v2019 = vpop.permute.xlu0 %2018
        %2020 = vrot.lane.b32.xlu0 %v959, 120
        %v2021 = vpop.permute.xlu0 %2020
        %2022 = vrot.lane.b32.xlu0 %v960, 120
        %v2023 = vpop.permute.xlu0 %2022
        %2024 = vrot.lane.b32.xlu0 %v961, 120
        %v2025 = vpop.permute.xlu0 %2024
        %2026 = vrot.lane.b32.xlu0 %v962, 120
        %v2027 = vpop.permute.xlu0 %2026
        %2028 = vrot.lane.b32.xlu0 %v963, 120
        %v2029 = vpop.permute.xlu0 %2028
        %2030 = vrot.lane.b32.xlu0 %v964, 120
        %v2031 = vpop.permute.xlu0 %2030
        %2032 = vrot.lane.b32.xlu0 %v965, 120
        %v2033 = vpop.permute.xlu0 %2032
        %2034 = vrot.lane.b32.xlu0 %v966, 120
        %v2035 = vpop.permute.xlu0 %2034
        %2036 = vrot.lane.b32.xlu0 %v967, 120
        %v2037 = vpop.permute.xlu0 %2036
        %2038 = vrot.lane.b32.xlu0 %v968, 120
        %v2039 = vpop.permute.xlu0 %2038
        %2040 = vrot.lane.b32.xlu0 %v969, 120
        %v2041 = vpop.permute.xlu0 %2040
        %2042 = vrot.lane.b32.xlu0 %v970, 120
        %v2043 = vpop.permute.xlu0 %2042
        %2044 = vrot.lane.b32.xlu0 %v971, 120
        %v2045 = vpop.permute.xlu0 %2044
        %2046 = vrot.lane.b32.xlu0 %v972, 120
        %v2047 = vpop.permute.xlu0 %2046
        %2048 = vrot.lane.b32.xlu0 %v973, 120
        %v2049 = vpop.permute.xlu0 %2048
        %2050 = vrot.lane.b32.xlu0 %v974, 120
        %v2051 = vpop.permute.xlu0 %2050
        %2052 = vrot.lane.b32.xlu0 %v975, 120
        %v2053 = vpop.permute.xlu0 %2052
        %2054 = vrot.lane.b32.xlu0 %v976, 120
        %v2055 = vpop.permute.xlu0 %2054
        %2056 = vrot.lane.b32.xlu0 %v977, 120
        %v2057 = vpop.permute.xlu0 %2056
        %2058 = vrot.lane.b32.xlu0 %v978, 120
        %v2059 = vpop.permute.xlu0 %2058
        %2060 = vrot.lane.b32.xlu0 %v979, 120
        %v2061 = vpop.permute.xlu0 %2060
        %2062 = vrot.lane.b32.xlu0 %v980, 120
        %v2063 = vpop.permute.xlu0 %2062
        %2064 = vrot.lane.b32.xlu0 %v981, 120
        %v2065 = vpop.permute.xlu0 %2064
        %2066 = vrot.lane.b32.xlu0 %v982, 120
        %v2067 = vpop.permute.xlu0 %2066
        %2068 = vrot.lane.b32.xlu0 %v983, 120
        %v2069 = vpop.permute.xlu0 %2068
        %2070 = vrot.lane.b32.xlu0 %v984, 120
        %v2071 = vpop.permute.xlu0 %2070
        %2072 = vrot.lane.b32.xlu0 %v985, 120
        %v2073 = vpop.permute.xlu0 %2072
        %2074 = vrot.lane.b32.xlu0 %v986, 120
        %v2075 = vpop.permute.xlu0 %2074
        %2076 = vrot.lane.b32.xlu0 %v987, 120
        %v2077 = vpop.permute.xlu0 %2076
        %v2078 = vsel %vm1021, %v1999, 0
        %v2080 = vsel %vm1021, %v2001, 0
        %v2082 = vsel %vm1021, %v2003, 0
        %v2084 = vsel %vm1021, %v2005, 0
        %v2086 = vsel %vm1021, %v2007, 0
        %v2088 = vsel %vm1021, %v2009, 0
        %v2090 = vsel %vm1021, %v2011, 0
        %v2092 = vsel %vm1021, %v2013, 0
        %v2094 = vsel %vm1021, %v2015, 0
        %v2096 = vsel %vm1021, %v2017, 0
        %v2098 = vsel %vm1021, %v2019, 0
        %v2100 = vsel %vm1021, %v2021, 0
        %v2102 = vsel %vm1021, %v2023, 0
        %v2104 = vsel %vm1021, %v2025, 0
        %v2106 = vsel %vm1021, %v2027, 0
        %v2108 = vsel %vm1021, %v2029, 0
        %v2110 = vsel %vm1021, %v2031, 0
        %v2112 = vsel %vm1021, %v2033, 0
        %v2114 = vsel %vm1021, %v2035, 0
        %v2116 = vsel %vm1021, %v2037, 0
        %v2118 = vsel %vm1021, %v2039, 0
        %v2120 = vsel %vm1021, %v2041, 0
        %v2122 = vsel %vm1021, %v2043, 0
        %v2124 = vsel %vm1021, %v2045, 0
        %v2126 = vsel %vm1021, %v2047, 0
        %v2128 = vsel %vm1021, %v2049, 0
        %v2130 = vsel %vm1021, %v2051, 0
        %v2132 = vsel %vm1021, %v2053, 0
        %v2134 = vsel %vm1021, %v2055, 0
        %v2136 = vsel %vm1021, %v2057, 0
        %v2138 = vsel %vm1021, %v2059, 0
        %v2140 = vsel %vm1021, %v2061, 0
        %v2142 = vsel %vm1021, %v2063, 0
        %v2144 = vsel %vm1021, %v2065, 0
        %v2146 = vsel %vm1021, %v2067, 0
        %v2148 = vsel %vm1021, %v2069, 0
        %v2150 = vsel %vm1021, %v2071, 0
        %v2152 = vsel %vm1021, %v2073, 0
        %v2154 = vsel %vm1021, %v2075, 0
        %v2156 = vsel %vm1021, %v2077, 0
        %2158 = vmatpush.xpose.msra.mxu0 %v2124
        %2159 = vmatpush.xpose.msra.mxu0 %v2122
        %2160 = vmatpush.xpose.msra.mxu0 %v2120
        %2161 = vmatpush.xpose.msra.mxu0 %v2118
        %2162 = vmatpush.xpose.msra.mxu0 %v2116
        %2163 = vmatpush.xpose.msra.mxu0 %v2114
        %2164 = vmatpush.xpose.msra.mxu0 %v2112
        %2165 = vmatpush.xpose.msra.mxu0 %v2110
        %2166 = vmatpush.xpose.msra.mxu0 %v2108
        %2167 = vmatpush.xpose.msra.mxu0 %v2106
        %2168 = vmatpush.xpose.msra.mxu0 %v2104
        %2169 = vmatpush.xpose.msra.mxu0 %v2102
        %2170 = vmatpush.xpose.msra.mxu0 %v2100
        %2171 = vmatpush.xpose.msra.mxu0 %v2098
        %2172 = vmatpush.xpose.msra.mxu0 %v2096
        %2173 = vmatpush.xpose.msra.mxu0 %v2094
        %2174 = vmatmul.f32.gmra.mxu0 %v2078
        %v2175 = vpop.f32.mrf.mxu0
        %v2176 = vadd.f32 0.0, %v2175
        %2177 = vmatmul.f32.gmra.mxu0 %v2080
        %v2178 = vpop.f32.mrf.mxu0
        %v2179 = vadd.f32 0.0, %v2178
        %2180 = vmatmul.f32.gmra.mxu0 %v2082
        %v2181 = vpop.f32.mrf.mxu0
        %v2182 = vadd.f32 0.0, %v2181
        %2183 = vmatmul.f32.gmra.mxu0 %v2084
        %v2184 = vpop.f32.mrf.mxu0
        %v2185 = vadd.f32 0.0, %v2184
        %2186 = vmatmul.f32.gmra.mxu0 %v2086
        %v2187 = vpop.f32.mrf.mxu0
        %v2188 = vadd.f32 0.0, %v2187
        %2189 = vmatmul.f32.gmra.mxu0 %v2088
        %v2190 = vpop.f32.mrf.mxu0
        %v2191 = vadd.f32 0.0, %v2190
        %2192 = vmatmul.f32.gmra.mxu0 %v2090
        %v2193 = vpop.f32.mrf.mxu0
        %v2194 = vadd.f32 0.0, %v2193
        %2195 = vmatmul.f32.gmra.mxu0 %v2092
        %v2196 = vpop.f32.mrf.mxu0
        %v2197 = vadd.f32 0.0, %v2196
        %2198 = vdwg.mxu0
        %2199 = vmatpush.xpose.msra.mxu0 %v2156
        %2200 = vmatpush.xpose.msra.mxu0 %v2154
        %2201 = vmatpush.xpose.msra.mxu0 %v2152
        %2202 = vmatpush.xpose.msra.mxu0 %v2150
        %2203 = vmatpush.xpose.msra.mxu0 %v2148
        %2204 = vmatpush.xpose.msra.mxu0 %v2146
        %2205 = vmatpush.xpose.msra.mxu0 %v2144
        %2206 = vmatpush.xpose.msra.mxu0 %v2142
        %2207 = vmatpush.xpose.msra.mxu0 %v2140
        %2208 = vmatpush.xpose.msra.mxu0 %v2138
        %2209 = vmatpush.xpose.msra.mxu0 %v2136
        %2210 = vmatpush.xpose.msra.mxu0 %v2134
        %2211 = vmatpush.xpose.msra.mxu0 %v2132
        %2212 = vmatpush.xpose.msra.mxu0 %v2130
        %2213 = vmatpush.xpose.msra.mxu0 %v2128
        %2214 = vmatpush.xpose.msra.mxu0 %v2126
        %2215 = vmatmul.f32.gmra.mxu0 %v2078
        %v2216 = vpop.f32.mrf.mxu0
        %v2217 = vadd.f32 0.0, %v2216
        %2218 = vmatmul.f32.gmra.mxu0 %v2080
        %v2219 = vpop.f32.mrf.mxu0
        %v2220 = vadd.f32 0.0, %v2219
        %2221 = vmatmul.f32.gmra.mxu0 %v2082
        %v2222 = vpop.f32.mrf.mxu0
        %v2223 = vadd.f32 0.0, %v2222
        %2224 = vmatmul.f32.gmra.mxu0 %v2084
        %v2225 = vpop.f32.mrf.mxu0
        %v2226 = vadd.f32 0.0, %v2225
        %2227 = vmatmul.f32.gmra.mxu0 %v2086
        %v2228 = vpop.f32.mrf.mxu0
        %v2229 = vadd.f32 0.0, %v2228
        %2230 = vmatmul.f32.gmra.mxu0 %v2088
        %v2231 = vpop.f32.mrf.mxu0
        %v2232 = vadd.f32 0.0, %v2231
        %2233 = vmatmul.f32.gmra.mxu0 %v2090
        %v2234 = vpop.f32.mrf.mxu0
        %v2235 = vadd.f32 0.0, %v2234
        %2236 = vmatmul.f32.gmra.mxu0 %v2092
        %v2237 = vpop.f32.mrf.mxu0
        %v2238 = vadd.f32 0.0, %v2237
        %2239 = vdwg.mxu0
        %v2240 = vmax.f32 %v2176, %v2217
        %2241 = vmax.xlane.f32.xlu0 %v2240
        %v2242 = vpop.xlane.xlu0 %2241
        %v2243 = vmax.f32 %v2179, %v2220
        %2244 = vmax.xlane.f32.xlu0 %v2243
        %v2245 = vpop.xlane.xlu0 %2244
        %v2246 = vmax.f32 %v2182, %v2223
        %2247 = vmax.xlane.f32.xlu0 %v2246
        %v2248 = vpop.xlane.xlu0 %2247
        %v2249 = vmax.f32 %v2185, %v2226
        %2250 = vmax.xlane.f32.xlu0 %v2249
        %v2251 = vpop.xlane.xlu0 %2250
        %v2252 = vmax.f32 %v2188, %v2229
        %2253 = vmax.xlane.f32.xlu0 %v2252
        %v2254 = vpop.xlane.xlu0 %2253
        %v2255 = vmax.f32 %v2191, %v2232
        %2256 = vmax.xlane.f32.xlu0 %v2255
        %v2257 = vpop.xlane.xlu0 %2256
        %v2258 = vmax.f32 %v2194, %v2235
        %2259 = vmax.xlane.f32.xlu0 %v2258
        %v2260 = vpop.xlane.xlu0 %2259
        %v2261 = vmax.f32 %v2197, %v2238
        %2262 = vmax.xlane.f32.xlu0 %v2261
        %v2263 = vpop.xlane.xlu0 %2262
        %v2264 = vsub.f32 %v2176, %v2242
        %v2265 = vsub.f32 %v2217, %v2242
        %v2266 = vsub.f32 %v2179, %v2245
        %v2267 = vsub.f32 %v2220, %v2245
        %v2268 = vsub.f32 %v2182, %v2248
        %v2269 = vsub.f32 %v2223, %v2248
        %v2270 = vsub.f32 %v2185, %v2251
        %v2271 = vsub.f32 %v2226, %v2251
        %v2272 = vsub.f32 %v2188, %v2254
        %v2273 = vsub.f32 %v2229, %v2254
        %v2274 = vsub.f32 %v2191, %v2257
        %v2275 = vsub.f32 %v2232, %v2257
        %v2276 = vsub.f32 %v2194, %v2260
        %v2277 = vsub.f32 %v2235, %v2260
        %v2278 = vsub.f32 %v2197, %v2263
        %v2279 = vsub.f32 %v2238, %v2263
        %v2280 = vmul.f32 %v2264, 1.442695
        %v2281 = vpow.pop %v2280
        %v2282 = vmul.f32 %v2265, 1.442695
        %v2283 = vpow.pop %v2282
        %v2284 = vmul.f32 %v2266, 1.442695
        %v2285 = vpow.pop %v2284
        %v2286 = vmul.f32 %v2267, 1.442695
        %v2287 = vpow.pop %v2286
        %v2288 = vmul.f32 %v2268, 1.442695
        %v2289 = vpow.pop %v2288
        %v2290 = vmul.f32 %v2269, 1.442695
        %v2291 = vpow.pop %v2290
        %v2292 = vmul.f32 %v2270, 1.442695
        %v2293 = vpow.pop %v2292
        %v2294 = vmul.f32 %v2271, 1.442695
        %v2295 = vpow.pop %v2294
        %v2296 = vmul.f32 %v2272, 1.442695
        %v2297 = vpow.pop %v2296
        %v2298 = vmul.f32 %v2273, 1.442695
        %v2299 = vpow.pop %v2298
        %v2300 = vmul.f32 %v2274, 1.442695
        %v2301 = vpow.pop %v2300
        %v2302 = vmul.f32 %v2275, 1.442695
        %v2303 = vpow.pop %v2302
        %v2304 = vmul.f32 %v2276, 1.442695
        %v2305 = vpow.pop %v2304
        %v2306 = vmul.f32 %v2277, 1.442695
        %v2307 = vpow.pop %v2306
        %v2308 = vmul.f32 %v2278, 1.442695
        %v2309 = vpow.pop %v2308
        %v2310 = vmul.f32 %v2279, 1.442695
        %v2311 = vpow.pop %v2310
        %v2312 = vadd.f32 %v2281, %v2283
        %2313 = vadd.xlane.f32.xlu0 %v2312
        %v2314 = vpop.xlane.xlu0 %2313
        %v2315 = vadd.f32 %v2285, %v2287
        %2316 = vadd.xlane.f32.xlu0 %v2315
        %v2317 = vpop.xlane.xlu0 %2316
        %v2318 = vadd.f32 %v2289, %v2291
        %2319 = vadd.xlane.f32.xlu0 %v2318
        %v2320 = vpop.xlane.xlu0 %2319
        %v2321 = vadd.f32 %v2293, %v2295
        %2322 = vadd.xlane.f32.xlu0 %v2321
        %v2323 = vpop.xlane.xlu0 %2322
        %v2324 = vadd.f32 %v2297, %v2299
        %2325 = vadd.xlane.f32.xlu0 %v2324
        %v2326 = vpop.xlane.xlu0 %2325
        %v2327 = vadd.f32 %v2301, %v2303
        %2328 = vadd.xlane.f32.xlu0 %v2327
        %v2329 = vpop.xlane.xlu0 %2328
        %v2330 = vadd.f32 %v2305, %v2307
        %2331 = vadd.xlane.f32.xlu0 %v2330
        %v2332 = vpop.xlane.xlu0 %2331
        %v2333 = vadd.f32 %v2309, %v2311
        %2334 = vadd.xlane.f32.xlu0 %v2333
        %v2335 = vpop.xlane.xlu0 %2334
        %v2336 = vrcp.pop %v2314
        %v2337 = vrcp.pop %v2317
        %v2338 = vrcp.pop %v2320
        %v2339 = vrcp.pop %v2323
        %v2340 = vrcp.pop %v2326
        %v2341 = vrcp.pop %v2329
        %v2342 = vrcp.pop %v2332
        %v2343 = vrcp.pop %v2335
        %v2344 = vmul.f32 %v2281, %v2336
        %v2345 = vmul.f32 %v2283, %v2336
        %v2346 = vmul.f32 %v2285, %v2337
        %v2347 = vmul.f32 %v2287, %v2337
        %v2348 = vmul.f32 %v2289, %v2338
        %v2349 = vmul.f32 %v2291, %v2338
        %v2350 = vmul.f32 %v2293, %v2339
        %v2351 = vmul.f32 %v2295, %v2339
        %v2352 = vmul.f32 %v2297, %v2340
        %v2353 = vmul.f32 %v2299, %v2340
        %v2354 = vmul.f32 %v2301, %v2341
        %v2355 = vmul.f32 %v2303, %v2341
        %v2356 = vmul.f32 %v2305, %v2342
        %v2357 = vmul.f32 %v2307, %v2342
        %v2358 = vmul.f32 %v2309, %v2343
        %v2359 = vmul.f32 %v2311, %v2343
        %2360 = vrot.lane.b32.xlu0 %v988, 112
        %v2361 = vpop.permute.xlu0 %2360
        %2362 = vrot.lane.b32.xlu0 %v989, 112
        %v2363 = vpop.permute.xlu0 %2362
        %2364 = vrot.lane.b32.xlu0 %v990, 112
        %v2365 = vpop.permute.xlu0 %2364
        %2366 = vrot.lane.b32.xlu0 %v991, 112
        %v2367 = vpop.permute.xlu0 %2366
        %2368 = vrot.lane.b32.xlu0 %v992, 112
        %v2369 = vpop.permute.xlu0 %2368
        %2370 = vrot.lane.b32.xlu0 %v993, 112
        %v2371 = vpop.permute.xlu0 %2370
        %2372 = vrot.lane.b32.xlu0 %v994, 112
        %v2373 = vpop.permute.xlu0 %2372
        %2374 = vrot.lane.b32.xlu0 %v995, 112
        %v2375 = vpop.permute.xlu0 %2374
        %2376 = vrot.lane.b32.xlu0 %v996, 112
        %v2377 = vpop.permute.xlu0 %2376
        %2378 = vrot.lane.b32.xlu0 %v997, 112
        %v2379 = vpop.permute.xlu0 %2378
        %2380 = vrot.lane.b32.xlu0 %v998, 112
        %v2381 = vpop.permute.xlu0 %2380
        %2382 = vrot.lane.b32.xlu0 %v999, 112
        %v2383 = vpop.permute.xlu0 %2382
        %2384 = vrot.lane.b32.xlu0 %v1000, 112
        %v2385 = vpop.permute.xlu0 %2384
        %2386 = vrot.lane.b32.xlu0 %v1001, 112
        %v2387 = vpop.permute.xlu0 %2386
        %2388 = vrot.lane.b32.xlu0 %v1002, 112
        %v2389 = vpop.permute.xlu0 %2388
        %2390 = vrot.lane.b32.xlu0 %v1003, 112
        %v2391 = vpop.permute.xlu0 %2390
        %2392 = vrot.lane.b32.xlu0 %v1004, 112
        %v2393 = vpop.permute.xlu0 %2392
        %2394 = vrot.lane.b32.xlu0 %v1005, 112
        %v2395 = vpop.permute.xlu0 %2394
        %2396 = vrot.lane.b32.xlu0 %v1006, 112
        %v2397 = vpop.permute.xlu0 %2396
        %2398 = vrot.lane.b32.xlu0 %v1007, 112
        %v2399 = vpop.permute.xlu0 %2398
        %2400 = vrot.lane.b32.xlu0 %v1008, 112
        %v2401 = vpop.permute.xlu0 %2400
        %2402 = vrot.lane.b32.xlu0 %v1009, 112
        %v2403 = vpop.permute.xlu0 %2402
        %2404 = vrot.lane.b32.xlu0 %v1010, 112
        %v2405 = vpop.permute.xlu0 %2404
        %2406 = vrot.lane.b32.xlu0 %v1011, 112
        %v2407 = vpop.permute.xlu0 %2406
        %2408 = vrot.lane.b32.xlu0 %v1012, 112
        %v2409 = vpop.permute.xlu0 %2408
        %2410 = vrot.lane.b32.xlu0 %v1013, 112
        %v2411 = vpop.permute.xlu0 %2410
        %2412 = vrot.lane.b32.xlu0 %v1014, 112
        %v2413 = vpop.permute.xlu0 %2412
        %2414 = vrot.lane.b32.xlu0 %v1015, 112
        %v2415 = vpop.permute.xlu0 %2414
        %2416 = vrot.lane.b32.xlu0 %v1016, 112
        %v2417 = vpop.permute.xlu0 %2416
        %2418 = vrot.lane.b32.xlu0 %v1017, 112
        %v2419 = vpop.permute.xlu0 %2418
        %2420 = vrot.lane.b32.xlu0 %v1018, 112
        %v2421 = vpop.permute.xlu0 %2420
        %2422 = vrot.lane.b32.xlu0 %v1019, 112
        %v2423 = vpop.permute.xlu0 %2422
        %2456 = vmatpush.msra.mxu0 %v2391
        %2457 = vmatpush.msra.mxu0 %v2389
        %2458 = vmatpush.msra.mxu0 %v2387
        %2459 = vmatpush.msra.mxu0 %v2385
        %2460 = vmatpush.msra.mxu0 %v2383
        %2461 = vmatpush.msra.mxu0 %v2381
        %2462 = vmatpush.msra.mxu0 %v2379
        %2463 = vmatpush.msra.mxu0 %v2377
        %2464 = vmatpush.msra.mxu0 %v2375
        %2465 = vmatpush.msra.mxu0 %v2373
        %2466 = vmatpush.msra.mxu0 %v2371
        %2467 = vmatpush.msra.mxu0 %v2369
        %2468 = vmatpush.msra.mxu0 %v2367
        %2469 = vmatpush.msra.mxu0 %v2365
        %2470 = vmatpush.msra.mxu0 %v2363
        %2471 = vmatpush.msra.mxu0 %v2361
        %2472 = vmatmul.f32.gmra.mxu0 %v2344
        %v2473 = vpop.f32.mrf.mxu0
        %v2474 = vadd.f32 0.0, %v2473
        %2475 = vmatmul.f32.gmra.mxu0 %v2346
        %v2476 = vpop.f32.mrf.mxu0
        %v2477 = vadd.f32 0.0, %v2476
        %2478 = vmatmul.f32.gmra.mxu0 %v2348
        %v2479 = vpop.f32.mrf.mxu0
        %v2480 = vadd.f32 0.0, %v2479
        %2481 = vmatmul.f32.gmra.mxu0 %v2350
        %v2482 = vpop.f32.mrf.mxu0
        %v2483 = vadd.f32 0.0, %v2482
        %2484 = vmatmul.f32.gmra.mxu0 %v2352
        %v2485 = vpop.f32.mrf.mxu0
        %v2486 = vadd.f32 0.0, %v2485
        %2487 = vmatmul.f32.gmra.mxu0 %v2354
        %v2488 = vpop.f32.mrf.mxu0
        %v2489 = vadd.f32 0.0, %v2488
        %2490 = vmatmul.f32.gmra.mxu0 %v2356
        %v2491 = vpop.f32.mrf.mxu0
        %v2492 = vadd.f32 0.0, %v2491
        %2493 = vmatmul.f32.gmra.mxu0 %v2358
        %v2494 = vpop.f32.mrf.mxu0
        %v2495 = vadd.f32 0.0, %v2494
        %2496 = vdwg.mxu0
        %2497 = vmatpush.msra.mxu0 %v2423
        %2498 = vmatpush.msra.mxu0 %v2421
        %2499 = vmatpush.msra.mxu0 %v2419
        %2500 = vmatpush.msra.mxu0 %v2417
        %2501 = vmatpush.msra.mxu0 %v2415
        %2502 = vmatpush.msra.mxu0 %v2413
        %2503 = vmatpush.msra.mxu0 %v2411
        %2504 = vmatpush.msra.mxu0 %v2409
        %2505 = vmatpush.msra.mxu0 %v2407
        %2506 = vmatpush.msra.mxu0 %v2405
        %2507 = vmatpush.msra.mxu0 %v2403
        %2508 = vmatpush.msra.mxu0 %v2401
        %2509 = vmatpush.msra.mxu0 %v2399
        %2510 = vmatpush.msra.mxu0 %v2397
        %2511 = vmatpush.msra.mxu0 %v2395
        %2512 = vmatpush.msra.mxu0 %v2393
        %2513 = vmatmul.f32.gmra.mxu0 %v2345
        %v2514 = vpop.f32.mrf.mxu0
        %v2515 = vadd.f32 %v2474, %v2514
        %2516 = vmatmul.f32.gmra.mxu0 %v2347
        %v2517 = vpop.f32.mrf.mxu0
        %v2518 = vadd.f32 %v2477, %v2517
        %2519 = vmatmul.f32.gmra.mxu0 %v2349
        %v2520 = vpop.f32.mrf.mxu0
        %v2521 = vadd.f32 %v2480, %v2520
        %2522 = vmatmul.f32.gmra.mxu0 %v2351
        %v2523 = vpop.f32.mrf.mxu0
        %v2524 = vadd.f32 %v2483, %v2523
        %2525 = vmatmul.f32.gmra.mxu0 %v2353
        %v2526 = vpop.f32.mrf.mxu0
        %v2527 = vadd.f32 %v2486, %v2526
        %2528 = vmatmul.f32.gmra.mxu0 %v2355
        %v2529 = vpop.f32.mrf.mxu0
        %v2530 = vadd.f32 %v2489, %v2529
        %2531 = vmatmul.f32.gmra.mxu0 %v2357
        %v2532 = vpop.f32.mrf.mxu0
        %v2533 = vadd.f32 %v2492, %v2532
        %2534 = vmatmul.f32.gmra.mxu0 %v2359
        %v2535 = vpop.f32.mrf.mxu0
        %v2536 = vadd.f32 %v2495, %v2535
        %2537 = vdwg.mxu0
        %2538 = vrot.lane.b32.xlu0 %v933, 116
        %v2539 = vpop.permute.xlu0 %2538
        %2540 = vrot.lane.b32.xlu0 %v936, 116
        %v2541 = vpop.permute.xlu0 %2540
        %2542 = vrot.lane.b32.xlu0 %v939, 116
        %v2543 = vpop.permute.xlu0 %2542
        %2544 = vrot.lane.b32.xlu0 %v942, 116
        %v2545 = vpop.permute.xlu0 %2544
        %2546 = vrot.lane.b32.xlu0 %v945, 116
        %v2547 = vpop.permute.xlu0 %2546
        %2548 = vrot.lane.b32.xlu0 %v948, 116
        %v2549 = vpop.permute.xlu0 %2548
        %2550 = vrot.lane.b32.xlu0 %v951, 116
        %v2551 = vpop.permute.xlu0 %2550
        %2552 = vrot.lane.b32.xlu0 %v954, 116
        %v2553 = vpop.permute.xlu0 %2552
        %2554 = vrot.lane.b32.xlu0 %v956, 116
        %v2555 = vpop.permute.xlu0 %2554
        %2556 = vrot.lane.b32.xlu0 %v957, 116
        %v2557 = vpop.permute.xlu0 %2556
        %2558 = vrot.lane.b32.xlu0 %v958, 116
        %v2559 = vpop.permute.xlu0 %2558
        %2560 = vrot.lane.b32.xlu0 %v959, 116
        %v2561 = vpop.permute.xlu0 %2560
        %2562 = vrot.lane.b32.xlu0 %v960, 116
        %v2563 = vpop.permute.xlu0 %2562
        %2564 = vrot.lane.b32.xlu0 %v961, 116
        %v2565 = vpop.permute.xlu0 %2564
        %2566 = vrot.lane.b32.xlu0 %v962, 116
        %v2567 = vpop.permute.xlu0 %2566
        %2568 = vrot.lane.b32.xlu0 %v963, 116
        %v2569 = vpop.permute.xlu0 %2568
        %2570 = vrot.lane.b32.xlu0 %v964, 116
        %v2571 = vpop.permute.xlu0 %2570
        %2572 = vrot.lane.b32.xlu0 %v965, 116
        %v2573 = vpop.permute.xlu0 %2572
        %2574 = vrot.lane.b32.xlu0 %v966, 116
        %v2575 = vpop.permute.xlu0 %2574
        %2576 = vrot.lane.b32.xlu0 %v967, 116
        %v2577 = vpop.permute.xlu0 %2576
        %2578 = vrot.lane.b32.xlu0 %v968, 116
        %v2579 = vpop.permute.xlu0 %2578
        %2580 = vrot.lane.b32.xlu0 %v969, 116
        %v2581 = vpop.permute.xlu0 %2580
        %2582 = vrot.lane.b32.xlu0 %v970, 116
        %v2583 = vpop.permute.xlu0 %2582
        %2584 = vrot.lane.b32.xlu0 %v971, 116
        %v2585 = vpop.permute.xlu0 %2584
        %2586 = vrot.lane.b32.xlu0 %v972, 116
        %v2587 = vpop.permute.xlu0 %2586
        %2588 = vrot.lane.b32.xlu0 %v973, 116
        %v2589 = vpop.permute.xlu0 %2588
        %2590 = vrot.lane.b32.xlu0 %v974, 116
        %v2591 = vpop.permute.xlu0 %2590
        %2592 = vrot.lane.b32.xlu0 %v975, 116
        %v2593 = vpop.permute.xlu0 %2592
        %2594 = vrot.lane.b32.xlu0 %v976, 116
        %v2595 = vpop.permute.xlu0 %2594
        %2596 = vrot.lane.b32.xlu0 %v977, 116
        %v2597 = vpop.permute.xlu0 %2596
        %2598 = vrot.lane.b32.xlu0 %v978, 116
        %v2599 = vpop.permute.xlu0 %2598
        %2600 = vrot.lane.b32.xlu0 %v979, 116
        %v2601 = vpop.permute.xlu0 %2600
        %2602 = vrot.lane.b32.xlu0 %v980, 116
        %v2603 = vpop.permute.xlu0 %2602
        %2604 = vrot.lane.b32.xlu0 %v981, 116
        %v2605 = vpop.permute.xlu0 %2604
        %2606 = vrot.lane.b32.xlu0 %v982, 116
        %v2607 = vpop.permute.xlu0 %2606
        %2608 = vrot.lane.b32.xlu0 %v983, 116
        %v2609 = vpop.permute.xlu0 %2608
        %2610 = vrot.lane.b32.xlu0 %v984, 116
        %v2611 = vpop.permute.xlu0 %2610
        %2612 = vrot.lane.b32.xlu0 %v985, 116
        %v2613 = vpop.permute.xlu0 %2612
        %2614 = vrot.lane.b32.xlu0 %v986, 116
        %v2615 = vpop.permute.xlu0 %2614
        %2616 = vrot.lane.b32.xlu0 %v987, 116
        %v2617 = vpop.permute.xlu0 %2616
        %v2618 = vsel %vm1021, %v2539, 0
        %v2620 = vsel %vm1021, %v2541, 0
        %v2622 = vsel %vm1021, %v2543, 0
        %v2624 = vsel %vm1021, %v2545, 0
        %v2626 = vsel %vm1021, %v2547, 0
        %v2628 = vsel %vm1021, %v2549, 0
        %v2630 = vsel %vm1021, %v2551, 0
        %v2632 = vsel %vm1021, %v2553, 0
        %v2634 = vsel %vm1021, %v2555, 0
        %v2636 = vsel %vm1021, %v2557, 0
        %v2638 = vsel %vm1021, %v2559, 0
        %v2640 = vsel %vm1021, %v2561, 0
        %v2642 = vsel %vm1021, %v2563, 0
        %v2644 = vsel %vm1021, %v2565, 0
        %v2646 = vsel %vm1021, %v2567, 0
        %v2648 = vsel %vm1021, %v2569, 0
        %v2650 = vsel %vm1021, %v2571, 0
        %v2652 = vsel %vm1021, %v2573, 0
        %v2654 = vsel %vm1021, %v2575, 0
        %v2656 = vsel %vm1021, %v2577, 0
        %v2658 = vsel %vm1021, %v2579, 0
        %v2660 = vsel %vm1021, %v2581, 0
        %v2662 = vsel %vm1021, %v2583, 0
        %v2664 = vsel %vm1021, %v2585, 0
        %v2666 = vsel %vm1021, %v2587, 0
        %v2668 = vsel %vm1021, %v2589, 0
        %v2670 = vsel %vm1021, %v2591, 0
        %v2672 = vsel %vm1021, %v2593, 0
        %v2674 = vsel %vm1021, %v2595, 0
        %v2676 = vsel %vm1021, %v2597, 0
        %v2678 = vsel %vm1021, %v2599, 0
        %v2680 = vsel %vm1021, %v2601, 0
        %v2682 = vsel %vm1021, %v2603, 0
        %v2684 = vsel %vm1021, %v2605, 0
        %v2686 = vsel %vm1021, %v2607, 0
        %v2688 = vsel %vm1021, %v2609, 0
        %v2690 = vsel %vm1021, %v2611, 0
        %v2692 = vsel %vm1021, %v2613, 0
        %v2694 = vsel %vm1021, %v2615, 0
        %v2696 = vsel %vm1021, %v2617, 0
        %2698 = vmatpush.xpose.msra.mxu0 %v2664
        %2699 = vmatpush.xpose.msra.mxu0 %v2662
        %2700 = vmatpush.xpose.msra.mxu0 %v2660
        %2701 = vmatpush.xpose.msra.mxu0 %v2658
        %2702 = vmatpush.xpose.msra.mxu0 %v2656
        %2703 = vmatpush.xpose.msra.mxu0 %v2654
        %2704 = vmatpush.xpose.msra.mxu0 %v2652
        %2705 = vmatpush.xpose.msra.mxu0 %v2650
        %2706 = vmatpush.xpose.msra.mxu0 %v2648
        %2707 = vmatpush.xpose.msra.mxu0 %v2646
        %2708 = vmatpush.xpose.msra.mxu0 %v2644
        %2709 = vmatpush.xpose.msra.mxu0 %v2642
        %2710 = vmatpush.xpose.msra.mxu0 %v2640
        %2711 = vmatpush.xpose.msra.mxu0 %v2638
        %2712 = vmatpush.xpose.msra.mxu0 %v2636
        %2713 = vmatpush.xpose.msra.mxu0 %v2634
        %2714 = vmatmul.f32.gmra.mxu0 %v2618
        %v2715 = vpop.f32.mrf.mxu0
        %v2716 = vadd.f32 0.0, %v2715
        %2717 = vmatmul.f32.gmra.mxu0 %v2620
        %v2718 = vpop.f32.mrf.mxu0
        %v2719 = vadd.f32 0.0, %v2718
        %2720 = vmatmul.f32.gmra.mxu0 %v2622
        %v2721 = vpop.f32.mrf.mxu0
        %v2722 = vadd.f32 0.0, %v2721
        %2723 = vmatmul.f32.gmra.mxu0 %v2624
        %v2724 = vpop.f32.mrf.mxu0
        %v2725 = vadd.f32 0.0, %v2724
        %2726 = vmatmul.f32.gmra.mxu0 %v2626
        %v2727 = vpop.f32.mrf.mxu0
        %v2728 = vadd.f32 0.0, %v2727
        %2729 = vmatmul.f32.gmra.mxu0 %v2628
        %v2730 = vpop.f32.mrf.mxu0
        %v2731 = vadd.f32 0.0, %v2730
        %2732 = vmatmul.f32.gmra.mxu0 %v2630
        %v2733 = vpop.f32.mrf.mxu0
        %v2734 = vadd.f32 0.0, %v2733
        %2735 = vmatmul.f32.gmra.mxu0 %v2632
        %v2736 = vpop.f32.mrf.mxu0
        %v2737 = vadd.f32 0.0, %v2736
        %2738 = vdwg.mxu0
        %2739 = vmatpush.xpose.msra.mxu0 %v2696
        %2740 = vmatpush.xpose.msra.mxu0 %v2694
        %2741 = vmatpush.xpose.msra.mxu0 %v2692
        %2742 = vmatpush.xpose.msra.mxu0 %v2690
        %2743 = vmatpush.xpose.msra.mxu0 %v2688
        %2744 = vmatpush.xpose.msra.mxu0 %v2686
        %2745 = vmatpush.xpose.msra.mxu0 %v2684
        %2746 = vmatpush.xpose.msra.mxu0 %v2682
        %2747 = vmatpush.xpose.msra.mxu0 %v2680
        %2748 = vmatpush.xpose.msra.mxu0 %v2678
        %2749 = vmatpush.xpose.msra.mxu0 %v2676
        %2750 = vmatpush.xpose.msra.mxu0 %v2674
        %2751 = vmatpush.xpose.msra.mxu0 %v2672
        %2752 = vmatpush.xpose.msra.mxu0 %v2670
        %2753 = vmatpush.xpose.msra.mxu0 %v2668
        %2754 = vmatpush.xpose.msra.mxu0 %v2666
        %2755 = vmatmul.f32.gmra.mxu0 %v2618
        %v2756 = vpop.f32.mrf.mxu0
        %v2757 = vadd.f32 0.0, %v2756
        %2758 = vmatmul.f32.gmra.mxu0 %v2620
        %v2759 = vpop.f32.mrf.mxu0
        %v2760 = vadd.f32 0.0, %v2759
        %2761 = vmatmul.f32.gmra.mxu0 %v2622
        %v2762 = vpop.f32.mrf.mxu0
        %v2763 = vadd.f32 0.0, %v2762
        %2764 = vmatmul.f32.gmra.mxu0 %v2624
        %v2765 = vpop.f32.mrf.mxu0
        %v2766 = vadd.f32 0.0, %v2765
        %2767 = vmatmul.f32.gmra.mxu0 %v2626
        %v2768 = vpop.f32.mrf.mxu0
        %v2769 = vadd.f32 0.0, %v2768
        %2770 = vmatmul.f32.gmra.mxu0 %v2628
        %v2771 = vpop.f32.mrf.mxu0
        %v2772 = vadd.f32 0.0, %v2771
        %2773 = vmatmul.f32.gmra.mxu0 %v2630
        %v2774 = vpop.f32.mrf.mxu0
        %v2775 = vadd.f32 0.0, %v2774
        %2776 = vmatmul.f32.gmra.mxu0 %v2632
        %v2777 = vpop.f32.mrf.mxu0
        %v2778 = vadd.f32 0.0, %v2777
        %2779 = vdwg.mxu0
        %v2780 = vmax.f32 %v2716, %v2757
        %2781 = vmax.xlane.f32.xlu0 %v2780
        %v2782 = vpop.xlane.xlu0 %2781
        %v2783 = vmax.f32 %v2719, %v2760
        %2784 = vmax.xlane.f32.xlu0 %v2783
        %v2785 = vpop.xlane.xlu0 %2784
        %v2786 = vmax.f32 %v2722, %v2763
        %2787 = vmax.xlane.f32.xlu0 %v2786
        %v2788 = vpop.xlane.xlu0 %2787
        %v2789 = vmax.f32 %v2725, %v2766
        %2790 = vmax.xlane.f32.xlu0 %v2789
        %v2791 = vpop.xlane.xlu0 %2790
        %v2792 = vmax.f32 %v2728, %v2769
        %2793 = vmax.xlane.f32.xlu0 %v2792
        %v2794 = vpop.xlane.xlu0 %2793
        %v2795 = vmax.f32 %v2731, %v2772
        %2796 = vmax.xlane.f32.xlu0 %v2795
        %v2797 = vpop.xlane.xlu0 %2796
        %v2798 = vmax.f32 %v2734, %v2775
        %2799 = vmax.xlane.f32.xlu0 %v2798
        %v2800 = vpop.xlane.xlu0 %2799
        %v2801 = vmax.f32 %v2737, %v2778
        %2802 = vmax.xlane.f32.xlu0 %v2801
        %v2803 = vpop.xlane.xlu0 %2802
        %v2804 = vsub.f32 %v2716, %v2782
        %v2805 = vsub.f32 %v2757, %v2782
        %v2806 = vsub.f32 %v2719, %v2785
        %v2807 = vsub.f32 %v2760, %v2785
        %v2808 = vsub.f32 %v2722, %v2788
        %v2809 = vsub.f32 %v2763, %v2788
        %v2810 = vsub.f32 %v2725, %v2791
        %v2811 = vsub.f32 %v2766, %v2791
        %v2812 = vsub.f32 %v2728, %v2794
        %v2813 = vsub.f32 %v2769, %v2794
        %v2814 = vsub.f32 %v2731, %v2797
        %v2815 = vsub.f32 %v2772, %v2797
        %v2816 = vsub.f32 %v2734, %v2800
        %v2817 = vsub.f32 %v2775, %v2800
        %v2818 = vsub.f32 %v2737, %v2803
        %v2819 = vsub.f32 %v2778, %v2803
        %v2820 = vmul.f32 %v2804, 1.442695
        %v2821 = vpow.pop %v2820
        %v2822 = vmul.f32 %v2805, 1.442695
        %v2823 = vpow.pop %v2822
        %v2824 = vmul.f32 %v2806, 1.442695
        %v2825 = vpow.pop %v2824
        %v2826 = vmul.f32 %v2807, 1.442695
        %v2827 = vpow.pop %v2826
        %v2828 = vmul.f32 %v2808, 1.442695
        %v2829 = vpow.pop %v2828
        %v2830 = vmul.f32 %v2809, 1.442695
        %v2831 = vpow.pop %v2830
        %v2832 = vmul.f32 %v2810, 1.442695
        %v2833 = vpow.pop %v2832
        %v2834 = vmul.f32 %v2811, 1.442695
        %v2835 = vpow.pop %v2834
        %v2836 = vmul.f32 %v2812, 1.442695
        %v2837 = vpow.pop %v2836
        %v2838 = vmul.f32 %v2813, 1.442695
        %v2839 = vpow.pop %v2838
        %v2840 = vmul.f32 %v2814, 1.442695
        %v2841 = vpow.pop %v2840
        %v2842 = vmul.f32 %v2815, 1.442695
        %v2843 = vpow.pop %v2842
        %v2844 = vmul.f32 %v2816, 1.442695
        %v2845 = vpow.pop %v2844
        %v2846 = vmul.f32 %v2817, 1.442695
        %v2847 = vpow.pop %v2846
        %v2848 = vmul.f32 %v2818, 1.442695
        %v2849 = vpow.pop %v2848
        %v2850 = vmul.f32 %v2819, 1.442695
        %v2851 = vpow.pop %v2850
        %v2852 = vadd.f32 %v2821, %v2823
        %2853 = vadd.xlane.f32.xlu0 %v2852
        %v2854 = vpop.xlane.xlu0 %2853
        %v2855 = vadd.f32 %v2825, %v2827
        %2856 = vadd.xlane.f32.xlu0 %v2855
        %v2857 = vpop.xlane.xlu0 %2856
        %v2858 = vadd.f32 %v2829, %v2831
        %2859 = vadd.xlane.f32.xlu0 %v2858
        %v2860 = vpop.xlane.xlu0 %2859
        %v2861 = vadd.f32 %v2833, %v2835
        %2862 = vadd.xlane.f32.xlu0 %v2861
        %v2863 = vpop.xlane.xlu0 %2862
        %v2864 = vadd.f32 %v2837, %v2839
        %2865 = vadd.xlane.f32.xlu0 %v2864
        %v2866 = vpop.xlane.xlu0 %2865
        %v2867 = vadd.f32 %v2841, %v2843
        %2868 = vadd.xlane.f32.xlu0 %v2867
        %v2869 = vpop.xlane.xlu0 %2868
        %v2870 = vadd.f32 %v2845, %v2847
        %2871 = vadd.xlane.f32.xlu0 %v2870
        %v2872 = vpop.xlane.xlu0 %2871
        %v2873 = vadd.f32 %v2849, %v2851
        %2874 = vadd.xlane.f32.xlu0 %v2873
        %v2875 = vpop.xlane.xlu0 %2874
        %v2876 = vrcp.pop %v2854
        %v2877 = vrcp.pop %v2857
        %v2878 = vrcp.pop %v2860
        %v2879 = vrcp.pop %v2863
        %v2880 = vrcp.pop %v2866
        %v2881 = vrcp.pop %v2869
        %v2882 = vrcp.pop %v2872
        %v2883 = vrcp.pop %v2875
        %v2884 = vmul.f32 %v2821, %v2876
        %v2885 = vmul.f32 %v2823, %v2876
        %v2886 = vmul.f32 %v2825, %v2877
        %v2887 = vmul.f32 %v2827, %v2877
        %v2888 = vmul.f32 %v2829, %v2878
        %v2889 = vmul.f32 %v2831, %v2878
        %v2890 = vmul.f32 %v2833, %v2879
        %v2891 = vmul.f32 %v2835, %v2879
        %v2892 = vmul.f32 %v2837, %v2880
        %v2893 = vmul.f32 %v2839, %v2880
        %v2894 = vmul.f32 %v2841, %v2881
        %v2895 = vmul.f32 %v2843, %v2881
        %v2896 = vmul.f32 %v2845, %v2882
        %v2897 = vmul.f32 %v2847, %v2882
        %v2898 = vmul.f32 %v2849, %v2883
        %v2899 = vmul.f32 %v2851, %v2883
        %2900 = vrot.lane.b32.xlu0 %v988, 104
        %v2901 = vpop.permute.xlu0 %2900
        %2902 = vrot.lane.b32.xlu0 %v989, 104
        %v2903 = vpop.permute.xlu0 %2902
        %2904 = vrot.lane.b32.xlu0 %v990, 104
        %v2905 = vpop.permute.xlu0 %2904
        %2906 = vrot.lane.b32.xlu0 %v991, 104
        %v2907 = vpop.permute.xlu0 %2906
        %2908 = vrot.lane.b32.xlu0 %v992, 104
        %v2909 = vpop.permute.xlu0 %2908
        %2910 = vrot.lane.b32.xlu0 %v993, 104
        %v2911 = vpop.permute.xlu0 %2910
        %2912 = vrot.lane.b32.xlu0 %v994, 104
        %v2913 = vpop.permute.xlu0 %2912
        %2914 = vrot.lane.b32.xlu0 %v995, 104
        %v2915 = vpop.permute.xlu0 %2914
        %2916 = vrot.lane.b32.xlu0 %v996, 104
        %v2917 = vpop.permute.xlu0 %2916
        %2918 = vrot.lane.b32.xlu0 %v997, 104
        %v2919 = vpop.permute.xlu0 %2918
        %2920 = vrot.lane.b32.xlu0 %v998, 104
        %v2921 = vpop.permute.xlu0 %2920
        %2922 = vrot.lane.b32.xlu0 %v999, 104
        %v2923 = vpop.permute.xlu0 %2922
        %2924 = vrot.lane.b32.xlu0 %v1000, 104
        %v2925 = vpop.permute.xlu0 %2924
        %2926 = vrot.lane.b32.xlu0 %v1001, 104
        %v2927 = vpop.permute.xlu0 %2926
        %2928 = vrot.lane.b32.xlu0 %v1002, 104
        %v2929 = vpop.permute.xlu0 %2928
        %2930 = vrot.lane.b32.xlu0 %v1003, 104
        %v2931 = vpop.permute.xlu0 %2930
        %2932 = vrot.lane.b32.xlu0 %v1004, 104
        %v2933 = vpop.permute.xlu0 %2932
        %2934 = vrot.lane.b32.xlu0 %v1005, 104
        %v2935 = vpop.permute.xlu0 %2934
        %2936 = vrot.lane.b32.xlu0 %v1006, 104
        %v2937 = vpop.permute.xlu0 %2936
        %2938 = vrot.lane.b32.xlu0 %v1007, 104
        %v2939 = vpop.permute.xlu0 %2938
        %2940 = vrot.lane.b32.xlu0 %v1008, 104
        %v2941 = vpop.permute.xlu0 %2940
        %2942 = vrot.lane.b32.xlu0 %v1009, 104
        %v2943 = vpop.permute.xlu0 %2942
        %2944 = vrot.lane.b32.xlu0 %v1010, 104
        %v2945 = vpop.permute.xlu0 %2944
        %2946 = vrot.lane.b32.xlu0 %v1011, 104
        %v2947 = vpop.permute.xlu0 %2946
        %2948 = vrot.lane.b32.xlu0 %v1012, 104
        %v2949 = vpop.permute.xlu0 %2948
        %2950 = vrot.lane.b32.xlu0 %v1013, 104
        %v2951 = vpop.permute.xlu0 %2950
        %2952 = vrot.lane.b32.xlu0 %v1014, 104
        %v2953 = vpop.permute.xlu0 %2952
        %2954 = vrot.lane.b32.xlu0 %v1015, 104
        %v2955 = vpop.permute.xlu0 %2954
        %2956 = vrot.lane.b32.xlu0 %v1016, 104
        %v2957 = vpop.permute.xlu0 %2956
        %2958 = vrot.lane.b32.xlu0 %v1017, 104
        %v2959 = vpop.permute.xlu0 %2958
        %2960 = vrot.lane.b32.xlu0 %v1018, 104
        %v2961 = vpop.permute.xlu0 %2960
        %2962 = vrot.lane.b32.xlu0 %v1019, 104
        %v2963 = vpop.permute.xlu0 %2962
        %2996 = vmatpush.msra.mxu0 %v2931
        %2997 = vmatpush.msra.mxu0 %v2929
        %2998 = vmatpush.msra.mxu0 %v2927
        %2999 = vmatpush.msra.mxu0 %v2925
        %3000 = vmatpush.msra.mxu0 %v2923
        %3001 = vmatpush.msra.mxu0 %v2921
        %3002 = vmatpush.msra.mxu0 %v2919
        %3003 = vmatpush.msra.mxu0 %v2917
        %3004 = vmatpush.msra.mxu0 %v2915
        %3005 = vmatpush.msra.mxu0 %v2913
        %3006 = vmatpush.msra.mxu0 %v2911
        %3007 = vmatpush.msra.mxu0 %v2909
        %3008 = vmatpush.msra.mxu0 %v2907
        %3009 = vmatpush.msra.mxu0 %v2905
        %3010 = vmatpush.msra.mxu0 %v2903
        %3011 = vmatpush.msra.mxu0 %v2901
        %3012 = vmatmul.f32.gmra.mxu0 %v2884
        %v3013 = vpop.f32.mrf.mxu0
        %v3014 = vadd.f32 0.0, %v3013
        %3015 = vmatmul.f32.gmra.mxu0 %v2886
        %v3016 = vpop.f32.mrf.mxu0
        %v3017 = vadd.f32 0.0, %v3016
        %3018 = vmatmul.f32.gmra.mxu0 %v2888
        %v3019 = vpop.f32.mrf.mxu0
        %v3020 = vadd.f32 0.0, %v3019
        %3021 = vmatmul.f32.gmra.mxu0 %v2890
        %v3022 = vpop.f32.mrf.mxu0
        %v3023 = vadd.f32 0.0, %v3022
        %3024 = vmatmul.f32.gmra.mxu0 %v2892
        %v3025 = vpop.f32.mrf.mxu0
        %v3026 = vadd.f32 0.0, %v3025
        %3027 = vmatmul.f32.gmra.mxu0 %v2894
        %v3028 = vpop.f32.mrf.mxu0
        %v3029 = vadd.f32 0.0, %v3028
        %3030 = vmatmul.f32.gmra.mxu0 %v2896
        %v3031 = vpop.f32.mrf.mxu0
        %v3032 = vadd.f32 0.0, %v3031
        %3033 = vmatmul.f32.gmra.mxu0 %v2898
        %v3034 = vpop.f32.mrf.mxu0
        %v3035 = vadd.f32 0.0, %v3034
        %3036 = vdwg.mxu0
        %3037 = vmatpush.msra.mxu0 %v2963
        %3038 = vmatpush.msra.mxu0 %v2961
        %3039 = vmatpush.msra.mxu0 %v2959
        %3040 = vmatpush.msra.mxu0 %v2957
        %3041 = vmatpush.msra.mxu0 %v2955
        %3042 = vmatpush.msra.mxu0 %v2953
        %3043 = vmatpush.msra.mxu0 %v2951
        %3044 = vmatpush.msra.mxu0 %v2949
        %3045 = vmatpush.msra.mxu0 %v2947
        %3046 = vmatpush.msra.mxu0 %v2945
        %3047 = vmatpush.msra.mxu0 %v2943
        %3048 = vmatpush.msra.mxu0 %v2941
        %3049 = vmatpush.msra.mxu0 %v2939
        %3050 = vmatpush.msra.mxu0 %v2937
        %3051 = vmatpush.msra.mxu0 %v2935
        %3052 = vmatpush.msra.mxu0 %v2933
        %3053 = vmatmul.f32.gmra.mxu0 %v2885
        %v3054 = vpop.f32.mrf.mxu0
        %v3055 = vadd.f32 %v3014, %v3054
        %3056 = vmatmul.f32.gmra.mxu0 %v2887
        %v3057 = vpop.f32.mrf.mxu0
        %v3058 = vadd.f32 %v3017, %v3057
        %3059 = vmatmul.f32.gmra.mxu0 %v2889
        %v3060 = vpop.f32.mrf.mxu0
        %v3061 = vadd.f32 %v3020, %v3060
        %3062 = vmatmul.f32.gmra.mxu0 %v2891
        %v3063 = vpop.f32.mrf.mxu0
        %v3064 = vadd.f32 %v3023, %v3063
        %3065 = vmatmul.f32.gmra.mxu0 %v2893
        %v3066 = vpop.f32.mrf.mxu0
        %v3067 = vadd.f32 %v3026, %v3066
        %3068 = vmatmul.f32.gmra.mxu0 %v2895
        %v3069 = vpop.f32.mrf.mxu0
        %v3070 = vadd.f32 %v3029, %v3069
        %3071 = vmatmul.f32.gmra.mxu0 %v2897
        %v3072 = vpop.f32.mrf.mxu0
        %v3073 = vadd.f32 %v3032, %v3072
        %3074 = vmatmul.f32.gmra.mxu0 %v2899
        %v3075 = vpop.f32.mrf.mxu0
        %v3076 = vadd.f32 %v3035, %v3075
        %3077 = vdwg.mxu0
        %3078 = vst [vmem:[%s415] sm:$0xff] %v1328
        %3079 = vst [vmem:[%s415 + $0x8] sm:$0xff] %v1329
        %3080 = vst [vmem:[%s415 + $0x10] sm:$0xff] %v1772
        %3081 = vst [vmem:[%s415 + $0x18] sm:$0xff] %v1773
        %3082 = vst [vmem:[%s415 + $0x20] sm:$0xff] %v2344
        %3083 = vst [vmem:[%s415 + $0x28] sm:$0xff] %v2345
        %3084 = vst [vmem:[%s415 + $0x30] sm:$0xff] %v2884
        %3085 = vst [vmem:[%s415 + $0x38] sm:$0xff] %v2885
        %3086 = vst [vmem:[%s415 + $0x40] sm:$0xff] %v1330
        %3087 = vst [vmem:[%s415 + $0x48] sm:$0xff] %v1331
        %3088 = vst [vmem:[%s415 + $0x50] sm:$0xff] %v1774
        %3089 = vst [vmem:[%s415 + $0x58] sm:$0xff] %v1775
        %3090 = vst [vmem:[%s415 + $0x60] sm:$0xff] %v2346
        %3091 = vst [vmem:[%s415 + $0x68] sm:$0xff] %v2347
        %3092 = vst [vmem:[%s415 + $0x70] sm:$0xff] %v2886
        %3093 = vst [vmem:[%s415 + $0x78] sm:$0xff] %v2887
        %3094 = vst [vmem:[%s415 + $0x80] sm:$0xff] %v1332
        %3095 = vst [vmem:[%s415 + $0x88] sm:$0xff] %v1333
        %3096 = vst [vmem:[%s415 + $0x90] sm:$0xff] %v1776
        %3097 = vst [vmem:[%s415 + $0x98] sm:$0xff] %v1777
        %3098 = vst [vmem:[%s415 + $0xa0] sm:$0xff] %v2348
        %3099 = vst [vmem:[%s415 + $0xa8] sm:$0xff] %v2349
        %3100 = vst [vmem:[%s415 + $0xb0] sm:$0xff] %v2888
        %3101 = vst [vmem:[%s415 + $0xb8] sm:$0xff] %v2889
        %3102 = vst [vmem:[%s415 + $0xc0] sm:$0xff] %v1334
        %3103 = vst [vmem:[%s415 + $0xc8] sm:$0xff] %v1335
        %3104 = vst [vmem:[%s415 + $0xd0] sm:$0xff] %v1778
        %3105 = vst [vmem:[%s415 + $0xd8] sm:$0xff] %v1779
        %3106 = vst [vmem:[%s415 + $0xe0] sm:$0xff] %v2350
        %3107 = vst [vmem:[%s415 + $0xe8] sm:$0xff] %v2351
        %3108 = vst [vmem:[%s415 + $0xf0] sm:$0xff] %v2890
        %3109 = vst [vmem:[%s415 + $0xf8] sm:$0xff] %v2891
        %3110 = vst [vmem:[%s415 + $0x100] sm:$0xff] %v1336
        %3111 = vst [vmem:[%s415 + $0x108] sm:$0xff] %v1337
        %3112 = vst [vmem:[%s415 + $0x110] sm:$0xff] %v1780
        %3113 = vst [vmem:[%s415 + $0x118] sm:$0xff] %v1781
        %3114 = vst [vmem:[%s415 + $0x120] sm:$0xff] %v2352
        %3115 = vst [vmem:[%s415 + $0x128] sm:$0xff] %v2353
        %3116 = vst [vmem:[%s415 + $0x130] sm:$0xff] %v2892
        %3117 = vst [vmem:[%s415 + $0x138] sm:$0xff] %v2893
        %3118 = vst [vmem:[%s415 + $0x140] sm:$0xff] %v1338
        %3119 = vst [vmem:[%s415 + $0x148] sm:$0xff] %v1339
        %3120 = vst [vmem:[%s415 + $0x150] sm:$0xff] %v1782
        %3121 = vst [vmem:[%s415 + $0x158] sm:$0xff] %v1783
        %3122 = vst [vmem:[%s415 + $0x160] sm:$0xff] %v2354
        %3123 = vst [vmem:[%s415 + $0x168] sm:$0xff] %v2355
        %3124 = vst [vmem:[%s415 + $0x170] sm:$0xff] %v2894
        %3125 = vst [vmem:[%s415 + $0x178] sm:$0xff] %v2895
        %3126 = vst [vmem:[%s415 + $0x180] sm:$0xff] %v1340
        %3127 = vst [vmem:[%s415 + $0x188] sm:$0xff] %v1341
        %3128 = vst [vmem:[%s415 + $0x190] sm:$0xff] %v1784
        %3129 = vst [vmem:[%s415 + $0x198] sm:$0xff] %v1785
        %3130 = vst [vmem:[%s415 + $0x1a0] sm:$0xff] %v2356
        %3131 = vst [vmem:[%s415 + $0x1a8] sm:$0xff] %v2357
        %3132 = vst [vmem:[%s415 + $0x1b0] sm:$0xff] %v2896
        %3133 = vst [vmem:[%s415 + $0x1b8] sm:$0xff] %v2897
        %3134 = vst [vmem:[%s415 + $0x1c0] sm:$0xff] %v1342
        %3135 = vst [vmem:[%s415 + $0x1c8] sm:$0xff] %v1343
        %3136 = vst [vmem:[%s415 + $0x1d0] sm:$0xff] %v1786
        %3137 = vst [vmem:[%s415 + $0x1d8] sm:$0xff] %v1787
        %3138 = vst [vmem:[%s415 + $0x1e0] sm:$0xff] %v2358
        %3139 = vst [vmem:[%s415 + $0x1e8] sm:$0xff] %v2359
        %3140 = vst [vmem:[%s415 + $0x1f0] sm:$0xff] %v2898
        %3141 = vst [vmem:[%s415 + $0x1f8] sm:$0xff] %v2899
        %3150 = vrot.lane.b32.xlu0 %v1975, 8
        %v3151 = vpop.permute.xlu0 %3150
        %3152 = vrot.lane.b32.xlu0 %v1978, 8
        %v3153 = vpop.permute.xlu0 %3152
        %3154 = vrot.lane.b32.xlu0 %v1981, 8
        %v3155 = vpop.permute.xlu0 %3154
        %3156 = vrot.lane.b32.xlu0 %v1984, 8
        %v3157 = vpop.permute.xlu0 %3156
        %3158 = vrot.lane.b32.xlu0 %v1987, 8
        %v3159 = vpop.permute.xlu0 %3158
        %3160 = vrot.lane.b32.xlu0 %v1990, 8
        %v3161 = vpop.permute.xlu0 %3160
        %3162 = vrot.lane.b32.xlu0 %v1993, 8
        %v3163 = vpop.permute.xlu0 %3162
        %3164 = vrot.lane.b32.xlu0 %v1996, 8
        %v3165 = vpop.permute.xlu0 %3164
        %3182 = vrot.lane.b32.xlu0 %v2515, 16
        %v3183 = vpop.permute.xlu0 %3182
        %3184 = vrot.lane.b32.xlu0 %v2518, 16
        %v3185 = vpop.permute.xlu0 %3184
        %3186 = vrot.lane.b32.xlu0 %v2521, 16
        %v3187 = vpop.permute.xlu0 %3186
        %3188 = vrot.lane.b32.xlu0 %v2524, 16
        %v3189 = vpop.permute.xlu0 %3188
        %3190 = vrot.lane.b32.xlu0 %v2527, 16
        %v3191 = vpop.permute.xlu0 %3190
        %3192 = vrot.lane.b32.xlu0 %v2530, 16
        %v3193 = vpop.permute.xlu0 %3192
        %3194 = vrot.lane.b32.xlu0 %v2533, 16
        %v3195 = vpop.permute.xlu0 %3194
        %3196 = vrot.lane.b32.xlu0 %v2536, 16
        %v3197 = vpop.permute.xlu0 %3196
        %3214 = vrot.lane.b32.xlu0 %v3055, 24
        %v3215 = vpop.permute.xlu0 %3214
        %3216 = vrot.lane.b32.xlu0 %v3058, 24
        %v3217 = vpop.permute.xlu0 %3216
        %3218 = vrot.lane.b32.xlu0 %v3061, 24
        %v3219 = vpop.permute.xlu0 %3218
        %3220 = vrot.lane.b32.xlu0 %v3064, 24
        %v3221 = vpop.permute.xlu0 %3220
        %3222 = vrot.lane.b32.xlu0 %v3067, 24
        %v3223 = vpop.permute.xlu0 %3222
        %3224 = vrot.lane.b32.xlu0 %v3070, 24
        %v3225 = vpop.permute.xlu0 %3224
        %3226 = vrot.lane.b32.xlu0 %v3073, 24
        %v3227 = vpop.permute.xlu0 %3226
        %3228 = vrot.lane.b32.xlu0 %v3076, 24
        %v3229 = vpop.permute.xlu0 %3228
        %vm3238 = vcmask 64512
        %v3239 = vsel %vm3238, %v1403, %v3151
        %v3240 = vsel %vm3238, %v1406, %v3153
        %v3241 = vsel %vm3238, %v1409, %v3155
        %v3242 = vsel %vm3238, %v1412, %v3157
        %v3243 = vsel %vm3238, %v1415, %v3159
        %v3244 = vsel %vm3238, %v1418, %v3161
        %v3245 = vsel %vm3238, %v1421, %v3163
        %v3246 = vsel %vm3238, %v1424, %v3165
        %vm3247 = vcmask 130048
        %v3248 = vsel %vm3247, %v3239, %v3183
        %v3249 = vsel %vm3247, %v3240, %v3185
        %v3250 = vsel %vm3247, %v3241, %v3187
        %v3251 = vsel %vm3247, %v3242, %v3189
        %v3252 = vsel %vm3247, %v3243, %v3191
        %v3253 = vsel %vm3247, %v3244, %v3193
        %v3254 = vsel %vm3247, %v3245, %v3195
        %v3255 = vsel %vm3247, %v3246, %v3197
        %vm3256 = vcmask 195584
        %v3257 = vsel %vm3256, %v3248, %v3215
        %v3258 = vsel %vm3256, %v3249, %v3217
        %v3259 = vsel %vm3256, %v3250, %v3219
        %v3260 = vsel %vm3256, %v3251, %v3221
        %v3261 = vsel %vm3256, %v3252, %v3223
        %v3262 = vsel %vm3256, %v3253, %v3225
        %v3263 = vsel %vm3256, %v3254, %v3227
        %v3264 = vsel %vm3256, %v3255, %v3229
        %v3265 = vstv %s1020
        %v3266 = vmul.f32 %v3265, %v3257
        %v3267 = vmul.f32 %v3265, %v3258
        %v3268 = vmul.f32 %v3265, %v3259
        %v3269 = vmul.f32 %v3265, %v3260
        %v3270 = vmul.f32 %v3265, %v3261
        %v3271 = vmul.f32 %v3265, %v3262
        %v3272 = vmul.f32 %v3265, %v3263
        %v3273 = vmul.f32 %v3265, %v3264
        %v3274 = vadd.f32 %v3266, %v874
        %v3275 = vadd.f32 %v3267, %v875
        %v3276 = vadd.f32 %v3268, %v876
        %v3277 = vadd.f32 %v3269, %v877
        %v3278 = vadd.f32 %v3270, %v878
        %v3279 = vadd.f32 %v3271, %v879
        %v3280 = vadd.f32 %v3272, %v880
        %v3281 = vadd.f32 %v3273, %v881
        %3282 = vst.msk [vmem:[%s429] sm:$0xff] %vm890, %v3274
        %3283 = vst.msk [vmem:[%s429 + $0x8] sm:$0xff] %vm890, %v3275
        %3284 = vst.msk [vmem:[%s429 + $0x10] sm:$0xff] %vm890, %v3276
        %3285 = vst.msk [vmem:[%s429 + $0x18] sm:$0xff] %vm890, %v3277
        %3286 = vst.msk [vmem:[%s429 + $0x20] sm:$0xff] %vm890, %v3278
        %3287 = vst.msk [vmem:[%s429 + $0x28] sm:$0xff] %vm890, %v3279
        %3288 = vst.msk [vmem:[%s429 + $0x30] sm:$0xff] %vm890, %v3280
        %3289 = vst.msk [vmem:[%s429 + $0x38] sm:$0xff] %vm890, %v3281
        %s3290 = smul.u32 8, %s33
        %p3291 = scmp.lt.s32.totalorder %s32, 1
        %s3292 = scalar_select %p3291, %s32, 1
        %p3293 = scmp.lt.s32.totalorder %s3290, 31
        %s3294 = scalar_select %p3293, %s3290, 31
        %s3295 = smul.addr %s3292, 32
        %s3296 = sadd.s32 %s3294, %s3295
        %s3297 = smul.addr %s3296, 8
        %s3298 = scalar_lea.vmem %s8, %s3297
        %s3299 = sand.u32 %s251, 1
        %s3300 = scalar_lea.sflag [#allocation7], %s3299
        %s3301 = sand.u32 %s251, 1
        %s3302 = smul.addr %s3301, 512
        %s3303 = scalar_lea.vmem [#allocation13], %s3302
        // Predicated region
        $region73: #{tpu_custom_call.1} parent=51 // pred_check
          %p3304 = pneg %p233
        $region74: #{tpu_custom_call.1} parent=51 // pred_check_branch
          %3306 = sbr.rel (%p3304) target = $region76
        $region75: #{tpu_custom_call.1} parent=51 // pred_region
          %s3307 = smul.u32 8, %s33
        $region76: #{tpu_custom_call.1} parent=51 // pred_fallthru
          _
        // Predicated region
        $region77: #{tpu_custom_call.1} parent=51 // pred_check
          %p3308 = pneg %p261
        $region78: #{tpu_custom_call.1} parent=51 // pred_check_branch
          %3310 = sbr.rel (%p3308) target = $region80
        $region79: #{tpu_custom_call.1} parent=51 // pred_region
          %s3311 = smul.u32 8, %s33
          %3313 = vsyncadd %s3300, 0
          %s3314 = smul.addr %s3311, 8
          %s3315 = smul.addr %s32, 256
          %s3316 = sadd.s32 %s3314, %s3315
          %s3317 = smul.addr %s3316, 8
          %s3318 = scalar_lea.hbm %s9, %s3317
          %s3319 = sshll.u32 %s3303, 4
          %s3320 = int_to_ptr.vmem [resolvable:$true] %s3319
          %s3321 = sshll.u32 %s3318, 4
          %s3322 = int_to_ptr.hbm [resolvable:$true] %s3321
          %3327 = dma.vmem_to_hbm [thread:$0]  %s3320, 8192, %s3322, %s3300, 1024, 1024, 64
        $region80: #{tpu_custom_call.1} parent=51 // pred_fallthru
          _
      $region52: #{tpu_custom_call.1} parent=5 // pred_fallthru
        _
      %p3328 = scmp.le.s32.totalorder 2, %s23
      // Predicated region
      $region81: #{tpu_custom_call.1} parent=5 // pred_check
        %p3329 = pneg %p3328
      $region82: #{tpu_custom_call.1} parent=5 // pred_check_branch
        %3331 = sbr.rel (%p3329) target = $region84
      $region83: #{tpu_custom_call.1} parent=5 // pred_region
        %s3332 = ssub.s32 %s23, 2
        // Predicated region
        $region85: #{tpu_custom_call.1} parent=83 // pred_check
          %p3333 = pneg %p239
        $region86: #{tpu_custom_call.1} parent=83 // pred_check_branch
          %3335 = sbr.rel (%p3333) target = $region88
        $region87: #{tpu_custom_call.1} parent=83 // pred_region
          %s3336 = smul.u32 8, %s35
          %p3337 = scmp.lt.s32.totalorder %s34, 1
          %s3338 = scalar_select %p3337, %s34, 1
          %p3339 = scmp.lt.s32.totalorder %s3336, 31
          %s3340 = scalar_select %p3339, %s3336, 31
          %s3341 = smul.addr %s3338, 32
          %s3342 = sadd.s32 %s3340, %s3341
          %s3343 = smul.addr %s3342, 8
          %s3344 = scalar_lea.vmem %s8, %s3343
        $region88: #{tpu_custom_call.1} parent=83 // pred_fallthru
          _
        // Predicated region
        $region89: #{tpu_custom_call.1} parent=83 // pred_check
          %p3345 = pneg %p267
        $region90: #{tpu_custom_call.1} parent=83 // pred_check_branch
          %3347 = sbr.rel (%p3345) target = $region92
        $region91: #{tpu_custom_call.1} parent=83 // pred_region
          %s3348 = sand.u32 %s252, 1
          %s3349 = scalar_lea.sflag [#allocation7], %s3348
          %s3350 = sand.u32 %s252, 1
          %s3351 = smul.addr %s3350, 512
          %s3352 = scalar_lea.vmem [#allocation13], %s3351
          %3354 = dma.done %s3349, 8192
        $region92: #{tpu_custom_call.1} parent=83 // pred_fallthru
          _
      $region84: #{tpu_custom_call.1} parent=5 // pred_fallthru
        _
    $region6: #{tpu_custom_call.1} parent=1 // loop_footer
      %s27 = sadd.s32 1, %s23
    $region7: #{tpu_custom_call.1} parent=1 // loop_footer_branch
      %22 = sbr.rel target = $region3
    $region8: #{tpu_custom_call.1} parent=1 // loop_exit
      _
    %3355 = vsyncpa [#allocation6], 1
    %s3356 = scalar_lea.sflag [#allocation6], 1
    %3357 = vsyncpa %s3356, 1
    %3358 = vsyncpa [#allocation9], 1
    %3359 = vsyncpa [#allocation12], 1
    %3360 = vsyncpa [#allocation7], 1
    %s3361 = scalar_lea.sflag [#allocation7], 1
    %3362 = vsyncpa %s3361, 1

</llo_original>
